<compile_context>
chip_gen: v6e
topology: v6e:2x2x1
jax: 0.10.0
libtpu: 0.0.40
codegen_flags: <defaults>
</compile_context>

<pallas_src>
import functools
import math

import jax
import jax.numpy as jnp
from jax.experimental import pallas as pl
from jax.experimental.pallas import tpu as pltpu

LANE = 128
VMEM_LIMIT = 48 * 1024 * 1024  # safe on v7x (64 MiB physical), ample everywhere


def _round_up(v, m):
    return ((v + m - 1) // m) * m


def _lcm(*vals):
    out = 1
    for v in vals:
        out = out * v // math.gcd(out, v)
    return out


# ----------------------------------------------------------------------------
# Kernel 1: GIN aggregation (A_hat @ x, K-tiled, x VMEM-resident)
#           + 2-layer MLP + ReLU + per-row-tile BatchNorm partial statistics.
# ----------------------------------------------------------------------------
def gin_layer_kernel(a_ref, x_ref, w1_ref, w2_ref, consts_ref,
                     h_ref, stats_ref, acc_ref, *, n_real, tm, tk, mask_pad):
    i = pl.program_id(0)
    k = pl.program_id(1)

    @pl.when(k == 0)
    def _():
        acc_ref[...] = jnp.zeros_like(acc_ref)

    # GIN aggregation (eps=0): A_hat already holds A + I.  A_hat tile streamed,
    # x resident in VMEM and sliced per K step.  bf16 MXU operands, f32 accum.
    ks = pl.multiple_of(k * tk, tk)
    acc_ref[...] += jnp.dot(a_ref[...], x_ref[pl.ds(ks, tk), :],
                            preferred_element_type=jnp.float32)

    @pl.when(k == pl.num_programs(1) - 1)
    def _():
        agg = acc_ref[...]
        b1 = consts_ref[0:1, :]
        b2 = consts_ref[1:2, :]
        # GIN MLP: Linear -> ReLU -> Linear   (bf16 MXU operands, f32 accum)
        h = jnp.dot(agg.astype(jnp.bfloat16), w1_ref[...],
                    preferred_element_type=jnp.float32) + b1
        h = jnp.maximum(h, 0.0)
        h = jnp.dot(h.astype(jnp.bfloat16), w2_ref[...],
                    preferred_element_type=jnp.float32) + b2
        # F.relu after the conv
        h = jnp.maximum(h, 0.0)

        if mask_pad:
            # Zero padded node rows so they cannot pollute BatchNorm stats.
            # (tm,1) iota + broadcast multiply — tiny VPU work.
            row_ids = i * tm + jax.lax.broadcasted_iota(jnp.int32, (tm, 1), 0)
            h = h * (row_ids < n_real).astype(jnp.float32)

        hp = h.shape[1]
        # Partial stats: row 0 = column sum, row 1 = column sumsq; one
        # full-tile (8, hp) store (no masked single-sublane stores).
        col_sum = jnp.sum(h, axis=0, keepdims=True)
        col_sq = jnp.sum(h * h, axis=0, keepdims=True)
        stats_ref[...] = jnp.concatenate(
            [col_sum, col_sq, jnp.zeros((6, hp), jnp.float32)], axis=0)

        h_ref[...] = h.astype(jnp.bfloat16)


def gin_layer(a_hat, x, w1, w2, consts, *, n_real, tm, tk):
    np_ = a_hat.shape[0]
    fp = x.shape[1]
    hp = w2.shape[1]
    ni, nk = np_ // tm, np_ // tk

    kernel = functools.partial(gin_layer_kernel, n_real=n_real, tm=tm, tk=tk,
                               mask_pad=(np_ != n_real))
    flops = int(2 * np_ * np_ * fp + 2 * np_ * fp * hp + 2 * np_ * hp * hp)
    bytes_accessed = int(a_hat.size * 2 + x.size * 2
                         + w1.size * 2 + w2.size * 2 + consts.size * 4
                         + np_ * hp * 2 + ni * 8 * hp * 4)

    return pl.pallas_call(
        kernel,
        out_shape=(jax.ShapeDtypeStruct((np_, hp), jnp.bfloat16),
                   jax.ShapeDtypeStruct((ni * 8, hp), jnp.float32)),
        grid_spec=pltpu.PrefetchScalarGridSpec(
            num_scalar_prefetch=0,
            grid=(ni, nk),
            in_specs=[
                pl.BlockSpec((tm, tk), lambda i, k: (i, k)),     # A_hat tile
                pl.BlockSpec((np_, fp), lambda i, k: (0, 0)),    # x resident
                pl.BlockSpec((fp, hp), lambda i, k: (0, 0)),     # w1
                pl.BlockSpec((hp, hp), lambda i, k: (0, 0)),     # w2
                pl.BlockSpec((8, hp), lambda i, k: (0, 0)),      # b1/b2 stack
            ],
            out_specs=(
                pl.BlockSpec((tm, hp), lambda i, k: (i, 0)),     # h (bf16)
                pl.BlockSpec((8, hp), lambda i, k: (i, 0)),      # partial stats
            ),
            scratch_shapes=[pltpu.VMEM((tm, fp), jnp.float32)],
        ),
        compiler_params=pltpu.CompilerParams(
            dimension_semantics=("parallel", "arbitrary"),
            vmem_limit_bytes=VMEM_LIMIT),
        cost_estimate=pl.CostEstimate(flops=flops, transcendentals=0,
                                      bytes_accessed=bytes_accessed),
    )(a_hat, x, w1, w2, consts)


# ----------------------------------------------------------------------------
# Kernel 2: BatchNorm (folded scale/shift) + partial global_mean_pool.
#           Grid axis is fully parallel; partial pooled sums are reduced in
#           the wrapper (tiny (ni, gp, hp) reduction).
# ----------------------------------------------------------------------------
def bn_pool_kernel(h_ref, aff_ref, p_ref, z_ref, g_ref):
    z = h_ref[...].astype(jnp.float32) * aff_ref[0:1, :] + aff_ref[1:2, :]
    z_ref[...] = z.astype(jnp.bfloat16)
    g_ref[...] = jnp.dot(p_ref[...], z, preferred_element_type=jnp.float32)


def bn_pool(h, affine, p, *, tm):
    np_, hp = h.shape
    gp = p.shape[0]
    ni = np_ // tm
    return pl.pallas_call(
        bn_pool_kernel,
        out_shape=(jax.ShapeDtypeStruct((np_, hp), jnp.bfloat16),
                   jax.ShapeDtypeStruct((ni * gp, hp), jnp.float32)),
        grid_spec=pltpu.PrefetchScalarGridSpec(
            num_scalar_prefetch=0,
            grid=(ni,),
            in_specs=[
                pl.BlockSpec((tm, hp), lambda i: (i, 0)),    # h tile (bf16)
                pl.BlockSpec((8, hp), lambda i: (0, 0)),     # scale/shift stack
                pl.BlockSpec((gp, tm), lambda i: (0, i)),    # P column tile
            ],
            out_specs=(
                pl.BlockSpec((tm, hp), lambda i: (i, 0)),    # z tile (bf16)
                pl.BlockSpec((gp, hp), lambda i: (i, 0)),    # partial pooled g
            ),
        ),
        compiler_params=pltpu.CompilerParams(
            dimension_semantics=("parallel",),
            vmem_limit_bytes=VMEM_LIMIT),
    )(h, affine, p)


# ----------------------------------------------------------------------------
# Parameters (PyTorch-Linear-style init) and the forward wrapper.
# ----------------------------------------------------------------------------
def init_params(key, input_dim, hidden_dim, num_layers):
    params = []
    for i in range(num_layers):
        in_dim = input_dim if i == 0 else hidden_dim
        key, k1, k2, k3, k4 = jax.random.split(key, 5)
        bnd1 = 1.0 / jnp.sqrt(in_dim)
        bnd2 = 1.0 / jnp.sqrt(hidden_dim)
        params.append(dict(
            w1=jax.random.uniform(k1, (in_dim, hidden_dim), jnp.float32, -bnd1, bnd1),
            b1=jax.random.uniform(k2, (1, hidden_dim), jnp.float32, -bnd1, bnd1),
            w2=jax.random.uniform(k3, (hidden_dim, hidden_dim), jnp.float32, -bnd2, bnd2),
            b2=jax.random.uniform(k4, (1, hidden_dim), jnp.float32, -bnd2, bnd2),
            gamma=jnp.ones((1, hidden_dim), jnp.float32),
            beta=jnp.zeros((1, hidden_dim), jnp.float32),
        ))
    return params


def gconv_forward(params, x, edge_index, batch, num_graphs, *,
                  tm=256, tk=512, tm_bn=512):
    """Matches GConv.forward: returns (cat of per-layer z, cat of pooled g)."""
    n, f = x.shape
    hdim = params[0]["w2"].shape[1]
    np_ = _round_up(n, _lcm(tm, tk, tm_bn))
    fp = _round_up(f, LANE)
    hp = _round_up(hdim, LANE)
    gp = _round_up(num_graphs, 8)

    # Dense A_hat = A + I (GINConv eps=0), scatter-built once directly at the
    # padded shape, then cast to bf16 (exact for edge multiplicities <= 256).
    src, dst = edge_index[0], edge_index[1]
    diag = jnp.arange(n)
    a_hat = (jnp.zeros((np_, np_), jnp.float32)
             .at[dst, src].add(1.0)
             .at[diag, diag].add(1.0)
             .astype(jnp.bfloat16))

    # Normalized pooling matrix: P[g, i] = 1/count_g if batch[i] == g (padded).
    onehot = (batch[None, :] == jnp.arange(num_graphs)[:, None]).astype(jnp.float32)
    counts = jnp.maximum(onehot.sum(axis=1, keepdims=True), 1.0)
    p_pad = jnp.zeros((gp, np_), jnp.float32).at[:num_graphs, :n].set(onehot / counts)

    # Padded node features -> bf16 once; subsequent layers consume the bf16 z
    # emitted by bn_pool directly (no extra per-layer convert pass).
    z_pad = (jnp.zeros((np_, fp), jnp.float32).at[:n, :f].set(x)
             .astype(jnp.bfloat16))

    zs, gs = [], []
    for lp in params:
        in_dim = lp["w1"].shape[0]
        in_p = _round_up(in_dim, LANE)
        w1p = (jnp.zeros((in_p, hp), jnp.float32)
               .at[:in_dim, :hdim].set(lp["w1"]).astype(jnp.bfloat16))
        w2p = (jnp.zeros((hp, hp), jnp.float32)
               .at[:hdim, :hdim].set(lp["w2"]).astype(jnp.bfloat16))
        consts = (jnp.zeros((8, hp), jnp.float32)
                  .at[0, :hdim].set(lp["b1"][0])
                  .at[1, :hdim].set(lp["b2"][0]))

        h_pad, stats = gin_layer(a_hat, z_pad, w1p, w2p, consts,
                                 n_real=n, tm=tm, tk=tk)

        # Finalize two-pass BatchNorm stats (tiny cross-tile reduction, f32),
        # then fold BN into a per-column (scale, shift) pair.
        col_sum = stats[0::8].sum(axis=0)
        col_sq = stats[1::8].sum(axis=0)
        mean = col_sum / n
        var = jnp.maximum(col_sq / n - mean * mean, 0.0)
        rstd = jax.lax.rsqrt(var + 1e-5)
        gammap = jnp.zeros((hp,), jnp.float32).at[:hdim].set(lp["gamma"][0])
        betap = jnp.zeros((hp,), jnp.float32).at[:hdim].set(lp["beta"][0])
        scale = rstd * gammap
        shift = betap - mean * scale
        affine = (jnp.zeros((8, hp), jnp.float32)
                  .at[0].set(scale).at[1].set(shift))

        z_pad, g_parts = bn_pool(h_pad, affine, p_pad, tm=tm_bn)
        g = g_parts.reshape(-1, gp, hp).sum(axis=0)

        zs.append(z_pad[:n, :hdim].astype(jnp.float32))
        gs.append(g[:num_graphs, :hdim])

    return jnp.concatenate(zs, axis=1), jnp.concatenate(gs, axis=1)


# ----------------------------------------------------------------------------
# Pure-JAX reference (float32) for correctness checking.
# ----------------------------------------------------------------------------
def reference_forward(params, x, edge_index, batch, num_graphs):
    n = x.shape[0]
    src, dst = edge_index[0], edge_index[1]
    a_hat = (jnp.zeros((n, n), jnp.float32).at[dst, src].add(1.0)
             + jnp.eye(n, dtype=jnp.float32))
    onehot = (batch[None, :] == jnp.arange(num_graphs)[:, None]).astype(jnp.float32)
    counts = jnp.maximum(onehot.sum(axis=1, keepdims=True), 1.0)
    p = onehot / counts

    z = x
    zs, gs = [], []
    for lp in params:
        agg = a_hat @ z
        h = jnp.maximum(agg @ lp["w1"] + lp["b1"], 0.0)
        h = h @ lp["w2"] + lp["b2"]
        h = jnp.maximum(h, 0.0)
        mean = h.mean(axis=0, keepdims=True)
        var = ((h - mean) ** 2).mean(axis=0, keepdims=True)
        zl = (h - mean) * jax.lax.rsqrt(var + 1e-5) * lp["gamma"] + lp["beta"]
        zs.append(zl)
        gs.append(p @ zl)
        z = zl
    return jnp.concatenate(zs, axis=1), jnp.concatenate(gs, axis=1)


if __name__ == "__main__":
    # Small synthetic graph batch: 200 nodes (padded to 512 for the 256/512
    # tiles), 8 input features, 600 edges, 3 graphs, hidden=32, 2 layers.
    N, F, E, G = 200, 8, 600, 3
    HIDDEN, NUM_LAYERS = 32, 2

    key = jax.random.PRNGKey(0)
    kx, ke_s, ke_d, kp = jax.random.split(key, 4)

    x = jax.random.normal(kx, (N, F), jnp.float32)
    src = jax.random.randint(ke_s, (E,), 0, N)
    dst = jax.random.randint(ke_d, (E,), 0, N)
    edge_index = jnp.stack([src, dst], axis=0)                    # [2, E]
    batch = ((jnp.arange(N) * G) // N).astype(jnp.int32)          # [N]

    params = init_params(kp, F, HIDDEN, NUM_LAYERS)

    fwd = jax.jit(functools.partial(gconv_forward, num_graphs=G))
    z_out, g_out = fwd(params, x, edge_index, batch)
    jax.block_until_ready((z_out, g_out))

    assert z_out.shape == (N, HIDDEN * NUM_LAYERS)
    assert g_out.shape == (G, HIDDEN * NUM_LAYERS)
    assert bool(jnp.all(jnp.isfinite(z_out))) and bool(jnp.all(jnp.isfinite(g_out)))

    # Loose tolerance: MXU operands and inter-layer z are bf16 (ref is pure f32).
    z_ref, g_ref = reference_forward(params, x, edge_index, batch, G)
    assert jnp.allclose(z_out, z_ref, atol=0.15, rtol=0.15), \
        float(jnp.abs(z_out - z_ref).max())
    assert jnp.allclose(g_out, g_ref, atol=0.15, rtol=0.15), \
        float(jnp.abs(g_out - g_ref).max())

    print("KERNEL_OK")
</pallas_src>

<mosaic_0001>
module attributes {stable_mosaic.version = 11 : i64} {
  func.func private @main(%arg0: i32) attributes {dimension_semantics = [#tpu.dimension_semantics<core_parallel>], iteration_bounds = array<i64: 2>, tpu.core_type = #tpu.core_type<sc_scalar_subcore>, window_params = []} {
    return
  }
}

module attributes {stable_mosaic.version = 11 : i64} {
  func.func private @main(%arg0: i32) attributes {dimension_semantics = [#tpu.dimension_semantics<core_parallel>], iteration_bounds = array<i64: 2>, tpu.core_type = #tpu.core_type<sc_scalar_subcore>, window_params = []} {
    return
  }
}

module attributes {stable_mosaic.version = 11 : i64} {
  func.func @gin_layer_kernel(%arg0: i32, %arg1: i32, %arg2: memref<256x512xbf16, #tpu.memory_space<vmem>>, %arg3: memref<512x128xbf16, #tpu.memory_space<vmem>>, %arg4: memref<128x128xbf16, #tpu.memory_space<vmem>>, %arg5: memref<128x128xbf16, #tpu.memory_space<vmem>>, %arg6: memref<8x128xf32, #tpu.memory_space<vmem>>, %arg7: memref<256x128xbf16, #tpu.memory_space<vmem>>, %arg8: memref<8x128xf32, #tpu.memory_space<vmem>>, %arg9: memref<256x128xf32, #tpu.memory_space<vmem>>) attributes {dimension_semantics = [#tpu.dimension_semantics<parallel>, #tpu.dimension_semantics<arbitrary>], iteration_bounds = array<i64: 2, 1>, scalar_prefetch = 0 : i64, scratch_operands = 1 : i64, tpu.core_type = #tpu.core_type<tc>, window_params = [{transform_indices = @transform_0, window_bounds = array<i64: 256, 512>}, {pipeline_mode = #tpu.pipeline_mode<synchronous>, transform_indices = @transform_1, window_bounds = array<i64: 512, 128>}, {pipeline_mode = #tpu.pipeline_mode<synchronous>, transform_indices = @transform_2, window_bounds = array<i64: 128, 128>}, {pipeline_mode = #tpu.pipeline_mode<synchronous>, transform_indices = @transform_3, window_bounds = array<i64: 128, 128>}, {pipeline_mode = #tpu.pipeline_mode<synchronous>, transform_indices = @transform_4, window_bounds = array<i64: 8, 128>}, {transform_indices = @transform_5, window_bounds = array<i64: 256, 128>}, {transform_indices = @transform_6, window_bounds = array<i64: 8, 128>}]} {
    %c0_i32 = arith.constant 0 : i32
    %0 = arith.cmpi eq, %arg1, %c0_i32 : i32
    %1 = arith.extui %0 : i1 to i32
    %c0_i32_0 = arith.constant 0 : i32
    %2 = arith.cmpi ne, %1, %c0_i32_0 : i32
    scf.if %2 {
      %cst_9 = arith.constant 0.000000e+00 : f32
      %15 = vector.broadcast %cst_9 : f32 to vector<256x128xf32>
      %c0_10 = arith.constant 0 : index
      %c0_11 = arith.constant 0 : index
      %16 = vector.load %arg9[%c0_10, %c0_11] : memref<256x128xf32, #tpu.memory_space<vmem>>, vector<256x128xf32>
      tpu.vector_store %arg9[%c0_10, %c0_11], %15 {strides = array<i32>} : memref<256x128xf32, #tpu.memory_space<vmem>>, vector<256x128xf32>,
    } else {
    }
    %c512_i32 = arith.constant 512 : i32
    %3 = arith.muli %arg1, %c512_i32 : i32
    %4 = tpu.assume_multiple %3, 512 : i32
    %c0 = arith.constant 0 : index
    %c0_1 = arith.constant 0 : index
    %5 = vector.load %arg9[%c0, %c0_1] : memref<256x128xf32, #tpu.memory_space<vmem>>, vector<256x128xf32>
    %c0_2 = arith.constant 0 : index
    %c0_3 = arith.constant 0 : index
    %6 = vector.load %arg2[%c0_2, %c0_3] : memref<256x512xbf16, #tpu.memory_space<vmem>>, vector<256x512xbf16>
    %7 = arith.index_cast %4 : i32 to index
    %c0_4 = arith.constant 0 : index
    %8 = vector.load %arg3[%7, %c0_4] : memref<512x128xbf16, #tpu.memory_space<vmem>>, vector<512x128xbf16>
    %cst = arith.constant dense<0.000000e+00> : vector<256x128xf32>
    %9 = tpu.matmul %6, %8, %cst {dimension_numbers = #tpu.dot_dimension_numbers<[1], [0], [0], [1], [0, 0, 1, 1], [], []>} : vector<256x512xbf16>, vector<512x128xbf16>, vector<256x128xf32> -> vector<256x128xf32>
    %10 = arith.addf %5, %9 : vector<256x128xf32>
    %c0_5 = arith.constant 0 : index
    %c0_6 = arith.constant 0 : index
    %11 = vector.load %arg9[%c0_5, %c0_6] : memref<256x128xf32, #tpu.memory_space<vmem>>, vector<256x128xf32>
    tpu.vector_store %arg9[%c0_5, %c0_6], %10 {strides = array<i32>} : memref<256x128xf32, #tpu.memory_space<vmem>>, vector<256x128xf32>,
    %c0_i32_7 = arith.constant 0 : i32
    %12 = arith.cmpi eq, %arg1, %c0_i32_7 : i32
    %13 = arith.extui %12 : i1 to i32
    %c0_i32_8 = arith.constant 0 : i32
    %14 = arith.cmpi ne, %13, %c0_i32_8 : i32
    scf.if %14 {
      %c0_9 = arith.constant 0 : index
      %c0_10 = arith.constant 0 : index
      %15 = vector.load %arg9[%c0_9, %c0_10] : memref<256x128xf32, #tpu.memory_space<vmem>>, vector<256x128xf32>
      %c0_11 = arith.constant 0 : index
      %c0_12 = arith.constant 0 : index
      %16 = vector.load %arg6[%c0_11, %c0_12] : memref<8x128xf32, #tpu.memory_space<vmem>>, vector<1x128xf32>
      %c1 = arith.constant 1 : index
      %c0_13 = arith.constant 0 : index
      %17 = vector.load %arg6[%c1, %c0_13] : memref<8x128xf32, #tpu.memory_space<vmem>>, vector<1x128xf32>
      %18 = arith.truncf %15 : vector<256x128xf32> to vector<256x128xbf16>
      %c0_14 = arith.constant 0 : index
      %c0_15 = arith.constant 0 : index
      %19 = vector.load %arg4[%c0_14, %c0_15] : memref<128x128xbf16, #tpu.memory_space<vmem>>, vector<128x128xbf16>
      %cst_16 = arith.constant dense<0.000000e+00> : vector<256x128xf32>
      %20 = tpu.matmul %18, %19, %cst_16 {dimension_numbers = #tpu.dot_dimension_numbers<[1], [0], [0], [1], [0, 0, 1, 1], [], []>} : vector<256x128xbf16>, vector<128x128xbf16>, vector<256x128xf32> -> vector<256x128xf32>
      %21 = vector.broadcast %16 : vector<1x128xf32> to vector<256x128xf32>
      %22 = arith.addf %20, %21 : vector<256x128xf32>
      %cst_17 = arith.constant 0.000000e+00 : f32
      %23 = vector.broadcast %cst_17 : f32 to vector<256x128xf32>
      %24 = arith.maximumf %22, %23 : vector<256x128xf32>
      %25 = arith.truncf %24 : vector<256x128xf32> to vector<256x128xbf16>
      %c0_18 = arith.constant 0 : index
      %c0_19 = arith.constant 0 : index
      %26 = vector.load %arg5[%c0_18, %c0_19] : memref<128x128xbf16, #tpu.memory_space<vmem>>, vector<128x128xbf16>
      %cst_20 = arith.constant dense<0.000000e+00> : vector<256x128xf32>
      %27 = tpu.matmul %25, %26, %cst_20 {dimension_numbers = #tpu.dot_dimension_numbers<[1], [0], [0], [1], [0, 0, 1, 1], [], []>} : vector<256x128xbf16>, vector<128x128xbf16>, vector<256x128xf32> -> vector<256x128xf32>
      %28 = vector.broadcast %17 : vector<1x128xf32> to vector<256x128xf32>
      %29 = arith.addf %27, %28 : vector<256x128xf32>
      %cst_21 = arith.constant 0.000000e+00 : f32
      %30 = vector.broadcast %cst_21 : f32 to vector<256x128xf32>
      %31 = arith.maximumf %29, %30 : vector<256x128xf32>
      %c256_i32 = arith.constant 256 : i32
      %32 = arith.muli %arg0, %c256_i32 : i32
      %33 = tpu.iota {dimensions = array<i32: 0>} : vector<256x1xi32>
      %34 = vector.broadcast %32 : i32 to vector<256x1xi32>
      %35 = arith.addi %34, %33 : vector<256x1xi32>
      %c200_i32 = arith.constant 200 : i32
      %36 = vector.broadcast %c200_i32 : i32 to vector<256x1xi32>
      %37 = arith.cmpi slt, %35, %36 : vector<256x1xi32>
      %38 = arith.extui %37 : vector<256x1xi1> to vector<256x1xi32>
      %39 = arith.sitofp %38 : vector<256x1xi32> to vector<256x1xf32>
      %40 = vector.broadcast %39 : vector<256x1xf32> to vector<256x128xf32>
      %41 = arith.mulf %31, %40 : vector<256x128xf32>
      %cst_22 = arith.constant dense<0.000000e+00> : vector<128xf32>
      %42 = vector.multi_reduction <add>, %41, %cst_22 [0] : vector<256x128xf32> to vector<128xf32>
      %43 = vector.shape_cast %42 : vector<128xf32> to vector<1x128xf32>
      %44 = arith.mulf %41, %41 : vector<256x128xf32>
      %cst_23 = arith.constant dense<0.000000e+00> : vector<128xf32>
      %45 = vector.multi_reduction <add>, %44, %cst_23 [0] : vector<256x128xf32> to vector<128xf32>
      %46 = vector.shape_cast %45 : vector<128xf32> to vector<1x128xf32>
      %cst_24 = arith.constant 0.000000e+00 : f32
      %47 = vector.broadcast %cst_24 : f32 to vector<6x128xf32>
      %48 = tpu.concatenate %43, %46, %47 in 0 : vector<1x128xf32>, vector<1x128xf32>, vector<6x128xf32> -> vector<8x128xf32>
      %c0_25 = arith.constant 0 : index
      %c0_26 = arith.constant 0 : index
      %49 = vector.load %arg8[%c0_25, %c0_26] : memref<8x128xf32, #tpu.memory_space<vmem>>, vector<8x128xf32>
      tpu.vector_store %arg8[%c0_25, %c0_26], %48 {strides = array<i32>} : memref<8x128xf32, #tpu.memory_space<vmem>>, vector<8x128xf32>,
      %50 = arith.truncf %41 : vector<256x128xf32> to vector<256x128xbf16>
      %c0_27 = arith.constant 0 : index
      %c0_28 = arith.constant 0 : index
      %51 = vector.load %arg7[%c0_27, %c0_28] : memref<256x128xbf16, #tpu.memory_space<vmem>>, vector<256x128xbf16>
      tpu.vector_store %arg7[%c0_27, %c0_28], %50 {strides = array<i32>} : memref<256x128xbf16, #tpu.memory_space<vmem>>, vector<256x128xbf16>,
    } else {
    }
    return
  }
  func.func @transform_0(%arg0: i32, %arg1: i32) -> (i32, i32) {
    %c0_i32 = arith.constant 0 : i32
    return %arg0, %arg1 : i32, i32
  }
  func.func @transform_1(%arg0: i32, %arg1: i32) -> (i32, i32) {
    %c0_i32 = arith.constant 0 : i32
    %c0_i32_0 = arith.constant 0 : i32
    %c0_i32_1 = arith.constant 0 : i32
    return %c0_i32, %c0_i32_0 : i32, i32
  }
  func.func @transform_2(%arg0: i32, %arg1: i32) -> (i32, i32) {
    %c0_i32 = arith.constant 0 : i32
    %c0_i32_0 = arith.constant 0 : i32
    %c0_i32_1 = arith.constant 0 : i32
    return %c0_i32, %c0_i32_0 : i32, i32
  }
  func.func @transform_3(%arg0: i32, %arg1: i32) -> (i32, i32) {
    %c0_i32 = arith.constant 0 : i32
    %c0_i32_0 = arith.constant 0 : i32
    %c0_i32_1 = arith.constant 0 : i32
    return %c0_i32, %c0_i32_0 : i32, i32
  }
  func.func @transform_4(%arg0: i32, %arg1: i32) -> (i32, i32) {
    %c0_i32 = arith.constant 0 : i32
    %c0_i32_0 = arith.constant 0 : i32
    %c0_i32_1 = arith.constant 0 : i32
    return %c0_i32, %c0_i32_0 : i32, i32
  }
  func.func @transform_5(%arg0: i32, %arg1: i32) -> (i32, i32) {
    %c0_i32 = arith.constant 0 : i32
    %c0_i32_0 = arith.constant 0 : i32
    return %arg0, %c0_i32 : i32, i32
  }
  func.func @transform_6(%arg0: i32, %arg1: i32) -> (i32, i32) {
    %c0_i32 = arith.constant 0 : i32
    %c0_i32_0 = arith.constant 0 : i32
    return %arg0, %c0_i32 : i32, i32
  }
}

module attributes {stable_mosaic.version = 11 : i64} {
  func.func @bn_pool_kernel(%arg0: i32, %arg1: memref<512x128xbf16, #tpu.memory_space<vmem>>, %arg2: memref<8x128xf32, #tpu.memory_space<vmem>>, %arg3: memref<8x512xf32, #tpu.memory_space<vmem>>, %arg4: memref<512x128xbf16, #tpu.memory_space<vmem>>, %arg5: memref<8x128xf32, #tpu.memory_space<vmem>>) attributes {dimension_semantics = [#tpu.dimension_semantics<parallel>], iteration_bounds = array<i64: 1>, scalar_prefetch = 0 : i64, scratch_operands = 0 : i64, tpu.core_type = #tpu.core_type<tc>, window_params = [{transform_indices = @transform_0, window_bounds = array<i64: 512, 128>}, {pipeline_mode = #tpu.pipeline_mode<synchronous>, transform_indices = @transform_1, window_bounds = array<i64: 8, 128>}, {transform_indices = @transform_2, window_bounds = array<i64: 8, 512>}, {transform_indices = @transform_3, window_bounds = array<i64: 512, 128>}, {transform_indices = @transform_4, window_bounds = array<i64: 8, 128>}]} {
    %c0 = arith.constant 0 : index
    %c0_0 = arith.constant 0 : index
    %0 = vector.load %arg1[%c0, %c0_0] : memref<512x128xbf16, #tpu.memory_space<vmem>>, vector<512x128xbf16>
    %1 = arith.extf %0 : vector<512x128xbf16> to vector<512x128xf32>
    %c0_1 = arith.constant 0 : index
    %c0_2 = arith.constant 0 : index
    %2 = vector.load %arg2[%c0_1, %c0_2] : memref<8x128xf32, #tpu.memory_space<vmem>>, vector<1x128xf32>
    %3 = vector.broadcast %2 : vector<1x128xf32> to vector<512x128xf32>
    %4 = arith.mulf %1, %3 : vector<512x128xf32>
    %c1 = arith.constant 1 : index
    %c0_3 = arith.constant 0 : index
    %5 = vector.load %arg2[%c1, %c0_3] : memref<8x128xf32, #tpu.memory_space<vmem>>, vector<1x128xf32>
    %6 = vector.broadcast %5 : vector<1x128xf32> to vector<512x128xf32>
    %7 = arith.addf %4, %6 : vector<512x128xf32>
    %8 = arith.truncf %7 : vector<512x128xf32> to vector<512x128xbf16>
    %c0_4 = arith.constant 0 : index
    %c0_5 = arith.constant 0 : index
    %9 = vector.load %arg4[%c0_4, %c0_5] : memref<512x128xbf16, #tpu.memory_space<vmem>>, vector<512x128xbf16>
    tpu.vector_store %arg4[%c0_4, %c0_5], %8 {strides = array<i32>} : memref<512x128xbf16, #tpu.memory_space<vmem>>, vector<512x128xbf16>,
    %c0_6 = arith.constant 0 : index
    %c0_7 = arith.constant 0 : index
    %10 = vector.load %arg3[%c0_6, %c0_7] : memref<8x512xf32, #tpu.memory_space<vmem>>, vector<8x512xf32>
    %cst = arith.constant dense<0.000000e+00> : vector<8x128xf32>
    %11 = tpu.matmul %10, %7, %cst {dimension_numbers = #tpu.dot_dimension_numbers<[1], [0], [0], [1], [0, 0, 1, 1], [], []>} : vector<8x512xf32>, vector<512x128xf32>, vector<8x128xf32> -> vector<8x128xf32>
    %c0_8 = arith.constant 0 : index
    %c0_9 = arith.constant 0 : index
    %12 = vector.load %arg5[%c0_8, %c0_9] : memref<8x128xf32, #tpu.memory_space<vmem>>, vector<8x128xf32>
    tpu.vector_store %arg5[%c0_8, %c0_9], %11 {strides = array<i32>} : memref<8x128xf32, #tpu.memory_space<vmem>>, vector<8x128xf32>,
    return
  }
  func.func @transform_0(%arg0: i32) -> (i32, i32) {
    %c0_i32 = arith.constant 0 : i32
    %c0_i32_0 = arith.constant 0 : i32
    return %arg0, %c0_i32 : i32, i32
  }
  func.func @transform_1(%arg0: i32) -> (i32, i32) {
    %c0_i32 = arith.constant 0 : i32
    %c0_i32_0 = arith.constant 0 : i32
    %c0_i32_1 = arith.constant 0 : i32
    return %c0_i32, %c0_i32_0 : i32, i32
  }
  func.func @transform_2(%arg0: i32) -> (i32, i32) {
    %c0_i32 = arith.constant 0 : i32
    %c0_i32_0 = arith.constant 0 : i32
    return %c0_i32, %arg0 : i32, i32
  }
  func.func @transform_3(%arg0: i32) -> (i32, i32) {
    %c0_i32 = arith.constant 0 : i32
    %c0_i32_0 = arith.constant 0 : i32
    return %arg0, %c0_i32 : i32, i32
  }
  func.func @transform_4(%arg0: i32) -> (i32, i32) {
    %c0_i32 = arith.constant 0 : i32
    %c0_i32_0 = arith.constant 0 : i32
    return %arg0, %c0_i32 : i32, i32
  }
}

</mosaic_0001>

<llo_original>
// kernel: gconv_forward.5
$region0: #{gconv_forward.5}
  #allocation0 [shape = 'u32[]', space=smem, size = 0x4, offset = 0x4, fixed_abs, tag = 'smem constant byte address 0x4 - core index']
  #allocation1 [shape = 'u32[144,128]{1,0:T(1,128)}', space=vmem, size = 0x12000, scoped, tag = 'internal scratch']
  %s0 = inlined_call_operand.vmem [shape: bf16[512,128], index: 0, kind: input, shape index: {}]
  %s1 = inlined_call_operand.vmem [shape: f32[8,128], index: 1, kind: input, shape index: {}]
  %s2 = inlined_call_operand.vmem [shape: f32[8,512], index: 2, kind: input, shape index: {}]
  %s3 = inlined_call_operand.vmem [shape: bf16[512,128], index: 3, kind: output, shape index: {0}]
  %s4 = inlined_call_operand.vmem [shape: f32[8,128], index: 4, kind: output, shape index: {1}]
  %5 = xla_tuple %s3, %s4
  %s6 = sld [smem:[#allocation0]]
  $region30: #{gconv_forward.5} parent=0
    _
  %s8 = ssub.s32 1, %s6
  %s9 = scalar_select 0, %s8, %s6
  // Predicated region
  $region2: #{gconv_forward.5} parent=0 // pred_check
    _
  $region3: #{gconv_forward.5} parent=0 // pred_check_branch
    %11 = sbr.rel (0) target = $region5
  $region4: #{gconv_forward.5} parent=0 // pred_region
    _
  $region5: #{gconv_forward.5} parent=0 // pred_fallthru
    _
  // Predicated region
  $region6: #{gconv_forward.5} parent=0 // pred_check
    _
  $region7: #{gconv_forward.5} parent=0 // pred_check_branch
    %13 = sbr.rel (0) target = $region9
  $region8: #{gconv_forward.5} parent=0 // pred_region
    _
  $region9: #{gconv_forward.5} parent=0 // pred_fallthru
    _
  // Predicated region
  $region10: #{gconv_forward.5} parent=0 // pred_check
    _
  $region11: #{gconv_forward.5} parent=0 // pred_check_branch
    %15 = sbr.rel (0) target = $region13
  $region12: #{gconv_forward.5} parent=0 // pred_region
    _
  $region13: #{gconv_forward.5} parent=0 // pred_fallthru
    _
  %v16 = vld [vmem:[%s0] sm:$0xf]
  %v17 = vld [vmem:[%s0 + $0x4] sm:$0xf]
  %v18 = vld [vmem:[%s0 + $0x8] sm:$0xf]
  %v19 = vld [vmem:[%s0 + $0xc] sm:$0xf]
  %v20 = vld [vmem:[%s0 + $0x10] sm:$0xf]
  %v21 = vld [vmem:[%s0 + $0x14] sm:$0xf]
  %v22 = vld [vmem:[%s0 + $0x18] sm:$0xf]
  %v23 = vld [vmem:[%s0 + $0x1c] sm:$0xf]
  %v24 = vld [vmem:[%s0 + $0x20] sm:$0xf]
  %v25 = vld [vmem:[%s0 + $0x24] sm:$0xf]
  %v26 = vld [vmem:[%s0 + $0x28] sm:$0xf]
  %v27 = vld [vmem:[%s0 + $0x2c] sm:$0xf]
  %v28 = vld [vmem:[%s0 + $0x30] sm:$0xf]
  %v29 = vld [vmem:[%s0 + $0x34] sm:$0xf]
  %v30 = vld [vmem:[%s0 + $0x38] sm:$0xf]
  %v31 = vld [vmem:[%s0 + $0x3c] sm:$0xf]
  %v32 = vld [vmem:[%s0 + $0x40] sm:$0xf]
  %v33 = vld [vmem:[%s0 + $0x44] sm:$0xf]
  %v34 = vld [vmem:[%s0 + $0x48] sm:$0xf]
  %v35 = vld [vmem:[%s0 + $0x4c] sm:$0xf]
  %v36 = vld [vmem:[%s0 + $0x50] sm:$0xf]
  %v37 = vld [vmem:[%s0 + $0x54] sm:$0xf]
  %v38 = vld [vmem:[%s0 + $0x58] sm:$0xf]
  %v39 = vld [vmem:[%s0 + $0x5c] sm:$0xf]
  %v40 = vld [vmem:[%s0 + $0x60] sm:$0xf]
  %v41 = vld [vmem:[%s0 + $0x64] sm:$0xf]
  %v42 = vld [vmem:[%s0 + $0x68] sm:$0xf]
  %v43 = vld [vmem:[%s0 + $0x6c] sm:$0xf]
  %v44 = vld [vmem:[%s0 + $0x70] sm:$0xf]
  %v45 = vld [vmem:[%s0 + $0x74] sm:$0xf]
  %v46 = vld [vmem:[%s0 + $0x78] sm:$0xf]
  %v47 = vld [vmem:[%s0 + $0x7c] sm:$0xf]
  %v48 = vld [vmem:[%s0 + $0x80] sm:$0xf]
  %v49 = vld [vmem:[%s0 + $0x84] sm:$0xf]
  %v50 = vld [vmem:[%s0 + $0x88] sm:$0xf]
  %v51 = vld [vmem:[%s0 + $0x8c] sm:$0xf]
  %v52 = vld [vmem:[%s0 + $0x90] sm:$0xf]
  %v53 = vld [vmem:[%s0 + $0x94] sm:$0xf]
  %v54 = vld [vmem:[%s0 + $0x98] sm:$0xf]
  %v55 = vld [vmem:[%s0 + $0x9c] sm:$0xf]
  %v56 = vld [vmem:[%s0 + $0xa0] sm:$0xf]
  %v57 = vld [vmem:[%s0 + $0xa4] sm:$0xf]
  %v58 = vld [vmem:[%s0 + $0xa8] sm:$0xf]
  %v59 = vld [vmem:[%s0 + $0xac] sm:$0xf]
  %v60 = vld [vmem:[%s0 + $0xb0] sm:$0xf]
  %v61 = vld [vmem:[%s0 + $0xb4] sm:$0xf]
  %v62 = vld [vmem:[%s0 + $0xb8] sm:$0xf]
  %v63 = vld [vmem:[%s0 + $0xbc] sm:$0xf]
  %v64 = vld [vmem:[%s0 + $0xc0] sm:$0xf]
  %v65 = vld [vmem:[%s0 + $0xc4] sm:$0xf]
  %v66 = vld [vmem:[%s0 + $0xc8] sm:$0xf]
  %v67 = vld [vmem:[%s0 + $0xcc] sm:$0xf]
  %v68 = vld [vmem:[%s0 + $0xd0] sm:$0xf]
  %v69 = vld [vmem:[%s0 + $0xd4] sm:$0xf]
  %v70 = vld [vmem:[%s0 + $0xd8] sm:$0xf]
  %v71 = vld [vmem:[%s0 + $0xdc] sm:$0xf]
  %v72 = vld [vmem:[%s0 + $0xe0] sm:$0xf]
  %v73 = vld [vmem:[%s0 + $0xe4] sm:$0xf]
  %v74 = vld [vmem:[%s0 + $0xe8] sm:$0xf]
  %v75 = vld [vmem:[%s0 + $0xec] sm:$0xf]
  %v76 = vld [vmem:[%s0 + $0xf0] sm:$0xf]
  %v77 = vld [vmem:[%s0 + $0xf4] sm:$0xf]
  %v78 = vld [vmem:[%s0 + $0xf8] sm:$0xf]
  %v79 = vld [vmem:[%s0 + $0xfc] sm:$0xf]
  %v80 = vunpack.c.l.bf16 %v16
  %v81 = vunpack.c.l.bf16 %v17
  %v82 = vunpack.c.l.bf16 %v18
  %v83 = vunpack.c.l.bf16 %v19
  %v84 = vunpack.c.l.bf16 %v20
  %v85 = vunpack.c.l.bf16 %v21
  %v86 = vunpack.c.l.bf16 %v22
  %v87 = vunpack.c.l.bf16 %v23
  %v88 = vunpack.c.l.bf16 %v24
  %v89 = vunpack.c.l.bf16 %v25
  %v90 = vunpack.c.l.bf16 %v26
  %v91 = vunpack.c.l.bf16 %v27
  %v92 = vunpack.c.l.bf16 %v28
  %v93 = vunpack.c.l.bf16 %v29
  %v94 = vunpack.c.l.bf16 %v30
  %v95 = vunpack.c.l.bf16 %v31
  %v96 = vunpack.c.l.bf16 %v32
  %v97 = vunpack.c.l.bf16 %v33
  %v98 = vunpack.c.l.bf16 %v34
  %v99 = vunpack.c.l.bf16 %v35
  %v100 = vunpack.c.l.bf16 %v36
  %v101 = vunpack.c.l.bf16 %v37
  %v102 = vunpack.c.l.bf16 %v38
  %v103 = vunpack.c.l.bf16 %v39
  %v104 = vunpack.c.l.bf16 %v40
  %v105 = vunpack.c.l.bf16 %v41
  %v106 = vunpack.c.l.bf16 %v42
  %v107 = vunpack.c.l.bf16 %v43
  %v108 = vunpack.c.l.bf16 %v44
  %v109 = vunpack.c.l.bf16 %v45
  %v110 = vunpack.c.l.bf16 %v46
  %v111 = vunpack.c.l.bf16 %v47
  %v112 = vunpack.c.l.bf16 %v48
  %v113 = vunpack.c.l.bf16 %v49
  %v114 = vunpack.c.l.bf16 %v50
  %v115 = vunpack.c.l.bf16 %v51
  %v116 = vunpack.c.l.bf16 %v52
  %v117 = vunpack.c.l.bf16 %v53
  %v118 = vunpack.c.l.bf16 %v54
  %v119 = vunpack.c.l.bf16 %v55
  %v120 = vunpack.c.l.bf16 %v56
  %v121 = vunpack.c.l.bf16 %v57
  %v122 = vunpack.c.l.bf16 %v58
  %v123 = vunpack.c.l.bf16 %v59
  %v124 = vunpack.c.l.bf16 %v60
  %v125 = vunpack.c.l.bf16 %v61
  %v126 = vunpack.c.l.bf16 %v62
  %v127 = vunpack.c.l.bf16 %v63
  %v128 = vunpack.c.l.bf16 %v64
  %v129 = vunpack.c.l.bf16 %v65
  %v130 = vunpack.c.l.bf16 %v66
  %v131 = vunpack.c.l.bf16 %v67
  %v132 = vunpack.c.l.bf16 %v68
  %v133 = vunpack.c.l.bf16 %v69
  %v134 = vunpack.c.l.bf16 %v70
  %v135 = vunpack.c.l.bf16 %v71
  %v136 = vunpack.c.l.bf16 %v72
  %v137 = vunpack.c.l.bf16 %v73
  %v138 = vunpack.c.l.bf16 %v74
  %v139 = vunpack.c.l.bf16 %v75
  %v140 = vunpack.c.l.bf16 %v76
  %v141 = vunpack.c.l.bf16 %v77
  %v142 = vunpack.c.l.bf16 %v78
  %v143 = vunpack.c.l.bf16 %v79
  %v144 = vld [vmem:[%s1] sm:$0x1]
  %v145 = vlaneseq
  %v146 = vshrl.u32 %v145, 7
  %v147 = vsub.s32 0, %v146
  %v148 = vrot.slane %v144, %v147
  %v149 = vmul.f32 %v80, %v148
  %v150 = vmul.f32 %v81, %v148
  %v151 = vmul.f32 %v82, %v148
  %v152 = vmul.f32 %v83, %v148
  %v153 = vmul.f32 %v84, %v148
  %v154 = vmul.f32 %v85, %v148
  %v155 = vmul.f32 %v86, %v148
  %v156 = vmul.f32 %v87, %v148
  %v157 = vmul.f32 %v88, %v148
  %v158 = vmul.f32 %v89, %v148
  %v159 = vmul.f32 %v90, %v148
  %v160 = vmul.f32 %v91, %v148
  %v161 = vmul.f32 %v92, %v148
  %v162 = vmul.f32 %v93, %v148
  %v163 = vmul.f32 %v94, %v148
  %v164 = vmul.f32 %v95, %v148
  %v165 = vmul.f32 %v96, %v148
  %v166 = vmul.f32 %v97, %v148
  %v167 = vmul.f32 %v98, %v148
  %v168 = vmul.f32 %v99, %v148
  %v169 = vmul.f32 %v100, %v148
  %v170 = vmul.f32 %v101, %v148
  %v171 = vmul.f32 %v102, %v148
  %v172 = vmul.f32 %v103, %v148
  %v173 = vmul.f32 %v104, %v148
  %v174 = vmul.f32 %v105, %v148
  %v175 = vmul.f32 %v106, %v148
  %v176 = vmul.f32 %v107, %v148
  %v177 = vmul.f32 %v108, %v148
  %v178 = vmul.f32 %v109, %v148
  %v179 = vmul.f32 %v110, %v148
  %v180 = vmul.f32 %v111, %v148
  %v181 = vmul.f32 %v112, %v148
  %v182 = vmul.f32 %v113, %v148
  %v183 = vmul.f32 %v114, %v148
  %v184 = vmul.f32 %v115, %v148
  %v185 = vmul.f32 %v116, %v148
  %v186 = vmul.f32 %v117, %v148
  %v187 = vmul.f32 %v118, %v148
  %v188 = vmul.f32 %v119, %v148
  %v189 = vmul.f32 %v120, %v148
  %v190 = vmul.f32 %v121, %v148
  %v191 = vmul.f32 %v122, %v148
  %v192 = vmul.f32 %v123, %v148
  %v193 = vmul.f32 %v124, %v148
  %v194 = vmul.f32 %v125, %v148
  %v195 = vmul.f32 %v126, %v148
  %v196 = vmul.f32 %v127, %v148
  %v197 = vmul.f32 %v128, %v148
  %v198 = vmul.f32 %v129, %v148
  %v199 = vmul.f32 %v130, %v148
  %v200 = vmul.f32 %v131, %v148
  %v201 = vmul.f32 %v132, %v148
  %v202 = vmul.f32 %v133, %v148
  %v203 = vmul.f32 %v134, %v148
  %v204 = vmul.f32 %v135, %v148
  %v205 = vmul.f32 %v136, %v148
  %v206 = vmul.f32 %v137, %v148
  %v207 = vmul.f32 %v138, %v148
  %v208 = vmul.f32 %v139, %v148
  %v209 = vmul.f32 %v140, %v148
  %v210 = vmul.f32 %v141, %v148
  %v211 = vmul.f32 %v142, %v148
  %v212 = vmul.f32 %v143, %v148
  %v213 = vld [vmem:[%s1 + $0x1] sm:$0x1]
  %v214 = vlaneseq
  %v215 = vshrl.u32 %v214, 7
  %v216 = vsub.s32 0, %v215
  %v217 = vrot.slane %v213, %v216
  %v218 = vadd.f32 %v149, %v217
  %v219 = vadd.f32 %v150, %v217
  %v220 = vadd.f32 %v151, %v217
  %v221 = vadd.f32 %v152, %v217
  %v222 = vadd.f32 %v153, %v217
  %v223 = vadd.f32 %v154, %v217
  %v224 = vadd.f32 %v155, %v217
  %v225 = vadd.f32 %v156, %v217
  %v226 = vadd.f32 %v157, %v217
  %v227 = vadd.f32 %v158, %v217
  %v228 = vadd.f32 %v159, %v217
  %v229 = vadd.f32 %v160, %v217
  %v230 = vadd.f32 %v161, %v217
  %v231 = vadd.f32 %v162, %v217
  %v232 = vadd.f32 %v163, %v217
  %v233 = vadd.f32 %v164, %v217
  %v234 = vadd.f32 %v165, %v217
  %v235 = vadd.f32 %v166, %v217
  %v236 = vadd.f32 %v167, %v217
  %v237 = vadd.f32 %v168, %v217
  %v238 = vadd.f32 %v169, %v217
  %v239 = vadd.f32 %v170, %v217
  %v240 = vadd.f32 %v171, %v217
  %v241 = vadd.f32 %v172, %v217
  %v242 = vadd.f32 %v173, %v217
  %v243 = vadd.f32 %v174, %v217
  %v244 = vadd.f32 %v175, %v217
  %v245 = vadd.f32 %v176, %v217
  %v246 = vadd.f32 %v177, %v217
  %v247 = vadd.f32 %v178, %v217
  %v248 = vadd.f32 %v179, %v217
  %v249 = vadd.f32 %v180, %v217
  %v250 = vadd.f32 %v181, %v217
  %v251 = vadd.f32 %v182, %v217
  %v252 = vadd.f32 %v183, %v217
  %v253 = vadd.f32 %v184, %v217
  %v254 = vadd.f32 %v185, %v217
  %v255 = vadd.f32 %v186, %v217
  %v256 = vadd.f32 %v187, %v217
  %v257 = vadd.f32 %v188, %v217
  %v258 = vadd.f32 %v189, %v217
  %v259 = vadd.f32 %v190, %v217
  %v260 = vadd.f32 %v191, %v217
  %v261 = vadd.f32 %v192, %v217
  %v262 = vadd.f32 %v193, %v217
  %v263 = vadd.f32 %v194, %v217
  %v264 = vadd.f32 %v195, %v217
  %v265 = vadd.f32 %v196, %v217
  %v266 = vadd.f32 %v197, %v217
  %v267 = vadd.f32 %v198, %v217
  %v268 = vadd.f32 %v199, %v217
  %v269 = vadd.f32 %v200, %v217
  %v270 = vadd.f32 %v201, %v217
  %v271 = vadd.f32 %v202, %v217
  %v272 = vadd.f32 %v203, %v217
  %v273 = vadd.f32 %v204, %v217
  %v274 = vadd.f32 %v205, %v217
  %v275 = vadd.f32 %v206, %v217
  %v276 = vadd.f32 %v207, %v217
  %v277 = vadd.f32 %v208, %v217
  %v278 = vadd.f32 %v209, %v217
  %v279 = vadd.f32 %v210, %v217
  %v280 = vadd.f32 %v211, %v217
  %v281 = vadd.f32 %v212, %v217
  %v282 = vpack.c.bf16 %v219, %v218
  %v283 = vpack.c.bf16 %v221, %v220
  %v284 = vpack.c.bf16 %v223, %v222
  %v285 = vpack.c.bf16 %v225, %v224
  %v286 = vpack.c.bf16 %v227, %v226
  %v287 = vpack.c.bf16 %v229, %v228
  %v288 = vpack.c.bf16 %v231, %v230
  %v289 = vpack.c.bf16 %v233, %v232
  %v290 = vpack.c.bf16 %v235, %v234
  %v291 = vpack.c.bf16 %v237, %v236
  %v292 = vpack.c.bf16 %v239, %v238
  %v293 = vpack.c.bf16 %v241, %v240
  %v294 = vpack.c.bf16 %v243, %v242
  %v295 = vpack.c.bf16 %v245, %v244
  %v296 = vpack.c.bf16 %v247, %v246
  %v297 = vpack.c.bf16 %v249, %v248
  %v298 = vpack.c.bf16 %v251, %v250
  %v299 = vpack.c.bf16 %v253, %v252
  %v300 = vpack.c.bf16 %v255, %v254
  %v301 = vpack.c.bf16 %v257, %v256
  %v302 = vpack.c.bf16 %v259, %v258
  %v303 = vpack.c.bf16 %v261, %v260
  %v304 = vpack.c.bf16 %v263, %v262
  %v305 = vpack.c.bf16 %v265, %v264
  %v306 = vpack.c.bf16 %v267, %v266
  %v307 = vpack.c.bf16 %v269, %v268
  %v308 = vpack.c.bf16 %v271, %v270
  %v309 = vpack.c.bf16 %v273, %v272
  %v310 = vpack.c.bf16 %v275, %v274
  %v311 = vpack.c.bf16 %v277, %v276
  %v312 = vpack.c.bf16 %v279, %v278
  %v313 = vpack.c.bf16 %v281, %v280
  %v346 = vunpack.c.l.b16 %v282
  %v347 = vunpack.c.h.b16 %v282
  %v348 = vunpack.c.l.b16 %v283
  %v349 = vunpack.c.h.b16 %v283
  %v350 = vunpack.c.l.b16 %v284
  %v351 = vunpack.c.h.b16 %v284
  %v352 = vunpack.c.l.b16 %v285
  %v353 = vunpack.c.h.b16 %v285
  %v354 = vunpack.c.l.b16 %v286
  %v355 = vunpack.c.h.b16 %v286
  %v356 = vunpack.c.l.b16 %v287
  %v357 = vunpack.c.h.b16 %v287
  %v358 = vunpack.c.l.b16 %v288
  %v359 = vunpack.c.h.b16 %v288
  %v360 = vunpack.c.l.b16 %v289
  %v361 = vunpack.c.h.b16 %v289
  %v362 = vunpack.c.l.b16 %v290
  %v363 = vunpack.c.h.b16 %v290
  %v364 = vunpack.c.l.b16 %v291
  %v365 = vunpack.c.h.b16 %v291
  %v366 = vunpack.c.l.b16 %v292
  %v367 = vunpack.c.h.b16 %v292
  %v368 = vunpack.c.l.b16 %v293
  %v369 = vunpack.c.h.b16 %v293
  %v370 = vunpack.c.l.b16 %v294
  %v371 = vunpack.c.h.b16 %v294
  %v372 = vunpack.c.l.b16 %v295
  %v373 = vunpack.c.h.b16 %v295
  %v374 = vunpack.c.l.b16 %v296
  %v375 = vunpack.c.h.b16 %v296
  %v376 = vunpack.c.l.b16 %v297
  %v377 = vunpack.c.h.b16 %v297
  %v378 = vunpack.c.l.b16 %v298
  %v379 = vunpack.c.h.b16 %v298
  %v380 = vunpack.c.l.b16 %v299
  %v381 = vunpack.c.h.b16 %v299
  %v382 = vunpack.c.l.b16 %v300
  %v383 = vunpack.c.h.b16 %v300
  %v384 = vunpack.c.l.b16 %v301
  %v385 = vunpack.c.h.b16 %v301
  %v386 = vunpack.c.l.b16 %v302
  %v387 = vunpack.c.h.b16 %v302
  %v388 = vunpack.c.l.b16 %v303
  %v389 = vunpack.c.h.b16 %v303
  %v390 = vunpack.c.l.b16 %v304
  %v391 = vunpack.c.h.b16 %v304
  %v392 = vunpack.c.l.b16 %v305
  %v393 = vunpack.c.h.b16 %v305
  %v394 = vunpack.c.l.b16 %v306
  %v395 = vunpack.c.h.b16 %v306
  %v396 = vunpack.c.l.b16 %v307
  %v397 = vunpack.c.h.b16 %v307
  %v398 = vunpack.c.l.b16 %v308
  %v399 = vunpack.c.h.b16 %v308
  %v400 = vunpack.c.l.b16 %v309
  %v401 = vunpack.c.h.b16 %v309
  %v402 = vunpack.c.l.b16 %v310
  %v403 = vunpack.c.h.b16 %v310
  %v404 = vunpack.c.l.b16 %v311
  %v405 = vunpack.c.h.b16 %v311
  %v406 = vunpack.c.l.b16 %v312
  %v407 = vunpack.c.h.b16 %v312
  %v408 = vunpack.c.l.b16 %v313
  %v409 = vunpack.c.h.b16 %v313
  %v410 = vpack.c.b16 %v346, %v346
  %v411 = vpack.c.b16 %v347, %v347
  %v412 = vpack.c.b16 %v348, %v348
  %v413 = vpack.c.b16 %v349, %v349
  %v414 = vpack.c.b16 %v350, %v350
  %v415 = vpack.c.b16 %v351, %v351
  %v416 = vpack.c.b16 %v352, %v352
  %v417 = vpack.c.b16 %v353, %v353
  %v418 = vpack.c.b16 %v354, %v354
  %v419 = vpack.c.b16 %v355, %v355
  %v420 = vpack.c.b16 %v356, %v356
  %v421 = vpack.c.b16 %v357, %v357
  %v422 = vpack.c.b16 %v358, %v358
  %v423 = vpack.c.b16 %v359, %v359
  %v424 = vpack.c.b16 %v360, %v360
  %v425 = vpack.c.b16 %v361, %v361
  %v426 = vpack.c.b16 %v362, %v362
  %v427 = vpack.c.b16 %v363, %v363
  %v428 = vpack.c.b16 %v364, %v364
  %v429 = vpack.c.b16 %v365, %v365
  %v430 = vpack.c.b16 %v366, %v366
  %v431 = vpack.c.b16 %v367, %v367
  %v432 = vpack.c.b16 %v368, %v368
  %v433 = vpack.c.b16 %v369, %v369
  %v434 = vpack.c.b16 %v370, %v370
  %v435 = vpack.c.b16 %v371, %v371
  %v436 = vpack.c.b16 %v372, %v372
  %v437 = vpack.c.b16 %v373, %v373
  %v438 = vpack.c.b16 %v374, %v374
  %v439 = vpack.c.b16 %v375, %v375
  %v440 = vpack.c.b16 %v376, %v376
  %v441 = vpack.c.b16 %v377, %v377
  %v442 = vpack.c.b16 %v378, %v378
  %v443 = vpack.c.b16 %v379, %v379
  %v444 = vpack.c.b16 %v380, %v380
  %v445 = vpack.c.b16 %v381, %v381
  %v446 = vpack.c.b16 %v382, %v382
  %v447 = vpack.c.b16 %v383, %v383
  %v448 = vpack.c.b16 %v384, %v384
  %v449 = vpack.c.b16 %v385, %v385
  %v450 = vpack.c.b16 %v386, %v386
  %v451 = vpack.c.b16 %v387, %v387
  %v452 = vpack.c.b16 %v388, %v388
  %v453 = vpack.c.b16 %v389, %v389
  %v454 = vpack.c.b16 %v390, %v390
  %v455 = vpack.c.b16 %v391, %v391
  %v456 = vpack.c.b16 %v392, %v392
  %v457 = vpack.c.b16 %v393, %v393
  %v458 = vpack.c.b16 %v394, %v394
  %v459 = vpack.c.b16 %v395, %v395
  %v460 = vpack.c.b16 %v396, %v396
  %v461 = vpack.c.b16 %v397, %v397
  %v462 = vpack.c.b16 %v398, %v398
  %v463 = vpack.c.b16 %v399, %v399
  %v464 = vpack.c.b16 %v400, %v400
  %v465 = vpack.c.b16 %v401, %v401
  %v466 = vpack.c.b16 %v402, %v402
  %v467 = vpack.c.b16 %v403, %v403
  %v468 = vpack.c.b16 %v404, %v404
  %v469 = vpack.c.b16 %v405, %v405
  %v470 = vpack.c.b16 %v406, %v406
  %v471 = vpack.c.b16 %v407, %v407
  %v472 = vpack.c.b16 %v408, %v408
  %v473 = vpack.c.b16 %v409, %v409
  %538 = vst [vmem:[%s3] sm:$0xf] %v410
  %539 = vst [vmem:[%s3 + $0x4] sm:$0xf] %v411
  %540 = vst [vmem:[%s3 + $0x8] sm:$0xf] %v412
  %541 = vst [vmem:[%s3 + $0xc] sm:$0xf] %v413
  %542 = vst [vmem:[%s3 + $0x10] sm:$0xf] %v414
  %543 = vst [vmem:[%s3 + $0x14] sm:$0xf] %v415
  %544 = vst [vmem:[%s3 + $0x18] sm:$0xf] %v416
  %545 = vst [vmem:[%s3 + $0x1c] sm:$0xf] %v417
  %546 = vst [vmem:[%s3 + $0x20] sm:$0xf] %v418
  %547 = vst [vmem:[%s3 + $0x24] sm:$0xf] %v419
  %548 = vst [vmem:[%s3 + $0x28] sm:$0xf] %v420
  %549 = vst [vmem:[%s3 + $0x2c] sm:$0xf] %v421
  %550 = vst [vmem:[%s3 + $0x30] sm:$0xf] %v422
  %551 = vst [vmem:[%s3 + $0x34] sm:$0xf] %v423
  %552 = vst [vmem:[%s3 + $0x38] sm:$0xf] %v424
  %553 = vst [vmem:[%s3 + $0x3c] sm:$0xf] %v425
  %554 = vst [vmem:[%s3 + $0x40] sm:$0xf] %v426
  %555 = vst [vmem:[%s3 + $0x44] sm:$0xf] %v427
  %556 = vst [vmem:[%s3 + $0x48] sm:$0xf] %v428
  %557 = vst [vmem:[%s3 + $0x4c] sm:$0xf] %v429
  %558 = vst [vmem:[%s3 + $0x50] sm:$0xf] %v430
  %559 = vst [vmem:[%s3 + $0x54] sm:$0xf] %v431
  %560 = vst [vmem:[%s3 + $0x58] sm:$0xf] %v432
  %561 = vst [vmem:[%s3 + $0x5c] sm:$0xf] %v433
  %562 = vst [vmem:[%s3 + $0x60] sm:$0xf] %v434
  %563 = vst [vmem:[%s3 + $0x64] sm:$0xf] %v435
  %564 = vst [vmem:[%s3 + $0x68] sm:$0xf] %v436
  %565 = vst [vmem:[%s3 + $0x6c] sm:$0xf] %v437
  %566 = vst [vmem:[%s3 + $0x70] sm:$0xf] %v438
  %567 = vst [vmem:[%s3 + $0x74] sm:$0xf] %v439
  %568 = vst [vmem:[%s3 + $0x78] sm:$0xf] %v440
  %569 = vst [vmem:[%s3 + $0x7c] sm:$0xf] %v441
  %570 = vst [vmem:[%s3 + $0x80] sm:$0xf] %v442
  %571 = vst [vmem:[%s3 + $0x84] sm:$0xf] %v443
  %572 = vst [vmem:[%s3 + $0x88] sm:$0xf] %v444
  %573 = vst [vmem:[%s3 + $0x8c] sm:$0xf] %v445
  %574 = vst [vmem:[%s3 + $0x90] sm:$0xf] %v446
  %575 = vst [vmem:[%s3 + $0x94] sm:$0xf] %v447
  %576 = vst [vmem:[%s3 + $0x98] sm:$0xf] %v448
  %577 = vst [vmem:[%s3 + $0x9c] sm:$0xf] %v449
  %578 = vst [vmem:[%s3 + $0xa0] sm:$0xf] %v450
  %579 = vst [vmem:[%s3 + $0xa4] sm:$0xf] %v451
  %580 = vst [vmem:[%s3 + $0xa8] sm:$0xf] %v452
  %581 = vst [vmem:[%s3 + $0xac] sm:$0xf] %v453
  %582 = vst [vmem:[%s3 + $0xb0] sm:$0xf] %v454
  %583 = vst [vmem:[%s3 + $0xb4] sm:$0xf] %v455
  %584 = vst [vmem:[%s3 + $0xb8] sm:$0xf] %v456
  %585 = vst [vmem:[%s3 + $0xbc] sm:$0xf] %v457
  %586 = vst [vmem:[%s3 + $0xc0] sm:$0xf] %v458
  %587 = vst [vmem:[%s3 + $0xc4] sm:$0xf] %v459
  %588 = vst [vmem:[%s3 + $0xc8] sm:$0xf] %v460
  %589 = vst [vmem:[%s3 + $0xcc] sm:$0xf] %v461
  %590 = vst [vmem:[%s3 + $0xd0] sm:$0xf] %v462
  %591 = vst [vmem:[%s3 + $0xd4] sm:$0xf] %v463
  %592 = vst [vmem:[%s3 + $0xd8] sm:$0xf] %v464
  %593 = vst [vmem:[%s3 + $0xdc] sm:$0xf] %v465
  %594 = vst [vmem:[%s3 + $0xe0] sm:$0xf] %v466
  %595 = vst [vmem:[%s3 + $0xe4] sm:$0xf] %v467
  %596 = vst [vmem:[%s3 + $0xe8] sm:$0xf] %v468
  %597 = vst [vmem:[%s3 + $0xec] sm:$0xf] %v469
  %598 = vst [vmem:[%s3 + $0xf0] sm:$0xf] %v470
  %599 = vst [vmem:[%s3 + $0xf4] sm:$0xf] %v471
  %600 = vst [vmem:[%s3 + $0xf8] sm:$0xf] %v472
  %601 = vst [vmem:[%s3 + $0xfc] sm:$0xf] %v473
  %v602 = vld [vmem:[%s2] sm:$0xff]
  %v603 = vld [vmem:[%s2 + $0x8] sm:$0xff]
  %v604 = vld [vmem:[%s2 + $0x10] sm:$0xff]
  %v605 = vld [vmem:[%s2 + $0x18] sm:$0xff]
  %606 = vmatprep.subr.mxu0 0.0
  %607 = vmatpush1.msra.mxu0 %v233
  %608 = vmatprep.subr.mxu0 0.0
  %609 = vmatpush1.msra.mxu0 %v232
  %610 = vmatprep.subr.mxu0 0.0
  %611 = vmatpush1.msra.mxu0 %v231
  %612 = vmatprep.subr.mxu0 0.0
  %613 = vmatpush1.msra.mxu0 %v230
  %614 = vmatprep.subr.mxu0 0.0
  %615 = vmatpush1.msra.mxu0 %v229
  %616 = vmatprep.subr.mxu0 0.0
  %617 = vmatpush1.msra.mxu0 %v228
  %618 = vmatprep.subr.mxu0 0.0
  %619 = vmatpush1.msra.mxu0 %v227
  %620 = vmatprep.subr.mxu0 0.0
  %621 = vmatpush1.msra.mxu0 %v226
  %622 = vmatprep.subr.mxu0 0.0
  %623 = vmatpush1.msra.mxu0 %v225
  %624 = vmatprep.subr.mxu0 0.0
  %625 = vmatpush1.msra.mxu0 %v224
  %626 = vmatprep.subr.mxu0 0.0
  %627 = vmatpush1.msra.mxu0 %v223
  %628 = vmatprep.subr.mxu0 0.0
  %629 = vmatpush1.msra.mxu0 %v222
  %630 = vmatprep.subr.mxu0 0.0
  %631 = vmatpush1.msra.mxu0 %v221
  %632 = vmatprep.subr.mxu0 0.0
  %633 = vmatpush1.msra.mxu0 %v220
  %634 = vmatprep.subr.mxu0 0.0
  %635 = vmatpush1.msra.mxu0 %v219
  %636 = vmatprep.subr.mxu0 0.0
  %637 = vmatpush1.msra.mxu0 %v218
  %638 = vmatprep.subr.mxu0 0.0
  %639 = vmatpush2.msra.mxu0 %v249
  %640 = vmatprep.subr.mxu0 0.0
  %641 = vmatpush2.msra.mxu0 %v248
  %642 = vmatprep.subr.mxu0 0.0
  %643 = vmatpush2.msra.mxu0 %v247
  %644 = vmatprep.subr.mxu0 0.0
  %645 = vmatpush2.msra.mxu0 %v246
  %646 = vmatprep.subr.mxu0 0.0
  %647 = vmatpush2.msra.mxu0 %v245
  %648 = vmatprep.subr.mxu0 0.0
  %649 = vmatpush2.msra.mxu0 %v244
  %650 = vmatprep.subr.mxu0 0.0
  %651 = vmatpush2.msra.mxu0 %v243
  %652 = vmatprep.subr.mxu0 0.0
  %653 = vmatpush2.msra.mxu0 %v242
  %654 = vmatprep.subr.mxu0 0.0
  %655 = vmatpush2.msra.mxu0 %v241
  %656 = vmatprep.subr.mxu0 0.0
  %657 = vmatpush2.msra.mxu0 %v240
  %658 = vmatprep.subr.mxu0 0.0
  %659 = vmatpush2.msra.mxu0 %v239
  %660 = vmatprep.subr.mxu0 0.0
  %661 = vmatpush2.msra.mxu0 %v238
  %662 = vmatprep.subr.mxu0 0.0
  %663 = vmatpush2.msra.mxu0 %v237
  %664 = vmatprep.subr.mxu0 0.0
  %665 = vmatpush2.msra.mxu0 %v236
  %666 = vmatprep.subr.mxu0 0.0
  %667 = vmatpush2.msra.mxu0 %v235
  %668 = vmatprep.subr.mxu0 0.0
  %669 = vmatpush2.msra.mxu0 %v234
  %670 = vmatprep.mubr.f32.mxu0 %v603
  %671 = vmatmul.mubr.f32.gmra.mxu0 %v602
  %v672 = vpop.f32.mrf.mxu0
  %v673 = vadd.f32 0.0, %v672
  %v674 = vpop.f32.mrf.mxu0
  %675 = vdwg.mxu0
  %676 = vmatprep.subr.mxu0 0.0
  %677 = vmatpush1.msra.mxu0 %v265
  %678 = vmatprep.subr.mxu0 0.0
  %679 = vmatpush1.msra.mxu0 %v264
  %680 = vmatprep.subr.mxu0 0.0
  %681 = vmatpush1.msra.mxu0 %v263
  %682 = vmatprep.subr.mxu0 0.0
  %683 = vmatpush1.msra.mxu0 %v262
  %684 = vmatprep.subr.mxu0 0.0
  %685 = vmatpush1.msra.mxu0 %v261
  %686 = vmatprep.subr.mxu0 0.0
  %687 = vmatpush1.msra.mxu0 %v260
  %688 = vmatprep.subr.mxu0 0.0
  %689 = vmatpush1.msra.mxu0 %v259
  %690 = vmatprep.subr.mxu0 0.0
  %691 = vmatpush1.msra.mxu0 %v258
  %692 = vmatprep.subr.mxu0 0.0
  %693 = vmatpush1.msra.mxu0 %v257
  %694 = vmatprep.subr.mxu0 0.0
  %695 = vmatpush1.msra.mxu0 %v256
  %696 = vmatprep.subr.mxu0 0.0
  %697 = vmatpush1.msra.mxu0 %v255
  %698 = vmatprep.subr.mxu0 0.0
  %699 = vmatpush1.msra.mxu0 %v254
  %700 = vmatprep.subr.mxu0 0.0
  %701 = vmatpush1.msra.mxu0 %v253
  %702 = vmatprep.subr.mxu0 0.0
  %703 = vmatpush1.msra.mxu0 %v252
  %704 = vmatprep.subr.mxu0 0.0
  %705 = vmatpush1.msra.mxu0 %v251
  %706 = vmatprep.subr.mxu0 0.0
  %707 = vmatpush1.msra.mxu0 %v250
  %708 = vmatprep.subr.mxu0 0.0
  %709 = vmatpush2.msra.mxu0 %v281
  %710 = vmatprep.subr.mxu0 0.0
  %711 = vmatpush2.msra.mxu0 %v280
  %712 = vmatprep.subr.mxu0 0.0
  %713 = vmatpush2.msra.mxu0 %v279
  %714 = vmatprep.subr.mxu0 0.0
  %715 = vmatpush2.msra.mxu0 %v278
  %716 = vmatprep.subr.mxu0 0.0
  %717 = vmatpush2.msra.mxu0 %v277
  %718 = vmatprep.subr.mxu0 0.0
  %719 = vmatpush2.msra.mxu0 %v276
  %720 = vmatprep.subr.mxu0 0.0
  %721 = vmatpush2.msra.mxu0 %v275
  %722 = vmatprep.subr.mxu0 0.0
  %723 = vmatpush2.msra.mxu0 %v274
  %724 = vmatprep.subr.mxu0 0.0
  %725 = vmatpush2.msra.mxu0 %v273
  %726 = vmatprep.subr.mxu0 0.0
  %727 = vmatpush2.msra.mxu0 %v272
  %728 = vmatprep.subr.mxu0 0.0
  %729 = vmatpush2.msra.mxu0 %v271
  %730 = vmatprep.subr.mxu0 0.0
  %731 = vmatpush2.msra.mxu0 %v270
  %732 = vmatprep.subr.mxu0 0.0
  %733 = vmatpush2.msra.mxu0 %v269
  %734 = vmatprep.subr.mxu0 0.0
  %735 = vmatpush2.msra.mxu0 %v268
  %736 = vmatprep.subr.mxu0 0.0
  %737 = vmatpush2.msra.mxu0 %v267
  %738 = vmatprep.subr.mxu0 0.0
  %739 = vmatpush2.msra.mxu0 %v266
  %740 = vmatprep.mubr.f32.mxu0 %v605
  %741 = vmatmul.mubr.f32.gmra.mxu0 %v604
  %v742 = vpop.f32.mrf.mxu0
  %v743 = vadd.f32 %v673, %v742
  %v744 = vpop.f32.mrf.mxu0
  %745 = vdwg.mxu0
  %746 = vst [vmem:[%s4] sm:$0xff] %v743
  // Predicated region
  $region14: #{gconv_forward.5} parent=0 // pred_check
    _
  $region15: #{gconv_forward.5} parent=0 // pred_check_branch
    %748 = sbr.rel (0) target = $region17
  $region16: #{gconv_forward.5} parent=0 // pred_region
    _
  $region17: #{gconv_forward.5} parent=0 // pred_fallthru
    _
  // Predicated region
  $region18: #{gconv_forward.5} parent=0 // pred_check
    _
  $region19: #{gconv_forward.5} parent=0 // pred_check_branch
    %750 = sbr.rel (0) target = $region21
  $region20: #{gconv_forward.5} parent=0 // pred_region
    _
  $region21: #{gconv_forward.5} parent=0 // pred_fallthru
    _
  // Predicated region
  $region22: #{gconv_forward.5} parent=0 // pred_check
    _
  $region23: #{gconv_forward.5} parent=0 // pred_check_branch
    %752 = sbr.rel (0) target = $region25
  $region24: #{gconv_forward.5} parent=0 // pred_region
    _
  $region25: #{gconv_forward.5} parent=0 // pred_fallthru
    _
  // Predicated region
  $region26: #{gconv_forward.5} parent=0 // pred_check
    _
  $region27: #{gconv_forward.5} parent=0 // pred_check_branch
    %754 = sbr.rel (0) target = $region29
  $region28: #{gconv_forward.5} parent=0 // pred_region
    _
  $region29: #{gconv_forward.5} parent=0 // pred_fallthru
    _

// kernel: gconv_forward.4
$region0: #{gconv_forward.4}
  #allocation0 [shape = 'u32[]', space=smem, size = 0x4, offset = 0x4, fixed_abs, tag = 'smem constant byte address 0x4 - core index']
  #allocation1 [shape = 'u32[144,128]{1,0:T(1,128)}', space=vmem, size = 0x12000, scoped, tag = 'internal scratch']
  #allocation2 [shape = 'f32[256,128]{1,0:T(8,128)}', space=vmem, size = 0x20000, scoped, tag = 'scratch operand']
  %s0 = inlined_call_operand.vmem [shape: bf16[512,512], index: 0, kind: input, shape index: {}]
  %s1 = inlined_call_operand.vmem [shape: bf16[512,128], index: 1, kind: input, shape index: {}]
  %s2 = inlined_call_operand.vmem [shape: bf16[128,128], index: 2, kind: input, shape index: {}]
  %s3 = inlined_call_operand.vmem [shape: bf16[128,128], index: 3, kind: input, shape index: {}]
  %s4 = inlined_call_operand.vmem [shape: f32[8,128], index: 4, kind: input, shape index: {}]
  %s5 = inlined_call_operand.vmem [shape: bf16[512,128], index: 5, kind: output, shape index: {0}]
  %s6 = inlined_call_operand.vmem [shape: f32[16,128], index: 6, kind: output, shape index: {1}]
  %7 = xla_tuple %s5, %s6
  %s8 = sld [smem:[#allocation0]]
  $region69: #{gconv_forward.4} parent=0
    _
  %s10 = ssub.s32 1, %s8
  %s11 = scalar_select 0, %s10, %s8
  loop: start=0, step=1, limit=4
  $region2: #{gconv_forward.4} parent=0 // loop_pre_header
    _
  $region3: #{gconv_forward.4} parent=0 // loop_header
    %s13 = sphi 0, %s17
    %p14 = scmp.ge.s32.totalorder %s13, 4
    %s20 = sphi 0, %s32
    %s21 = sphi 0, %s28
    %s22 = sphi 0, %s20
    %s23 = sphi 0, %s21
    %s24 = sphi 0, %s22
    %s25 = sphi 0, %s23
    %s37 = sphi 0, %s39
    %s40 = sphi 0, %s37
    %s41 = sphi 0, %s40
    %s57 = sphi 0, %s41
    %s61 = sphi 0, %s61
    %s63 = sphi 0, %s61
    %s64 = sphi 0, %s63
    %s78 = sphi 0, %s64
    %s82 = sphi 0, %s82
    %s84 = sphi 0, %s82
    %s85 = sphi 0, %s84
    %s99 = sphi 0, %s85
    %s103 = sphi 0, %s103
    %s105 = sphi 0, %s103
    %s106 = sphi 0, %s105
    %s120 = sphi 0, %s106
    %s124 = sphi 0, %s124
    %s126 = sphi 0, %s124
    %s127 = sphi 0, %s126
    %s141 = sphi 0, %s127
    %s147 = sphi 0, %s149
    %s150 = sphi 0, %s147
    %s151 = sphi 0, %s150
    %s167 = sphi 0, %s151
    %s173 = sphi 0, %s175
    %s176 = sphi 0, %s173
    %s177 = sphi 0, %s176
    %s193 = sphi 0, %s177
  $region4: #{gconv_forward.4} parent=0 // loop_header_branch
    %16 = sbr.rel (%p14) target = $region8
  $region5: #{gconv_forward.4} parent=0 // loop_body
    %s18 = ssub.s32 %s13, 1
    %s19 = ssub.s32 %s13, 2
    %s26 = sadd.s32 1, %s21
    %p27 = scmp.ge.s32.totalorder %s26, 1
    %s28 = scalar_select %p27, 0, %s26
    %s29 = sadd.s32 1, %s20
    %s30 = scalar_select %p27, %s29, %s20
    %p31 = scmp.ge.s32.totalorder %s30, 2
    %s32 = scalar_select %p31, 0, %s30
    %s33 = ssub.s32 %s20, %s32
    %s34 = ssub.s32 %s21, %s28
    %s35 = sor.u32 %s33, %s34
    %p36 = scmp.eq.s32.totalorder %s35, 0
    %s38 = sadd.s32 %s37, 1
    %s39 = scalar_select %p36, %s37, %s38
    %p42 = pneg %p36
    %p43 = scmp.eq.s32.totalorder %s13, 1
    %p44 = por %p42, %p43
    %p45 = scmp.ne.s32.totalorder %s37, %s40
    %p46 = scmp.eq.s32.totalorder %s13, 0
    %p47 = por %p45, %p46
    %p48 = scmp.ne.s32.totalorder %s37, %s40
    %p49 = scmp.eq.s32.totalorder %s18, 1
    %p50 = por %p48, %p49
    %p51 = scmp.ne.s32.totalorder %s40, %s41
    %p52 = scmp.eq.s32.totalorder %s18, 0
    %p53 = por %p51, %p52
    %p54 = scmp.ne.s32.totalorder %s40, %s41
    %p55 = scmp.eq.s32.totalorder %s19, 1
    %p56 = por %p54, %p55
    %p58 = scmp.ne.s32.totalorder %s41, %s57
    %p59 = scmp.eq.s32.totalorder %s19, 0
    %p60 = por %p58, %p59
    %s62 = sadd.s32 %s61, 1
    %p65 = scmp.eq.s32.totalorder %s13, 1
    %p66 = scmp.ne.s32.totalorder %s61, %s63
    %p67 = scmp.eq.s32.totalorder %s13, 0
    %p68 = por %p66, %p67
    %p69 = scmp.ne.s32.totalorder %s61, %s63
    %p70 = scmp.eq.s32.totalorder %s18, 1
    %p71 = por %p69, %p70
    %p72 = scmp.ne.s32.totalorder %s63, %s64
    %p73 = scmp.eq.s32.totalorder %s18, 0
    %p74 = por %p72, %p73
    %p75 = scmp.ne.s32.totalorder %s63, %s64
    %p76 = scmp.eq.s32.totalorder %s19, 1
    %p77 = por %p75, %p76
    %p79 = scmp.ne.s32.totalorder %s64, %s78
    %p80 = scmp.eq.s32.totalorder %s19, 0
    %p81 = por %p79, %p80
    %s83 = sadd.s32 %s82, 1
    %p86 = scmp.eq.s32.totalorder %s13, 1
    %p87 = scmp.ne.s32.totalorder %s82, %s84
    %p88 = scmp.eq.s32.totalorder %s13, 0
    %p89 = por %p87, %p88
    %p90 = scmp.ne.s32.totalorder %s82, %s84
    %p91 = scmp.eq.s32.totalorder %s18, 1
    %p92 = por %p90, %p91
    %p93 = scmp.ne.s32.totalorder %s84, %s85
    %p94 = scmp.eq.s32.totalorder %s18, 0
    %p95 = por %p93, %p94
    %p96 = scmp.ne.s32.totalorder %s84, %s85
    %p97 = scmp.eq.s32.totalorder %s19, 1
    %p98 = por %p96, %p97
    %p100 = scmp.ne.s32.totalorder %s85, %s99
    %p101 = scmp.eq.s32.totalorder %s19, 0
    %p102 = por %p100, %p101
    %s104 = sadd.s32 %s103, 1
    %p107 = scmp.eq.s32.totalorder %s13, 1
    %p108 = scmp.ne.s32.totalorder %s103, %s105
    %p109 = scmp.eq.s32.totalorder %s13, 0
    %p110 = por %p108, %p109
    %p111 = scmp.ne.s32.totalorder %s103, %s105
    %p112 = scmp.eq.s32.totalorder %s18, 1
    %p113 = por %p111, %p112
    %p114 = scmp.ne.s32.totalorder %s105, %s106
    %p115 = scmp.eq.s32.totalorder %s18, 0
    %p116 = por %p114, %p115
    %p117 = scmp.ne.s32.totalorder %s105, %s106
    %p118 = scmp.eq.s32.totalorder %s19, 1
    %p119 = por %p117, %p118
    %p121 = scmp.ne.s32.totalorder %s106, %s120
    %p122 = scmp.eq.s32.totalorder %s19, 0
    %p123 = por %p121, %p122
    %s125 = sadd.s32 %s124, 1
    %p128 = scmp.eq.s32.totalorder %s13, 1
    %p129 = scmp.ne.s32.totalorder %s124, %s126
    %p130 = scmp.eq.s32.totalorder %s13, 0
    %p131 = por %p129, %p130
    %p132 = scmp.ne.s32.totalorder %s124, %s126
    %p133 = scmp.eq.s32.totalorder %s18, 1
    %p134 = por %p132, %p133
    %p135 = scmp.ne.s32.totalorder %s126, %s127
    %p136 = scmp.eq.s32.totalorder %s18, 0
    %p137 = por %p135, %p136
    %p138 = scmp.ne.s32.totalorder %s126, %s127
    %p139 = scmp.eq.s32.totalorder %s19, 1
    %p140 = por %p138, %p139
    %p142 = scmp.ne.s32.totalorder %s127, %s141
    %p143 = scmp.eq.s32.totalorder %s19, 0
    %p144 = por %p142, %p143
    %s145 = ssub.s32 %s20, %s32
    %p146 = scmp.eq.s32.totalorder %s145, 0
    %s148 = sadd.s32 %s147, 1
    %s149 = scalar_select %p146, %s147, %s148
    %p152 = pneg %p146
    %p153 = scmp.eq.s32.totalorder %s13, 1
    %p154 = por %p152, %p153
    %p155 = scmp.ne.s32.totalorder %s147, %s150
    %p156 = scmp.eq.s32.totalorder %s13, 0
    %p157 = por %p155, %p156
    %p158 = scmp.ne.s32.totalorder %s147, %s150
    %p159 = scmp.eq.s32.totalorder %s18, 1
    %p160 = por %p158, %p159
    %p161 = scmp.ne.s32.totalorder %s150, %s151
    %p162 = scmp.eq.s32.totalorder %s18, 0
    %p163 = por %p161, %p162
    %p164 = scmp.ne.s32.totalorder %s150, %s151
    %p165 = scmp.eq.s32.totalorder %s19, 1
    %p166 = por %p164, %p165
    %p168 = scmp.ne.s32.totalorder %s151, %s167
    %p169 = scmp.eq.s32.totalorder %s19, 0
    %p170 = por %p168, %p169
    %s171 = ssub.s32 %s20, %s32
    %p172 = scmp.eq.s32.totalorder %s171, 0
    %s174 = sadd.s32 %s173, 1
    %s175 = scalar_select %p172, %s173, %s174
    %p178 = pneg %p172
    %p179 = scmp.eq.s32.totalorder %s13, 1
    %p180 = por %p178, %p179
    %p181 = scmp.ne.s32.totalorder %s173, %s176
    %p182 = scmp.eq.s32.totalorder %s13, 0
    %p183 = por %p181, %p182
    %p184 = scmp.ne.s32.totalorder %s173, %s176
    %p185 = scmp.eq.s32.totalorder %s18, 1
    %p186 = por %p184, %p185
    %p187 = scmp.ne.s32.totalorder %s176, %s177
    %p188 = scmp.eq.s32.totalorder %s18, 0
    %p189 = por %p187, %p188
    %p190 = scmp.ne.s32.totalorder %s176, %s177
    %p191 = scmp.eq.s32.totalorder %s19, 1
    %p192 = por %p190, %p191
    %p194 = scmp.ne.s32.totalorder %s177, %s193
    %p195 = scmp.eq.s32.totalorder %s19, 0
    %p196 = por %p194, %p195
    %p197 = scmp.le.s32.totalorder 1, %s13
    %p198 = scmp.lt.s32.totalorder %s13, 3
    %p199 = pnand %p197, %p198
    %p200 = pneg %p199
    // Predicated region
    $region9: #{gconv_forward.4} parent=5 // pred_check
      _
    $region10: #{gconv_forward.4} parent=5 // pred_check_branch
      %202 = sbr.rel (%p199) target = $region12
    $region11: #{gconv_forward.4} parent=5 // pred_region
      %s203 = ssub.s32 %s13, 1
      // Predicated region
      $region13: #{gconv_forward.4} parent=11 // pred_check
        %p204 = pneg %p74
      $region14: #{gconv_forward.4} parent=11 // pred_check_branch
        %206 = sbr.rel (%p204) target = $region16
      $region15: #{gconv_forward.4} parent=11 // pred_region
        _
      $region16: #{gconv_forward.4} parent=11 // pred_fallthru
        _
      // Predicated region
      $region17: #{gconv_forward.4} parent=11 // pred_check
        %p207 = pneg %p95
      $region18: #{gconv_forward.4} parent=11 // pred_check_branch
        %209 = sbr.rel (%p207) target = $region20
      $region19: #{gconv_forward.4} parent=11 // pred_region
        _
      $region20: #{gconv_forward.4} parent=11 // pred_fallthru
        _
      // Predicated region
      $region21: #{gconv_forward.4} parent=11 // pred_check
        %p210 = pneg %p116
      $region22: #{gconv_forward.4} parent=11 // pred_check_branch
        %212 = sbr.rel (%p210) target = $region24
      $region23: #{gconv_forward.4} parent=11 // pred_region
        _
      $region24: #{gconv_forward.4} parent=11 // pred_fallthru
        _
      // Predicated region
      $region25: #{gconv_forward.4} parent=11 // pred_check
        %p213 = pneg %p137
      $region26: #{gconv_forward.4} parent=11 // pred_check_branch
        %215 = sbr.rel (%p213) target = $region28
      $region27: #{gconv_forward.4} parent=11 // pred_region
        _
      $region28: #{gconv_forward.4} parent=11 // pred_fallthru
        _
    $region12: #{gconv_forward.4} parent=5 // pred_fallthru
      _
    %p216 = scmp.lt.s32.totalorder %s13, 2
    // Predicated region
    $region29: #{gconv_forward.4} parent=5 // pred_check
      %p217 = pneg %p216
    $region30: #{gconv_forward.4} parent=5 // pred_check_branch
      %219 = sbr.rel (%p217) target = $region32
    $region31: #{gconv_forward.4} parent=5 // pred_region
      // Predicated region
      $region33: #{gconv_forward.4} parent=31 // pred_check
        %p220 = pneg %p47
      $region34: #{gconv_forward.4} parent=31 // pred_check_branch
        %222 = sbr.rel (%p220) target = $region36
      $region35: #{gconv_forward.4} parent=31 // pred_region
        %s223 = smul.u32 32, %s20
        %s224 = smul.u32 4, %s21
        %p225 = scmp.lt.s32.totalorder %s223, 63
        %s226 = scalar_select %p225, %s223, 63
        %p227 = scmp.lt.s32.totalorder %s224, 3
        %s228 = scalar_select %p227, %s224, 3
        %s229 = smul.addr %s226, 4
        %s230 = sadd.s32 %s228, %s229
        %s231 = smul.addr %s230, 4
        %s232 = scalar_lea.vmem %s0, %s231
        %s233 = smul.u32 32, %s20
        %s234 = smul.u32 4, %s21
      $region36: #{gconv_forward.4} parent=31 // pred_fallthru
        _
    $region32: #{gconv_forward.4} parent=5 // pred_fallthru
      _
    %p235 = scmp.le.s32.totalorder 1, %s13
    %p236 = scmp.lt.s32.totalorder %s13, 3
    %p237 = pnand %p235, %p236
    %p238 = pneg %p237
    // Predicated region
    $region37: #{gconv_forward.4} parent=5 // pred_check
      _
    $region38: #{gconv_forward.4} parent=5 // pred_check_branch
      %240 = sbr.rel (%p237) target = $region40
    $region39: #{gconv_forward.4} parent=5 // pred_region
      %s241 = ssub.s32 %s13, 1
      %s242 = smul.u32 32, %s22
      %s243 = smul.u32 4, %s23
      %p244 = scmp.lt.s32.totalorder %s242, 63
      %s245 = scalar_select %p244, %s242, 63
      %p246 = scmp.lt.s32.totalorder %s243, 3
      %s247 = scalar_select %p246, %s243, 3
      %s248 = smul.addr %s245, 4
      %s249 = sadd.s32 %s247, %s248
      %s250 = smul.addr %s249, 4
      %s251 = scalar_lea.vmem %s0, %s250
      %p252 = pneg %p53
      %p253 = pneg %p50
      %p254 = pneg %p74
      %p255 = pneg %p71
      %p256 = pneg %p95
      %p257 = pneg %p92
      %p258 = pneg %p116
      %p259 = pneg %p113
      %p260 = pneg %p137
      %p261 = pneg %p134
      %p262 = pneg %p163
      %p263 = pneg %p160
      %s264 = smul.u32 32, %s22
      %p265 = scmp.lt.s32.totalorder %s264, 63
      %s266 = scalar_select %p265, %s264, 63
      %s267 = smul.addr %s266, 4
      %s268 = scalar_lea.vmem %s5, %s267
      %p269 = pneg %p189
      %p270 = pneg %p186
      %p271 = scmp.lt.s32.totalorder %s22, 1
      %s272 = scalar_select %p271, %s22, 1
      %s273 = smul.addr %s272, 8
      %s274 = scalar_lea.vmem %s6, %s273
      %s275 = smul.u32 32, %s22
      %s276 = smul.u32 4, %s23
      %p277 = scmp.lt.s32.totalorder %s275, 63
      %s278 = scalar_select %p277, %s275, 63
      %p279 = scmp.lt.s32.totalorder %s276, 3
      %s280 = scalar_select %p279, %s276, 3
      %s281 = smul.addr %s278, 4
      %s282 = sadd.s32 %s280, %s281
      %s283 = smul.addr %s282, 4
      %s284 = scalar_lea.vmem %s0, %s283
      %s285 = smul.u32 32, %s22
      %s286 = smul.u32 4, %s23
      %s287 = smul.u32 32, %s22
      %p288 = scmp.lt.s32.totalorder %s287, 63
      %s289 = scalar_select %p288, %s287, 63
      %s290 = smul.addr %s289, 4
      %s291 = scalar_lea.vmem %s5, %s290
      %s292 = smul.u32 32, %s22
      %p293 = scmp.lt.s32.totalorder %s22, 1
      %s294 = scalar_select %p293, %s22, 1
      %s295 = smul.addr %s294, 8
      %s296 = scalar_lea.vmem %s6, %s295
      %p298 = scmp.eq.s32.totalorder %s23, 0
      // Predicated region
      $region41: #{gconv_forward.4} parent=39 // pred_check
        %p299 = pneg %p298
      $region42: #{gconv_forward.4} parent=39 // pred_check_branch
        %301 = sbr.rel (%p299) target = $region44
      $region43: #{gconv_forward.4} parent=39 // pred_region
        %302 = vst [vmem:[#allocation2] sm:$0xff] 0.0
        %303 = vst [vmem:[#allocation2 + $0x8] sm:$0xff] 0.0
        %304 = vst [vmem:[#allocation2 + $0x10] sm:$0xff] 0.0
        %305 = vst [vmem:[#allocation2 + $0x18] sm:$0xff] 0.0
        %306 = vst [vmem:[#allocation2 + $0x20] sm:$0xff] 0.0
        %307 = vst [vmem:[#allocation2 + $0x28] sm:$0xff] 0.0
        %308 = vst [vmem:[#allocation2 + $0x30] sm:$0xff] 0.0
        %309 = vst [vmem:[#allocation2 + $0x38] sm:$0xff] 0.0
        %310 = vst [vmem:[#allocation2 + $0x40] sm:$0xff] 0.0
        %311 = vst [vmem:[#allocation2 + $0x48] sm:$0xff] 0.0
        %312 = vst [vmem:[#allocation2 + $0x50] sm:$0xff] 0.0
        %313 = vst [vmem:[#allocation2 + $0x58] sm:$0xff] 0.0
        %314 = vst [vmem:[#allocation2 + $0x60] sm:$0xff] 0.0
        %315 = vst [vmem:[#allocation2 + $0x68] sm:$0xff] 0.0
        %316 = vst [vmem:[#allocation2 + $0x70] sm:$0xff] 0.0
        %317 = vst [vmem:[#allocation2 + $0x78] sm:$0xff] 0.0
        %318 = vst [vmem:[#allocation2 + $0x80] sm:$0xff] 0.0
        %319 = vst [vmem:[#allocation2 + $0x88] sm:$0xff] 0.0
        %320 = vst [vmem:[#allocation2 + $0x90] sm:$0xff] 0.0
        %321 = vst [vmem:[#allocation2 + $0x98] sm:$0xff] 0.0
        %322 = vst [vmem:[#allocation2 + $0xa0] sm:$0xff] 0.0
        %323 = vst [vmem:[#allocation2 + $0xa8] sm:$0xff] 0.0
        %324 = vst [vmem:[#allocation2 + $0xb0] sm:$0xff] 0.0
        %325 = vst [vmem:[#allocation2 + $0xb8] sm:$0xff] 0.0
        %326 = vst [vmem:[#allocation2 + $0xc0] sm:$0xff] 0.0
        %327 = vst [vmem:[#allocation2 + $0xc8] sm:$0xff] 0.0
        %328 = vst [vmem:[#allocation2 + $0xd0] sm:$0xff] 0.0
        %329 = vst [vmem:[#allocation2 + $0xd8] sm:$0xff] 0.0
        %330 = vst [vmem:[#allocation2 + $0xe0] sm:$0xff] 0.0
        %331 = vst [vmem:[#allocation2 + $0xe8] sm:$0xff] 0.0
        %332 = vst [vmem:[#allocation2 + $0xf0] sm:$0xff] 0.0
        %333 = vst [vmem:[#allocation2 + $0xf8] sm:$0xff] 0.0
      $region44: #{gconv_forward.4} parent=39 // pred_fallthru
        _
      %s334 = smul.u32 %s23, 512
      %v335 = vld [vmem:[#allocation2] sm:$0xff]
      %v336 = vld [vmem:[#allocation2 + $0x8] sm:$0xff]
      %v337 = vld [vmem:[#allocation2 + $0x10] sm:$0xff]
      %v338 = vld [vmem:[#allocation2 + $0x18] sm:$0xff]
      %v339 = vld [vmem:[#allocation2 + $0x20] sm:$0xff]
      %v340 = vld [vmem:[#allocation2 + $0x28] sm:$0xff]
      %v341 = vld [vmem:[#allocation2 + $0x30] sm:$0xff]
      %v342 = vld [vmem:[#allocation2 + $0x38] sm:$0xff]
      %v343 = vld [vmem:[#allocation2 + $0x40] sm:$0xff]
      %v344 = vld [vmem:[#allocation2 + $0x48] sm:$0xff]
      %v345 = vld [vmem:[#allocation2 + $0x50] sm:$0xff]
      %v346 = vld [vmem:[#allocation2 + $0x58] sm:$0xff]
      %v347 = vld [vmem:[#allocation2 + $0x60] sm:$0xff]
      %v348 = vld [vmem:[#allocation2 + $0x68] sm:$0xff]
      %v349 = vld [vmem:[#allocation2 + $0x70] sm:$0xff]
      %v350 = vld [vmem:[#allocation2 + $0x78] sm:$0xff]
      %v351 = vld [vmem:[#allocation2 + $0x80] sm:$0xff]
      %v352 = vld [vmem:[#allocation2 + $0x88] sm:$0xff]
      %v353 = vld [vmem:[#allocation2 + $0x90] sm:$0xff]
      %v354 = vld [vmem:[#allocation2 + $0x98] sm:$0xff]
      %v355 = vld [vmem:[#allocation2 + $0xa0] sm:$0xff]
      %v356 = vld [vmem:[#allocation2 + $0xa8] sm:$0xff]
      %v357 = vld [vmem:[#allocation2 + $0xb0] sm:$0xff]
      %v358 = vld [vmem:[#allocation2 + $0xb8] sm:$0xff]
      %v359 = vld [vmem:[#allocation2 + $0xc0] sm:$0xff]
      %v360 = vld [vmem:[#allocation2 + $0xc8] sm:$0xff]
      %v361 = vld [vmem:[#allocation2 + $0xd0] sm:$0xff]
      %v362 = vld [vmem:[#allocation2 + $0xd8] sm:$0xff]
      %v363 = vld [vmem:[#allocation2 + $0xe0] sm:$0xff]
      %v364 = vld [vmem:[#allocation2 + $0xe8] sm:$0xff]
      %v365 = vld [vmem:[#allocation2 + $0xf0] sm:$0xff]
      %v366 = vld [vmem:[#allocation2 + $0xf8] sm:$0xff]
      %v367 = vld [vmem:[%s284] sm:$0xff]
      %v368 = vld [vmem:[%s284 + $0x8] sm:$0xff]
      %v369 = vld [vmem:[%s284 + $0x10] sm:$0xff]
      %v370 = vld [vmem:[%s284 + $0x18] sm:$0xff]
      %v371 = vld [vmem:[%s284 + $0x20] sm:$0xff]
      %v372 = vld [vmem:[%s284 + $0x28] sm:$0xff]
      %v373 = vld [vmem:[%s284 + $0x30] sm:$0xff]
      %v374 = vld [vmem:[%s284 + $0x38] sm:$0xff]
      %v375 = vld [vmem:[%s284 + $0x40] sm:$0xff]
      %v376 = vld [vmem:[%s284 + $0x48] sm:$0xff]
      %v377 = vld [vmem:[%s284 + $0x50] sm:$0xff]
      %v378 = vld [vmem:[%s284 + $0x58] sm:$0xff]
      %v379 = vld [vmem:[%s284 + $0x60] sm:$0xff]
      %v380 = vld [vmem:[%s284 + $0x68] sm:$0xff]
      %v381 = vld [vmem:[%s284 + $0x70] sm:$0xff]
      %v382 = vld [vmem:[%s284 + $0x78] sm:$0xff]
      %v383 = vld [vmem:[%s284 + $0x80] sm:$0xff]
      %v384 = vld [vmem:[%s284 + $0x88] sm:$0xff]
      %v385 = vld [vmem:[%s284 + $0x90] sm:$0xff]
      %v386 = vld [vmem:[%s284 + $0x98] sm:$0xff]
      %v387 = vld [vmem:[%s284 + $0xa0] sm:$0xff]
      %v388 = vld [vmem:[%s284 + $0xa8] sm:$0xff]
      %v389 = vld [vmem:[%s284 + $0xb0] sm:$0xff]
      %v390 = vld [vmem:[%s284 + $0xb8] sm:$0xff]
      %v391 = vld [vmem:[%s284 + $0xc0] sm:$0xff]
      %v392 = vld [vmem:[%s284 + $0xc8] sm:$0xff]
      %v393 = vld [vmem:[%s284 + $0xd0] sm:$0xff]
      %v394 = vld [vmem:[%s284 + $0xd8] sm:$0xff]
      %v395 = vld [vmem:[%s284 + $0xe0] sm:$0xff]
      %v396 = vld [vmem:[%s284 + $0xe8] sm:$0xff]
      %v397 = vld [vmem:[%s284 + $0xf0] sm:$0xff]
      %v398 = vld [vmem:[%s284 + $0xf8] sm:$0xff]
      %v399 = vld [vmem:[%s284 + $0x100] sm:$0xff]
      %v400 = vld [vmem:[%s284 + $0x108] sm:$0xff]
      %v401 = vld [vmem:[%s284 + $0x110] sm:$0xff]
      %v402 = vld [vmem:[%s284 + $0x118] sm:$0xff]
      %v403 = vld [vmem:[%s284 + $0x120] sm:$0xff]
      %v404 = vld [vmem:[%s284 + $0x128] sm:$0xff]
      %v405 = vld [vmem:[%s284 + $0x130] sm:$0xff]
      %v406 = vld [vmem:[%s284 + $0x138] sm:$0xff]
      %v407 = vld [vmem:[%s284 + $0x140] sm:$0xff]
      %v408 = vld [vmem:[%s284 + $0x148] sm:$0xff]
      %v409 = vld [vmem:[%s284 + $0x150] sm:$0xff]
      %v410 = vld [vmem:[%s284 + $0x158] sm:$0xff]
      %v411 = vld [vmem:[%s284 + $0x160] sm:$0xff]
      %v412 = vld [vmem:[%s284 + $0x168] sm:$0xff]
      %v413 = vld [vmem:[%s284 + $0x170] sm:$0xff]
      %v414 = vld [vmem:[%s284 + $0x178] sm:$0xff]
      %v415 = vld [vmem:[%s284 + $0x180] sm:$0xff]
      %v416 = vld [vmem:[%s284 + $0x188] sm:$0xff]
      %v417 = vld [vmem:[%s284 + $0x190] sm:$0xff]
      %v418 = vld [vmem:[%s284 + $0x198] sm:$0xff]
      %v419 = vld [vmem:[%s284 + $0x1a0] sm:$0xff]
      %v420 = vld [vmem:[%s284 + $0x1a8] sm:$0xff]
      %v421 = vld [vmem:[%s284 + $0x1b0] sm:$0xff]
      %v422 = vld [vmem:[%s284 + $0x1b8] sm:$0xff]
      %v423 = vld [vmem:[%s284 + $0x1c0] sm:$0xff]
      %v424 = vld [vmem:[%s284 + $0x1c8] sm:$0xff]
      %v425 = vld [vmem:[%s284 + $0x1d0] sm:$0xff]
      %v426 = vld [vmem:[%s284 + $0x1d8] sm:$0xff]
      %v427 = vld [vmem:[%s284 + $0x1e0] sm:$0xff]
      %v428 = vld [vmem:[%s284 + $0x1e8] sm:$0xff]
      %v429 = vld [vmem:[%s284 + $0x1f0] sm:$0xff]
      %v430 = vld [vmem:[%s284 + $0x1f8] sm:$0xff]
      %s431 = sshra.s32 %s334, 3
      %s432 = sand.u32 %s334, 7
      %s433 = smul.addr %s431, 4
      %s434 = scalar_lea.vmem %s1, %s433
      %v435 = vld [vmem:[%s434] sm:$0xf]
      %v436 = vld [vmem:[%s434 + $0x4] sm:$0xf]
      %v437 = vld [vmem:[%s434 + $0x8] sm:$0xf]
      %v438 = vld [vmem:[%s434 + $0xc] sm:$0xf]
      %v439 = vld [vmem:[%s434 + $0x10] sm:$0xf]
      %v440 = vld [vmem:[%s434 + $0x14] sm:$0xf]
      %v441 = vld [vmem:[%s434 + $0x18] sm:$0xf]
      %v442 = vld [vmem:[%s434 + $0x1c] sm:$0xf]
      %v443 = vld [vmem:[%s434 + $0x20] sm:$0xf]
      %v444 = vld [vmem:[%s434 + $0x24] sm:$0xf]
      %v445 = vld [vmem:[%s434 + $0x28] sm:$0xf]
      %v446 = vld [vmem:[%s434 + $0x2c] sm:$0xf]
      %v447 = vld [vmem:[%s434 + $0x30] sm:$0xf]
      %v448 = vld [vmem:[%s434 + $0x34] sm:$0xf]
      %v449 = vld [vmem:[%s434 + $0x38] sm:$0xf]
      %v450 = vld [vmem:[%s434 + $0x3c] sm:$0xf]
      %v451 = vld [vmem:[%s434 + $0x40] sm:$0xf]
      %v452 = vld [vmem:[%s434 + $0x44] sm:$0xf]
      %v453 = vld [vmem:[%s434 + $0x48] sm:$0xf]
      %v454 = vld [vmem:[%s434 + $0x4c] sm:$0xf]
      %v455 = vld [vmem:[%s434 + $0x50] sm:$0xf]
      %v456 = vld [vmem:[%s434 + $0x54] sm:$0xf]
      %v457 = vld [vmem:[%s434 + $0x58] sm:$0xf]
      %v458 = vld [vmem:[%s434 + $0x5c] sm:$0xf]
      %v459 = vld [vmem:[%s434 + $0x60] sm:$0xf]
      %v460 = vld [vmem:[%s434 + $0x64] sm:$0xf]
      %v461 = vld [vmem:[%s434 + $0x68] sm:$0xf]
      %v462 = vld [vmem:[%s434 + $0x6c] sm:$0xf]
      %v463 = vld [vmem:[%s434 + $0x70] sm:$0xf]
      %v464 = vld [vmem:[%s434 + $0x74] sm:$0xf]
      %v465 = vld [vmem:[%s434 + $0x78] sm:$0xf]
      %v466 = vld [vmem:[%s434 + $0x7c] sm:$0xf]
      %v467 = vld [vmem:[%s434 + $0x80] sm:$0xf]
      %v468 = vld [vmem:[%s434 + $0x84] sm:$0xf]
      %v469 = vld [vmem:[%s434 + $0x88] sm:$0xf]
      %v470 = vld [vmem:[%s434 + $0x8c] sm:$0xf]
      %v471 = vld [vmem:[%s434 + $0x90] sm:$0xf]
      %v472 = vld [vmem:[%s434 + $0x94] sm:$0xf]
      %v473 = vld [vmem:[%s434 + $0x98] sm:$0xf]
      %v474 = vld [vmem:[%s434 + $0x9c] sm:$0xf]
      %v475 = vld [vmem:[%s434 + $0xa0] sm:$0xf]
      %v476 = vld [vmem:[%s434 + $0xa4] sm:$0xf]
      %v477 = vld [vmem:[%s434 + $0xa8] sm:$0xf]
      %v478 = vld [vmem:[%s434 + $0xac] sm:$0xf]
      %v479 = vld [vmem:[%s434 + $0xb0] sm:$0xf]
      %v480 = vld [vmem:[%s434 + $0xb4] sm:$0xf]
      %v481 = vld [vmem:[%s434 + $0xb8] sm:$0xf]
      %v482 = vld [vmem:[%s434 + $0xbc] sm:$0xf]
      %v483 = vld [vmem:[%s434 + $0xc0] sm:$0xf]
      %v484 = vld [vmem:[%s434 + $0xc4] sm:$0xf]
      %v485 = vld [vmem:[%s434 + $0xc8] sm:$0xf]
      %v486 = vld [vmem:[%s434 + $0xcc] sm:$0xf]
      %v487 = vld [vmem:[%s434 + $0xd0] sm:$0xf]
      %v488 = vld [vmem:[%s434 + $0xd4] sm:$0xf]
      %v489 = vld [vmem:[%s434 + $0xd8] sm:$0xf]
      %v490 = vld [vmem:[%s434 + $0xdc] sm:$0xf]
      %v491 = vld [vmem:[%s434 + $0xe0] sm:$0xf]
      %v492 = vld [vmem:[%s434 + $0xe4] sm:$0xf]
      %v493 = vld [vmem:[%s434 + $0xe8] sm:$0xf]
      %v494 = vld [vmem:[%s434 + $0xec] sm:$0xf]
      %v495 = vld [vmem:[%s434 + $0xf0] sm:$0xf]
      %v496 = vld [vmem:[%s434 + $0xf4] sm:$0xf]
      %v497 = vld [vmem:[%s434 + $0xf8] sm:$0xf]
      %v498 = vld [vmem:[%s434 + $0xfc] sm:$0xf]
      %v563 = vunpack.c.l.b16 %v367
      %v564 = vunpack.c.h.b16 %v367
      %v565 = vunpack.c.l.b16 %v368
      %v566 = vunpack.c.h.b16 %v368
      %v567 = vunpack.c.l.b16 %v369
      %v568 = vunpack.c.h.b16 %v369
      %v569 = vunpack.c.l.b16 %v370
      %v570 = vunpack.c.h.b16 %v370
      %v571 = vunpack.c.l.b16 %v371
      %v572 = vunpack.c.h.b16 %v371
      %v573 = vunpack.c.l.b16 %v372
      %v574 = vunpack.c.h.b16 %v372
      %v575 = vunpack.c.l.b16 %v373
      %v576 = vunpack.c.h.b16 %v373
      %v577 = vunpack.c.l.b16 %v374
      %v578 = vunpack.c.h.b16 %v374
      %v579 = vunpack.c.l.b16 %v375
      %v580 = vunpack.c.h.b16 %v375
      %v581 = vunpack.c.l.b16 %v376
      %v582 = vunpack.c.h.b16 %v376
      %v583 = vunpack.c.l.b16 %v377
      %v584 = vunpack.c.h.b16 %v377
      %v585 = vunpack.c.l.b16 %v378
      %v586 = vunpack.c.h.b16 %v378
      %v587 = vunpack.c.l.b16 %v379
      %v588 = vunpack.c.h.b16 %v379
      %v589 = vunpack.c.l.b16 %v380
      %v590 = vunpack.c.h.b16 %v380
      %v591 = vunpack.c.l.b16 %v381
      %v592 = vunpack.c.h.b16 %v381
      %v593 = vunpack.c.l.b16 %v382
      %v594 = vunpack.c.h.b16 %v382
      %v595 = vunpack.c.l.b16 %v383
      %v596 = vunpack.c.h.b16 %v383
      %v597 = vunpack.c.l.b16 %v384
      %v598 = vunpack.c.h.b16 %v384
      %v599 = vunpack.c.l.b16 %v385
      %v600 = vunpack.c.h.b16 %v385
      %v601 = vunpack.c.l.b16 %v386
      %v602 = vunpack.c.h.b16 %v386
      %v603 = vunpack.c.l.b16 %v387
      %v604 = vunpack.c.h.b16 %v387
      %v605 = vunpack.c.l.b16 %v388
      %v606 = vunpack.c.h.b16 %v388
      %v607 = vunpack.c.l.b16 %v389
      %v608 = vunpack.c.h.b16 %v389
      %v609 = vunpack.c.l.b16 %v390
      %v610 = vunpack.c.h.b16 %v390
      %v611 = vunpack.c.l.b16 %v391
      %v612 = vunpack.c.h.b16 %v391
      %v613 = vunpack.c.l.b16 %v392
      %v614 = vunpack.c.h.b16 %v392
      %v615 = vunpack.c.l.b16 %v393
      %v616 = vunpack.c.h.b16 %v393
      %v617 = vunpack.c.l.b16 %v394
      %v618 = vunpack.c.h.b16 %v394
      %v619 = vunpack.c.l.b16 %v395
      %v620 = vunpack.c.h.b16 %v395
      %v621 = vunpack.c.l.b16 %v396
      %v622 = vunpack.c.h.b16 %v396
      %v623 = vunpack.c.l.b16 %v397
      %v624 = vunpack.c.h.b16 %v397
      %v625 = vunpack.c.l.b16 %v398
      %v626 = vunpack.c.h.b16 %v398
      %v627 = vunpack.c.l.b16 %v399
      %v628 = vunpack.c.h.b16 %v399
      %v629 = vunpack.c.l.b16 %v400
      %v630 = vunpack.c.h.b16 %v400
      %v631 = vunpack.c.l.b16 %v401
      %v632 = vunpack.c.h.b16 %v401
      %v633 = vunpack.c.l.b16 %v402
      %v634 = vunpack.c.h.b16 %v402
      %v635 = vunpack.c.l.b16 %v403
      %v636 = vunpack.c.h.b16 %v403
      %v637 = vunpack.c.l.b16 %v404
      %v638 = vunpack.c.h.b16 %v404
      %v639 = vunpack.c.l.b16 %v405
      %v640 = vunpack.c.h.b16 %v405
      %v641 = vunpack.c.l.b16 %v406
      %v642 = vunpack.c.h.b16 %v406
      %v643 = vunpack.c.l.b16 %v407
      %v644 = vunpack.c.h.b16 %v407
      %v645 = vunpack.c.l.b16 %v408
      %v646 = vunpack.c.h.b16 %v408
      %v647 = vunpack.c.l.b16 %v409
      %v648 = vunpack.c.h.b16 %v409
      %v649 = vunpack.c.l.b16 %v410
      %v650 = vunpack.c.h.b16 %v410
      %v651 = vunpack.c.l.b16 %v411
      %v652 = vunpack.c.h.b16 %v411
      %v653 = vunpack.c.l.b16 %v412
      %v654 = vunpack.c.h.b16 %v412
      %v655 = vunpack.c.l.b16 %v413
      %v656 = vunpack.c.h.b16 %v413
      %v657 = vunpack.c.l.b16 %v414
      %v658 = vunpack.c.h.b16 %v414
      %v659 = vunpack.c.l.b16 %v415
      %v660 = vunpack.c.h.b16 %v415
      %v661 = vunpack.c.l.b16 %v416
      %v662 = vunpack.c.h.b16 %v416
      %v663 = vunpack.c.l.b16 %v417
      %v664 = vunpack.c.h.b16 %v417
      %v665 = vunpack.c.l.b16 %v418
      %v666 = vunpack.c.h.b16 %v418
      %v667 = vunpack.c.l.b16 %v419
      %v668 = vunpack.c.h.b16 %v419
      %v669 = vunpack.c.l.b16 %v420
      %v670 = vunpack.c.h.b16 %v420
      %v671 = vunpack.c.l.b16 %v421
      %v672 = vunpack.c.h.b16 %v421
      %v673 = vunpack.c.l.b16 %v422
      %v674 = vunpack.c.h.b16 %v422
      %v675 = vunpack.c.l.b16 %v423
      %v676 = vunpack.c.h.b16 %v423
      %v677 = vunpack.c.l.b16 %v424
      %v678 = vunpack.c.h.b16 %v424
      %v679 = vunpack.c.l.b16 %v425
      %v680 = vunpack.c.h.b16 %v425
      %v681 = vunpack.c.l.b16 %v426
      %v682 = vunpack.c.h.b16 %v426
      %v683 = vunpack.c.l.b16 %v427
      %v684 = vunpack.c.h.b16 %v427
      %v685 = vunpack.c.l.b16 %v428
      %v686 = vunpack.c.h.b16 %v428
      %v687 = vunpack.c.l.b16 %v429
      %v688 = vunpack.c.h.b16 %v429
      %v689 = vunpack.c.l.b16 %v430
      %v690 = vunpack.c.h.b16 %v430
      %v691 = vpack.c.b16 %v567, %v563
      %v692 = vpack.c.b16 %v568, %v564
      %v693 = vpack.c.b16 %v569, %v565
      %v694 = vpack.c.b16 %v570, %v566
      %v695 = vpack.c.b16 %v575, %v571
      %v696 = vpack.c.b16 %v576, %v572
      %v697 = vpack.c.b16 %v577, %v573
      %v698 = vpack.c.b16 %v578, %v574
      %v699 = vpack.c.b16 %v583, %v579
      %v700 = vpack.c.b16 %v584, %v580
      %v701 = vpack.c.b16 %v585, %v581
      %v702 = vpack.c.b16 %v586, %v582
      %v703 = vpack.c.b16 %v591, %v587
      %v704 = vpack.c.b16 %v592, %v588
      %v705 = vpack.c.b16 %v593, %v589
      %v706 = vpack.c.b16 %v594, %v590
      %v707 = vpack.c.b16 %v599, %v595
      %v708 = vpack.c.b16 %v600, %v596
      %v709 = vpack.c.b16 %v601, %v597
      %v710 = vpack.c.b16 %v602, %v598
      %v711 = vpack.c.b16 %v607, %v603
      %v712 = vpack.c.b16 %v608, %v604
      %v713 = vpack.c.b16 %v609, %v605
      %v714 = vpack.c.b16 %v610, %v606
      %v715 = vpack.c.b16 %v615, %v611
      %v716 = vpack.c.b16 %v616, %v612
      %v717 = vpack.c.b16 %v617, %v613
      %v718 = vpack.c.b16 %v618, %v614
      %v719 = vpack.c.b16 %v623, %v619
      %v720 = vpack.c.b16 %v624, %v620
      %v721 = vpack.c.b16 %v625, %v621
      %v722 = vpack.c.b16 %v626, %v622
      %v723 = vpack.c.b16 %v631, %v627
      %v724 = vpack.c.b16 %v632, %v628
      %v725 = vpack.c.b16 %v633, %v629
      %v726 = vpack.c.b16 %v634, %v630
      %v727 = vpack.c.b16 %v639, %v635
      %v728 = vpack.c.b16 %v640, %v636
      %v729 = vpack.c.b16 %v641, %v637
      %v730 = vpack.c.b16 %v642, %v638
      %v731 = vpack.c.b16 %v647, %v643
      %v732 = vpack.c.b16 %v648, %v644
      %v733 = vpack.c.b16 %v649, %v645
      %v734 = vpack.c.b16 %v650, %v646
      %v735 = vpack.c.b16 %v655, %v651
      %v736 = vpack.c.b16 %v656, %v652
      %v737 = vpack.c.b16 %v657, %v653
      %v738 = vpack.c.b16 %v658, %v654
      %v739 = vpack.c.b16 %v663, %v659
      %v740 = vpack.c.b16 %v664, %v660
      %v741 = vpack.c.b16 %v665, %v661
      %v742 = vpack.c.b16 %v666, %v662
      %v743 = vpack.c.b16 %v671, %v667
      %v744 = vpack.c.b16 %v672, %v668
      %v745 = vpack.c.b16 %v673, %v669
      %v746 = vpack.c.b16 %v674, %v670
      %v747 = vpack.c.b16 %v679, %v675
      %v748 = vpack.c.b16 %v680, %v676
      %v749 = vpack.c.b16 %v681, %v677
      %v750 = vpack.c.b16 %v682, %v678
      %v751 = vpack.c.b16 %v687, %v683
      %v752 = vpack.c.b16 %v688, %v684
      %v753 = vpack.c.b16 %v689, %v685
      %v754 = vpack.c.b16 %v690, %v686
      %v883 = vunpack.c.l.b16 %v435
      %v884 = vunpack.c.l.b16 %v436
      %v885 = vunpack.c.l.b16 %v437
      %v886 = vunpack.c.l.b16 %v438
      %v887 = vunpack.c.l.b16 %v439
      %v888 = vunpack.c.l.b16 %v440
      %v889 = vunpack.c.l.b16 %v441
      %v890 = vunpack.c.l.b16 %v442
      %v891 = vunpack.c.l.b16 %v443
      %v892 = vunpack.c.l.b16 %v444
      %v893 = vunpack.c.l.b16 %v445
      %v894 = vunpack.c.l.b16 %v446
      %v895 = vunpack.c.l.b16 %v447
      %v896 = vunpack.c.l.b16 %v448
      %v897 = vunpack.c.l.b16 %v449
      %v898 = vunpack.c.l.b16 %v450
      %v899 = vunpack.c.l.b16 %v451
      %v900 = vunpack.c.l.b16 %v452
      %v901 = vunpack.c.l.b16 %v453
      %v902 = vunpack.c.l.b16 %v454
      %v903 = vunpack.c.l.b16 %v455
      %v904 = vunpack.c.l.b16 %v456
      %v905 = vunpack.c.l.b16 %v457
      %v906 = vunpack.c.l.b16 %v458
      %v907 = vunpack.c.l.b16 %v459
      %v908 = vunpack.c.l.b16 %v460
      %v909 = vunpack.c.l.b16 %v461
      %v910 = vunpack.c.l.b16 %v462
      %v911 = vunpack.c.l.b16 %v463
      %v912 = vunpack.c.l.b16 %v464
      %v913 = vunpack.c.l.b16 %v465
      %v914 = vunpack.c.l.b16 %v466
      %v915 = vunpack.c.l.b16 %v467
      %v916 = vunpack.c.l.b16 %v468
      %v917 = vunpack.c.l.b16 %v469
      %v918 = vunpack.c.l.b16 %v470
      %v919 = vunpack.c.l.b16 %v471
      %v920 = vunpack.c.l.b16 %v472
      %v921 = vunpack.c.l.b16 %v473
      %v922 = vunpack.c.l.b16 %v474
      %v923 = vunpack.c.l.b16 %v475
      %v924 = vunpack.c.l.b16 %v476
      %v925 = vunpack.c.l.b16 %v477
      %v926 = vunpack.c.l.b16 %v478
      %v927 = vunpack.c.l.b16 %v479
      %v928 = vunpack.c.l.b16 %v480
      %v929 = vunpack.c.l.b16 %v481
      %v930 = vunpack.c.l.b16 %v482
      %v931 = vunpack.c.l.b16 %v483
      %v932 = vunpack.c.l.b16 %v484
      %v933 = vunpack.c.l.b16 %v485
      %v934 = vunpack.c.l.b16 %v486
      %v935 = vunpack.c.l.b16 %v487
      %v936 = vunpack.c.l.b16 %v488
      %v937 = vunpack.c.l.b16 %v489
      %v938 = vunpack.c.l.b16 %v490
      %v939 = vunpack.c.l.b16 %v491
      %v940 = vunpack.c.l.b16 %v492
      %v941 = vunpack.c.l.b16 %v493
      %v942 = vunpack.c.l.b16 %v494
      %v943 = vunpack.c.l.b16 %v495
      %v944 = vunpack.c.l.b16 %v496
      %v945 = vunpack.c.l.b16 %v497
      %v946 = vunpack.c.l.b16 %v498
      %v947 = vpack.c.b16 %v884, %v883
      %v948 = vpack.c.b16 %v886, %v885
      %v949 = vpack.c.b16 %v888, %v887
      %v950 = vpack.c.b16 %v890, %v889
      %v951 = vpack.c.b16 %v892, %v891
      %v952 = vpack.c.b16 %v894, %v893
      %v953 = vpack.c.b16 %v896, %v895
      %v954 = vpack.c.b16 %v898, %v897
      %v955 = vpack.c.b16 %v900, %v899
      %v956 = vpack.c.b16 %v902, %v901
      %v957 = vpack.c.b16 %v904, %v903
      %v958 = vpack.c.b16 %v906, %v905
      %v959 = vpack.c.b16 %v908, %v907
      %v960 = vpack.c.b16 %v910, %v909
      %v961 = vpack.c.b16 %v912, %v911
      %v962 = vpack.c.b16 %v914, %v913
      %v963 = vpack.c.b16 %v916, %v915
      %v964 = vpack.c.b16 %v918, %v917
      %v965 = vpack.c.b16 %v920, %v919
      %v966 = vpack.c.b16 %v922, %v921
      %v967 = vpack.c.b16 %v924, %v923
      %v968 = vpack.c.b16 %v926, %v925
      %v969 = vpack.c.b16 %v928, %v927
      %v970 = vpack.c.b16 %v930, %v929
      %v971 = vpack.c.b16 %v932, %v931
      %v972 = vpack.c.b16 %v934, %v933
      %v973 = vpack.c.b16 %v936, %v935
      %v974 = vpack.c.b16 %v938, %v937
      %v975 = vpack.c.b16 %v940, %v939
      %v976 = vpack.c.b16 %v942, %v941
      %v977 = vpack.c.b16 %v944, %v943
      %v978 = vpack.c.b16 %v946, %v945
      %1011 = vmatprep.subr.bf16.mxu0 0
      %1012 = vmatpush1.bf16.msra.mxu0 %v954
      %1013 = vmatprep.subr.bf16.mxu0 0
      %1014 = vmatpush1.bf16.msra.mxu0 %v953
      %1015 = vmatprep.subr.bf16.mxu0 0
      %1016 = vmatpush1.bf16.msra.mxu0 %v952
      %1017 = vmatprep.subr.bf16.mxu0 0
      %1018 = vmatpush1.bf16.msra.mxu0 %v951
      %1019 = vmatprep.subr.bf16.mxu0 0
      %1020 = vmatpush1.bf16.msra.mxu0 %v950
      %1021 = vmatprep.subr.bf16.mxu0 0
      %1022 = vmatpush1.bf16.msra.mxu0 %v949
      %1023 = vmatprep.subr.bf16.mxu0 0
      %1024 = vmatpush1.bf16.msra.mxu0 %v948
      %1025 = vmatprep.subr.bf16.mxu0 0
      %1026 = vmatpush1.bf16.msra.mxu0 %v947
      %1027 = vmatprep.subr.bf16.mxu0 0
      %1028 = vmatpush2.bf16.msra.mxu0 %v962
      %1029 = vmatprep.subr.bf16.mxu0 0
      %1030 = vmatpush2.bf16.msra.mxu0 %v961
      %1031 = vmatprep.subr.bf16.mxu0 0
      %1032 = vmatpush2.bf16.msra.mxu0 %v960
      %1033 = vmatprep.subr.bf16.mxu0 0
      %1034 = vmatpush2.bf16.msra.mxu0 %v959
      %1035 = vmatprep.subr.bf16.mxu0 0
      %1036 = vmatpush2.bf16.msra.mxu0 %v958
      %1037 = vmatprep.subr.bf16.mxu0 0
      %1038 = vmatpush2.bf16.msra.mxu0 %v957
      %1039 = vmatprep.subr.bf16.mxu0 0
      %1040 = vmatpush2.bf16.msra.mxu0 %v956
      %1041 = vmatprep.subr.bf16.mxu0 0
      %1042 = vmatpush2.bf16.msra.mxu0 %v955
      %1043 = vmatprep.mubr.bf16.mxu0 %v692
      %1044 = vmatmul.mubr.bf16.gmra.mxu0 %v691
      %v1045 = vpop.f32.mrf.mxu0
      %v1046 = vadd.f32 0.0, %v1045
      %v1047 = vpop.f32.mrf.mxu0
      %v1048 = vpop.f32.mrf.mxu0
      %v1049 = vadd.f32 0.0, %v1048
      %v1050 = vpop.f32.mrf.mxu0
      %1051 = vmatprep.mubr.bf16.mxu0 %v696
      %1052 = vmatmul.mubr.bf16.gmra.mxu0 %v695
      %v1053 = vpop.f32.mrf.mxu0
      %v1054 = vadd.f32 0.0, %v1053
      %v1055 = vpop.f32.mrf.mxu0
      %v1056 = vpop.f32.mrf.mxu0
      %v1057 = vadd.f32 0.0, %v1056
      %v1058 = vpop.f32.mrf.mxu0
      %1059 = vmatprep.mubr.bf16.mxu0 %v700
      %1060 = vmatmul.mubr.bf16.gmra.mxu0 %v699
      %v1061 = vpop.f32.mrf.mxu0
      %v1062 = vadd.f32 0.0, %v1061
      %v1063 = vpop.f32.mrf.mxu0
      %v1064 = vpop.f32.mrf.mxu0
      %v1065 = vadd.f32 0.0, %v1064
      %v1066 = vpop.f32.mrf.mxu0
      %1067 = vmatprep.mubr.bf16.mxu0 %v704
      %1068 = vmatmul.mubr.bf16.gmra.mxu0 %v703
      %v1069 = vpop.f32.mrf.mxu0
      %v1070 = vadd.f32 0.0, %v1069
      %v1071 = vpop.f32.mrf.mxu0
      %v1072 = vpop.f32.mrf.mxu0
      %v1073 = vadd.f32 0.0, %v1072
      %v1074 = vpop.f32.mrf.mxu0
      %1075 = vmatprep.mubr.bf16.mxu0 %v708
      %1076 = vmatmul.mubr.bf16.gmra.mxu0 %v707
      %v1077 = vpop.f32.mrf.mxu0
      %v1078 = vadd.f32 0.0, %v1077
      %v1079 = vpop.f32.mrf.mxu0
      %v1080 = vpop.f32.mrf.mxu0
      %v1081 = vadd.f32 0.0, %v1080
      %v1082 = vpop.f32.mrf.mxu0
      %1083 = vmatprep.mubr.bf16.mxu0 %v712
      %1084 = vmatmul.mubr.bf16.gmra.mxu0 %v711
      %v1085 = vpop.f32.mrf.mxu0
      %v1086 = vadd.f32 0.0, %v1085
      %v1087 = vpop.f32.mrf.mxu0
      %v1088 = vpop.f32.mrf.mxu0
      %v1089 = vadd.f32 0.0, %v1088
      %v1090 = vpop.f32.mrf.mxu0
      %1091 = vmatprep.mubr.bf16.mxu0 %v716
      %1092 = vmatmul.mubr.bf16.gmra.mxu0 %v715
      %v1093 = vpop.f32.mrf.mxu0
      %v1094 = vadd.f32 0.0, %v1093
      %v1095 = vpop.f32.mrf.mxu0
      %v1096 = vpop.f32.mrf.mxu0
      %v1097 = vadd.f32 0.0, %v1096
      %v1098 = vpop.f32.mrf.mxu0
      %1099 = vmatprep.mubr.bf16.mxu0 %v720
      %1100 = vmatmul.mubr.bf16.gmra.mxu0 %v719
      %v1101 = vpop.f32.mrf.mxu0
      %v1102 = vadd.f32 0.0, %v1101
      %v1103 = vpop.f32.mrf.mxu0
      %v1104 = vpop.f32.mrf.mxu0
      %v1105 = vadd.f32 0.0, %v1104
      %v1106 = vpop.f32.mrf.mxu0
      %1107 = vmatprep.mubr.bf16.mxu0 %v724
      %1108 = vmatmul.mubr.bf16.gmra.mxu0 %v723
      %v1109 = vpop.f32.mrf.mxu0
      %v1110 = vadd.f32 0.0, %v1109
      %v1111 = vpop.f32.mrf.mxu0
      %v1112 = vpop.f32.mrf.mxu0
      %v1113 = vadd.f32 0.0, %v1112
      %v1114 = vpop.f32.mrf.mxu0
      %1115 = vmatprep.mubr.bf16.mxu0 %v728
      %1116 = vmatmul.mubr.bf16.gmra.mxu0 %v727
      %v1117 = vpop.f32.mrf.mxu0
      %v1118 = vadd.f32 0.0, %v1117
      %v1119 = vpop.f32.mrf.mxu0
      %v1120 = vpop.f32.mrf.mxu0
      %v1121 = vadd.f32 0.0, %v1120
      %v1122 = vpop.f32.mrf.mxu0
      %1123 = vmatprep.mubr.bf16.mxu0 %v732
      %1124 = vmatmul.mubr.bf16.gmra.mxu0 %v731
      %v1125 = vpop.f32.mrf.mxu0
      %v1126 = vadd.f32 0.0, %v1125
      %v1127 = vpop.f32.mrf.mxu0
      %v1128 = vpop.f32.mrf.mxu0
      %v1129 = vadd.f32 0.0, %v1128
      %v1130 = vpop.f32.mrf.mxu0
      %1131 = vmatprep.mubr.bf16.mxu0 %v736
      %1132 = vmatmul.mubr.bf16.gmra.mxu0 %v735
      %v1133 = vpop.f32.mrf.mxu0
      %v1134 = vadd.f32 0.0, %v1133
      %v1135 = vpop.f32.mrf.mxu0
      %v1136 = vpop.f32.mrf.mxu0
      %v1137 = vadd.f32 0.0, %v1136
      %v1138 = vpop.f32.mrf.mxu0
      %1139 = vmatprep.mubr.bf16.mxu0 %v740
      %1140 = vmatmul.mubr.bf16.gmra.mxu0 %v739
      %v1141 = vpop.f32.mrf.mxu0
      %v1142 = vadd.f32 0.0, %v1141
      %v1143 = vpop.f32.mrf.mxu0
      %v1144 = vpop.f32.mrf.mxu0
      %v1145 = vadd.f32 0.0, %v1144
      %v1146 = vpop.f32.mrf.mxu0
      %1147 = vmatprep.mubr.bf16.mxu0 %v744
      %1148 = vmatmul.mubr.bf16.gmra.mxu0 %v743
      %v1149 = vpop.f32.mrf.mxu0
      %v1150 = vadd.f32 0.0, %v1149
      %v1151 = vpop.f32.mrf.mxu0
      %v1152 = vpop.f32.mrf.mxu0
      %v1153 = vadd.f32 0.0, %v1152
      %v1154 = vpop.f32.mrf.mxu0
      %1155 = vmatprep.mubr.bf16.mxu0 %v748
      %1156 = vmatmul.mubr.bf16.gmra.mxu0 %v747
      %v1157 = vpop.f32.mrf.mxu0
      %v1158 = vadd.f32 0.0, %v1157
      %v1159 = vpop.f32.mrf.mxu0
      %v1160 = vpop.f32.mrf.mxu0
      %v1161 = vadd.f32 0.0, %v1160
      %v1162 = vpop.f32.mrf.mxu0
      %1163 = vmatprep.mubr.bf16.mxu0 %v752
      %1164 = vmatmul.mubr.bf16.gmra.mxu0 %v751
      %v1165 = vpop.f32.mrf.mxu0
      %v1166 = vadd.f32 0.0, %v1165
      %v1167 = vpop.f32.mrf.mxu0
      %v1168 = vpop.f32.mrf.mxu0
      %v1169 = vadd.f32 0.0, %v1168
      %v1170 = vpop.f32.mrf.mxu0
      %1171 = vdwg.mxu0
      %1172 = vmatprep.subr.bf16.mxu0 0
      %1173 = vmatpush1.bf16.msra.mxu0 %v970
      %1174 = vmatprep.subr.bf16.mxu0 0
      %1175 = vmatpush1.bf16.msra.mxu0 %v969
      %1176 = vmatprep.subr.bf16.mxu0 0
      %1177 = vmatpush1.bf16.msra.mxu0 %v968
      %1178 = vmatprep.subr.bf16.mxu0 0
      %1179 = vmatpush1.bf16.msra.mxu0 %v967
      %1180 = vmatprep.subr.bf16.mxu0 0
      %1181 = vmatpush1.bf16.msra.mxu0 %v966
      %1182 = vmatprep.subr.bf16.mxu0 0
      %1183 = vmatpush1.bf16.msra.mxu0 %v965
      %1184 = vmatprep.subr.bf16.mxu0 0
      %1185 = vmatpush1.bf16.msra.mxu0 %v964
      %1186 = vmatprep.subr.bf16.mxu0 0
      %1187 = vmatpush1.bf16.msra.mxu0 %v963
      %1188 = vmatprep.subr.bf16.mxu0 0
      %1189 = vmatpush2.bf16.msra.mxu0 %v978
      %1190 = vmatprep.subr.bf16.mxu0 0
      %1191 = vmatpush2.bf16.msra.mxu0 %v977
      %1192 = vmatprep.subr.bf16.mxu0 0
      %1193 = vmatpush2.bf16.msra.mxu0 %v976
      %1194 = vmatprep.subr.bf16.mxu0 0
      %1195 = vmatpush2.bf16.msra.mxu0 %v975
      %1196 = vmatprep.subr.bf16.mxu0 0
      %1197 = vmatpush2.bf16.msra.mxu0 %v974
      %1198 = vmatprep.subr.bf16.mxu0 0
      %1199 = vmatpush2.bf16.msra.mxu0 %v973
      %1200 = vmatprep.subr.bf16.mxu0 0
      %1201 = vmatpush2.bf16.msra.mxu0 %v972
      %1202 = vmatprep.subr.bf16.mxu0 0
      %1203 = vmatpush2.bf16.msra.mxu0 %v971
      %1204 = vmatprep.mubr.bf16.mxu0 %v694
      %1205 = vmatmul.mubr.bf16.gmra.mxu0 %v693
      %v1206 = vpop.f32.mrf.mxu0
      %v1207 = vadd.f32 %v1046, %v1206
      %v1208 = vpop.f32.mrf.mxu0
      %v1209 = vpop.f32.mrf.mxu0
      %v1210 = vadd.f32 %v1049, %v1209
      %v1211 = vpop.f32.mrf.mxu0
      %1212 = vmatprep.mubr.bf16.mxu0 %v698
      %1213 = vmatmul.mubr.bf16.gmra.mxu0 %v697
      %v1214 = vpop.f32.mrf.mxu0
      %v1215 = vadd.f32 %v1054, %v1214
      %v1216 = vpop.f32.mrf.mxu0
      %v1217 = vpop.f32.mrf.mxu0
      %v1218 = vadd.f32 %v1057, %v1217
      %v1219 = vpop.f32.mrf.mxu0
      %1220 = vmatprep.mubr.bf16.mxu0 %v702
      %1221 = vmatmul.mubr.bf16.gmra.mxu0 %v701
      %v1222 = vpop.f32.mrf.mxu0
      %v1223 = vadd.f32 %v1062, %v1222
      %v1224 = vpop.f32.mrf.mxu0
      %v1225 = vpop.f32.mrf.mxu0
      %v1226 = vadd.f32 %v1065, %v1225
      %v1227 = vpop.f32.mrf.mxu0
      %1228 = vmatprep.mubr.bf16.mxu0 %v706
      %1229 = vmatmul.mubr.bf16.gmra.mxu0 %v705
      %v1230 = vpop.f32.mrf.mxu0
      %v1231 = vadd.f32 %v1070, %v1230
      %v1232 = vpop.f32.mrf.mxu0
      %v1233 = vpop.f32.mrf.mxu0
      %v1234 = vadd.f32 %v1073, %v1233
      %v1235 = vpop.f32.mrf.mxu0
      %1236 = vmatprep.mubr.bf16.mxu0 %v710
      %1237 = vmatmul.mubr.bf16.gmra.mxu0 %v709
      %v1238 = vpop.f32.mrf.mxu0
      %v1239 = vadd.f32 %v1078, %v1238
      %v1240 = vpop.f32.mrf.mxu0
      %v1241 = vpop.f32.mrf.mxu0
      %v1242 = vadd.f32 %v1081, %v1241
      %v1243 = vpop.f32.mrf.mxu0
      %1244 = vmatprep.mubr.bf16.mxu0 %v714
      %1245 = vmatmul.mubr.bf16.gmra.mxu0 %v713
      %v1246 = vpop.f32.mrf.mxu0
      %v1247 = vadd.f32 %v1086, %v1246
      %v1248 = vpop.f32.mrf.mxu0
      %v1249 = vpop.f32.mrf.mxu0
      %v1250 = vadd.f32 %v1089, %v1249
      %v1251 = vpop.f32.mrf.mxu0
      %1252 = vmatprep.mubr.bf16.mxu0 %v718
      %1253 = vmatmul.mubr.bf16.gmra.mxu0 %v717
      %v1254 = vpop.f32.mrf.mxu0
      %v1255 = vadd.f32 %v1094, %v1254
      %v1256 = vpop.f32.mrf.mxu0
      %v1257 = vpop.f32.mrf.mxu0
      %v1258 = vadd.f32 %v1097, %v1257
      %v1259 = vpop.f32.mrf.mxu0
      %1260 = vmatprep.mubr.bf16.mxu0 %v722
      %1261 = vmatmul.mubr.bf16.gmra.mxu0 %v721
      %v1262 = vpop.f32.mrf.mxu0
      %v1263 = vadd.f32 %v1102, %v1262
      %v1264 = vpop.f32.mrf.mxu0
      %v1265 = vpop.f32.mrf.mxu0
      %v1266 = vadd.f32 %v1105, %v1265
      %v1267 = vpop.f32.mrf.mxu0
      %1268 = vmatprep.mubr.bf16.mxu0 %v726
      %1269 = vmatmul.mubr.bf16.gmra.mxu0 %v725
      %v1270 = vpop.f32.mrf.mxu0
      %v1271 = vadd.f32 %v1110, %v1270
      %v1272 = vpop.f32.mrf.mxu0
      %v1273 = vpop.f32.mrf.mxu0
      %v1274 = vadd.f32 %v1113, %v1273
      %v1275 = vpop.f32.mrf.mxu0
      %1276 = vmatprep.mubr.bf16.mxu0 %v730
      %1277 = vmatmul.mubr.bf16.gmra.mxu0 %v729
      %v1278 = vpop.f32.mrf.mxu0
      %v1279 = vadd.f32 %v1118, %v1278
      %v1280 = vpop.f32.mrf.mxu0
      %v1281 = vpop.f32.mrf.mxu0
      %v1282 = vadd.f32 %v1121, %v1281
      %v1283 = vpop.f32.mrf.mxu0
      %1284 = vmatprep.mubr.bf16.mxu0 %v734
      %1285 = vmatmul.mubr.bf16.gmra.mxu0 %v733
      %v1286 = vpop.f32.mrf.mxu0
      %v1287 = vadd.f32 %v1126, %v1286
      %v1288 = vpop.f32.mrf.mxu0
      %v1289 = vpop.f32.mrf.mxu0
      %v1290 = vadd.f32 %v1129, %v1289
      %v1291 = vpop.f32.mrf.mxu0
      %1292 = vmatprep.mubr.bf16.mxu0 %v738
      %1293 = vmatmul.mubr.bf16.gmra.mxu0 %v737
      %v1294 = vpop.f32.mrf.mxu0
      %v1295 = vadd.f32 %v1134, %v1294
      %v1296 = vpop.f32.mrf.mxu0
      %v1297 = vpop.f32.mrf.mxu0
      %v1298 = vadd.f32 %v1137, %v1297
      %v1299 = vpop.f32.mrf.mxu0
      %1300 = vmatprep.mubr.bf16.mxu0 %v742
      %1301 = vmatmul.mubr.bf16.gmra.mxu0 %v741
      %v1302 = vpop.f32.mrf.mxu0
      %v1303 = vadd.f32 %v1142, %v1302
      %v1304 = vpop.f32.mrf.mxu0
      %v1305 = vpop.f32.mrf.mxu0
      %v1306 = vadd.f32 %v1145, %v1305
      %v1307 = vpop.f32.mrf.mxu0
      %1308 = vmatprep.mubr.bf16.mxu0 %v746
      %1309 = vmatmul.mubr.bf16.gmra.mxu0 %v745
      %v1310 = vpop.f32.mrf.mxu0
      %v1311 = vadd.f32 %v1150, %v1310
      %v1312 = vpop.f32.mrf.mxu0
      %v1313 = vpop.f32.mrf.mxu0
      %v1314 = vadd.f32 %v1153, %v1313
      %v1315 = vpop.f32.mrf.mxu0
      %1316 = vmatprep.mubr.bf16.mxu0 %v750
      %1317 = vmatmul.mubr.bf16.gmra.mxu0 %v749
      %v1318 = vpop.f32.mrf.mxu0
      %v1319 = vadd.f32 %v1158, %v1318
      %v1320 = vpop.f32.mrf.mxu0
      %v1321 = vpop.f32.mrf.mxu0
      %v1322 = vadd.f32 %v1161, %v1321
      %v1323 = vpop.f32.mrf.mxu0
      %1324 = vmatprep.mubr.bf16.mxu0 %v754
      %1325 = vmatmul.mubr.bf16.gmra.mxu0 %v753
      %v1326 = vpop.f32.mrf.mxu0
      %v1327 = vadd.f32 %v1166, %v1326
      %v1328 = vpop.f32.mrf.mxu0
      %v1329 = vpop.f32.mrf.mxu0
      %v1330 = vadd.f32 %v1169, %v1329
      %v1331 = vpop.f32.mrf.mxu0
      %1332 = vdwg.mxu0
      %v1333 = vadd.f32 %v335, %v1207
      %v1334 = vadd.f32 %v336, %v1210
      %v1335 = vadd.f32 %v337, %v1215
      %v1336 = vadd.f32 %v338, %v1218
      %v1337 = vadd.f32 %v339, %v1223
      %v1338 = vadd.f32 %v340, %v1226
      %v1339 = vadd.f32 %v341, %v1231
      %v1340 = vadd.f32 %v342, %v1234
      %v1341 = vadd.f32 %v343, %v1239
      %v1342 = vadd.f32 %v344, %v1242
      %v1343 = vadd.f32 %v345, %v1247
      %v1344 = vadd.f32 %v346, %v1250
      %v1345 = vadd.f32 %v347, %v1255
      %v1346 = vadd.f32 %v348, %v1258
      %v1347 = vadd.f32 %v349, %v1263
      %v1348 = vadd.f32 %v350, %v1266
      %v1349 = vadd.f32 %v351, %v1271
      %v1350 = vadd.f32 %v352, %v1274
      %v1351 = vadd.f32 %v353, %v1279
      %v1352 = vadd.f32 %v354, %v1282
      %v1353 = vadd.f32 %v355, %v1287
      %v1354 = vadd.f32 %v356, %v1290
      %v1355 = vadd.f32 %v357, %v1295
      %v1356 = vadd.f32 %v358, %v1298
      %v1357 = vadd.f32 %v359, %v1303
      %v1358 = vadd.f32 %v360, %v1306
      %v1359 = vadd.f32 %v361, %v1311
      %v1360 = vadd.f32 %v362, %v1314
      %v1361 = vadd.f32 %v363, %v1319
      %v1362 = vadd.f32 %v364, %v1322
      %v1363 = vadd.f32 %v365, %v1327
      %v1364 = vadd.f32 %v366, %v1330
      %1365 = vst [vmem:[#allocation2] sm:$0xff] %v1333
      %1366 = vst [vmem:[#allocation2 + $0x8] sm:$0xff] %v1334
      %1367 = vst [vmem:[#allocation2 + $0x10] sm:$0xff] %v1335
      %1368 = vst [vmem:[#allocation2 + $0x18] sm:$0xff] %v1336
      %1369 = vst [vmem:[#allocation2 + $0x20] sm:$0xff] %v1337
      %1370 = vst [vmem:[#allocation2 + $0x28] sm:$0xff] %v1338
      %1371 = vst [vmem:[#allocation2 + $0x30] sm:$0xff] %v1339
      %1372 = vst [vmem:[#allocation2 + $0x38] sm:$0xff] %v1340
      %1373 = vst [vmem:[#allocation2 + $0x40] sm:$0xff] %v1341
      %1374 = vst [vmem:[#allocation2 + $0x48] sm:$0xff] %v1342
      %1375 = vst [vmem:[#allocation2 + $0x50] sm:$0xff] %v1343
      %1376 = vst [vmem:[#allocation2 + $0x58] sm:$0xff] %v1344
      %1377 = vst [vmem:[#allocation2 + $0x60] sm:$0xff] %v1345
      %1378 = vst [vmem:[#allocation2 + $0x68] sm:$0xff] %v1346
      %1379 = vst [vmem:[#allocation2 + $0x70] sm:$0xff] %v1347
      %1380 = vst [vmem:[#allocation2 + $0x78] sm:$0xff] %v1348
      %1381 = vst [vmem:[#allocation2 + $0x80] sm:$0xff] %v1349
      %1382 = vst [vmem:[#allocation2 + $0x88] sm:$0xff] %v1350
      %1383 = vst [vmem:[#allocation2 + $0x90] sm:$0xff] %v1351
      %1384 = vst [vmem:[#allocation2 + $0x98] sm:$0xff] %v1352
      %1385 = vst [vmem:[#allocation2 + $0xa0] sm:$0xff] %v1353
      %1386 = vst [vmem:[#allocation2 + $0xa8] sm:$0xff] %v1354
      %1387 = vst [vmem:[#allocation2 + $0xb0] sm:$0xff] %v1355
      %1388 = vst [vmem:[#allocation2 + $0xb8] sm:$0xff] %v1356
      %1389 = vst [vmem:[#allocation2 + $0xc0] sm:$0xff] %v1357
      %1390 = vst [vmem:[#allocation2 + $0xc8] sm:$0xff] %v1358
      %1391 = vst [vmem:[#allocation2 + $0xd0] sm:$0xff] %v1359
      %1392 = vst [vmem:[#allocation2 + $0xd8] sm:$0xff] %v1360
      %1393 = vst [vmem:[#allocation2 + $0xe0] sm:$0xff] %v1361
      %1394 = vst [vmem:[#allocation2 + $0xe8] sm:$0xff] %v1362
      %1395 = vst [vmem:[#allocation2 + $0xf0] sm:$0xff] %v1363
      %1396 = vst [vmem:[#allocation2 + $0xf8] sm:$0xff] %v1364
      // Predicated region
      $region45: #{gconv_forward.4} parent=39 // pred_check
        %p1397 = pneg %p298
      $region46: #{gconv_forward.4} parent=39 // pred_check_branch
        %1399 = sbr.rel (%p1397) target = $region48
      $region47: #{gconv_forward.4} parent=39 // pred_region
        %v1400 = vld [vmem:[#allocation2] sm:$0xff]
        %v1401 = vld [vmem:[#allocation2 + $0x8] sm:$0xff]
        %v1402 = vld [vmem:[#allocation2 + $0x10] sm:$0xff]
        %v1403 = vld [vmem:[#allocation2 + $0x18] sm:$0xff]
        %v1404 = vld [vmem:[#allocation2 + $0x20] sm:$0xff]
        %v1405 = vld [vmem:[#allocation2 + $0x28] sm:$0xff]
        %v1406 = vld [vmem:[#allocation2 + $0x30] sm:$0xff]
        %v1407 = vld [vmem:[#allocation2 + $0x38] sm:$0xff]
        %v1408 = vld [vmem:[#allocation2 + $0x40] sm:$0xff]
        %v1409 = vld [vmem:[#allocation2 + $0x48] sm:$0xff]
        %v1410 = vld [vmem:[#allocation2 + $0x50] sm:$0xff]
        %v1411 = vld [vmem:[#allocation2 + $0x58] sm:$0xff]
        %v1412 = vld [vmem:[#allocation2 + $0x60] sm:$0xff]
        %v1413 = vld [vmem:[#allocation2 + $0x68] sm:$0xff]
        %v1414 = vld [vmem:[#allocation2 + $0x70] sm:$0xff]
        %v1415 = vld [vmem:[#allocation2 + $0x78] sm:$0xff]
        %v1416 = vld [vmem:[#allocation2 + $0x80] sm:$0xff]
        %v1417 = vld [vmem:[#allocation2 + $0x88] sm:$0xff]
        %v1418 = vld [vmem:[#allocation2 + $0x90] sm:$0xff]
        %v1419 = vld [vmem:[#allocation2 + $0x98] sm:$0xff]
        %v1420 = vld [vmem:[#allocation2 + $0xa0] sm:$0xff]
        %v1421 = vld [vmem:[#allocation2 + $0xa8] sm:$0xff]
        %v1422 = vld [vmem:[#allocation2 + $0xb0] sm:$0xff]
        %v1423 = vld [vmem:[#allocation2 + $0xb8] sm:$0xff]
        %v1424 = vld [vmem:[#allocation2 + $0xc0] sm:$0xff]
        %v1425 = vld [vmem:[#allocation2 + $0xc8] sm:$0xff]
        %v1426 = vld [vmem:[#allocation2 + $0xd0] sm:$0xff]
        %v1427 = vld [vmem:[#allocation2 + $0xd8] sm:$0xff]
        %v1428 = vld [vmem:[#allocation2 + $0xe0] sm:$0xff]
        %v1429 = vld [vmem:[#allocation2 + $0xe8] sm:$0xff]
        %v1430 = vld [vmem:[#allocation2 + $0xf0] sm:$0xff]
        %v1431 = vld [vmem:[#allocation2 + $0xf8] sm:$0xff]
        %v1432 = vld [vmem:[%s4] sm:$0x1]
        %v1433 = vld [vmem:[%s4 + $0x1] sm:$0x1]
        %v1434 = vpack.c.bf16 %v1401, %v1400
        %v1435 = vpack.c.bf16 %v1403, %v1402
        %v1436 = vpack.c.bf16 %v1405, %v1404
        %v1437 = vpack.c.bf16 %v1407, %v1406
        %v1438 = vpack.c.bf16 %v1409, %v1408
        %v1439 = vpack.c.bf16 %v1411, %v1410
        %v1440 = vpack.c.bf16 %v1413, %v1412
        %v1441 = vpack.c.bf16 %v1415, %v1414
        %v1442 = vpack.c.bf16 %v1417, %v1416
        %v1443 = vpack.c.bf16 %v1419, %v1418
        %v1444 = vpack.c.bf16 %v1421, %v1420
        %v1445 = vpack.c.bf16 %v1423, %v1422
        %v1446 = vpack.c.bf16 %v1425, %v1424
        %v1447 = vpack.c.bf16 %v1427, %v1426
        %v1448 = vpack.c.bf16 %v1429, %v1428
        %v1449 = vpack.c.bf16 %v1431, %v1430
        %v1450 = vld [vmem:[%s2] sm:$0xf]
        %v1451 = vld [vmem:[%s2 + $0x4] sm:$0xf]
        %v1452 = vld [vmem:[%s2 + $0x8] sm:$0xf]
        %v1453 = vld [vmem:[%s2 + $0xc] sm:$0xf]
        %v1454 = vld [vmem:[%s2 + $0x10] sm:$0xf]
        %v1455 = vld [vmem:[%s2 + $0x14] sm:$0xf]
        %v1456 = vld [vmem:[%s2 + $0x18] sm:$0xf]
        %v1457 = vld [vmem:[%s2 + $0x1c] sm:$0xf]
        %v1458 = vld [vmem:[%s2 + $0x20] sm:$0xf]
        %v1459 = vld [vmem:[%s2 + $0x24] sm:$0xf]
        %v1460 = vld [vmem:[%s2 + $0x28] sm:$0xf]
        %v1461 = vld [vmem:[%s2 + $0x2c] sm:$0xf]
        %v1462 = vld [vmem:[%s2 + $0x30] sm:$0xf]
        %v1463 = vld [vmem:[%s2 + $0x34] sm:$0xf]
        %v1464 = vld [vmem:[%s2 + $0x38] sm:$0xf]
        %v1465 = vld [vmem:[%s2 + $0x3c] sm:$0xf]
        %v1466 = vlaneseq
        %v1467 = vshrl.u32 %v1466, 7
        %v1468 = vsub.s32 0, %v1467
        %v1469 = vrot.slane %v1432, %v1468
        %v1486 = vunpack.c.l.b16 %v1450
        %v1487 = vunpack.c.l.b16 %v1451
        %v1488 = vunpack.c.l.b16 %v1452
        %v1489 = vunpack.c.l.b16 %v1453
        %v1490 = vunpack.c.l.b16 %v1454
        %v1491 = vunpack.c.l.b16 %v1455
        %v1492 = vunpack.c.l.b16 %v1456
        %v1493 = vunpack.c.l.b16 %v1457
        %v1494 = vunpack.c.l.b16 %v1458
        %v1495 = vunpack.c.l.b16 %v1459
        %v1496 = vunpack.c.l.b16 %v1460
        %v1497 = vunpack.c.l.b16 %v1461
        %v1498 = vunpack.c.l.b16 %v1462
        %v1499 = vunpack.c.l.b16 %v1463
        %v1500 = vunpack.c.l.b16 %v1464
        %v1501 = vunpack.c.l.b16 %v1465
        %v1502 = vpack.c.b16 %v1487, %v1486
        %v1503 = vpack.c.b16 %v1489, %v1488
        %v1504 = vpack.c.b16 %v1491, %v1490
        %v1505 = vpack.c.b16 %v1493, %v1492
        %v1506 = vpack.c.b16 %v1495, %v1494
        %v1507 = vpack.c.b16 %v1497, %v1496
        %v1508 = vpack.c.b16 %v1499, %v1498
        %v1509 = vpack.c.b16 %v1501, %v1500
        %1518 = vmatprep.subr.bf16.mxu0 0
        %1519 = vmatpush1.bf16.msra.mxu0 %v1509
        %1520 = vmatprep.subr.bf16.mxu0 0
        %1521 = vmatpush1.bf16.msra.mxu0 %v1508
        %1522 = vmatprep.subr.bf16.mxu0 0
        %1523 = vmatpush1.bf16.msra.mxu0 %v1507
        %1524 = vmatprep.subr.bf16.mxu0 0
        %1525 = vmatpush1.bf16.msra.mxu0 %v1506
        %1526 = vmatprep.subr.bf16.mxu0 0
        %1527 = vmatpush1.bf16.msra.mxu0 %v1505
        %1528 = vmatprep.subr.bf16.mxu0 0
        %1529 = vmatpush1.bf16.msra.mxu0 %v1504
        %1530 = vmatprep.subr.bf16.mxu0 0
        %1531 = vmatpush1.bf16.msra.mxu0 %v1503
        %1532 = vmatprep.subr.bf16.mxu0 0
        %1533 = vmatpush1.bf16.msra.mxu0 %v1502
        %1534 = vmatprep.subr.bf16.mxu0 0
        %1535 = vmatpush2.bf16.msra.mxu0 0
        %1536 = vmatprep.subr.bf16.mxu0 0
        %1537 = vmatpush2.bf16.msra.mxu0 0
        %1538 = vmatprep.subr.bf16.mxu0 0
        %1539 = vmatpush2.bf16.msra.mxu0 0
        %1540 = vmatprep.subr.bf16.mxu0 0
        %1541 = vmatpush2.bf16.msra.mxu0 0
        %1542 = vmatprep.subr.bf16.mxu0 0
        %1543 = vmatpush2.bf16.msra.mxu0 0
        %1544 = vmatprep.subr.bf16.mxu0 0
        %1545 = vmatpush2.bf16.msra.mxu0 0
        %1546 = vmatprep.subr.bf16.mxu0 0
        %1547 = vmatpush2.bf16.msra.mxu0 0
        %1548 = vmatprep.subr.bf16.mxu0 0
        %1549 = vmatpush2.bf16.msra.mxu0 0
        %1550 = vmatprep.mubr.bf16.mxu0 0
        %1551 = vmatmul.mubr.bf16.gmra.mxu0 %v1434
        %v1552 = vpop.f32.mrf.mxu0
        %v1553 = vadd.f32 %v1469, %v1552
        %v1554 = vpop.f32.mrf.mxu0
        %v1555 = vpop.f32.mrf.mxu0
        %v1556 = vadd.f32 %v1469, %v1555
        %v1557 = vpop.f32.mrf.mxu0
        %1558 = vmatprep.mubr.bf16.mxu0 0
        %1559 = vmatmul.mubr.bf16.gmra.mxu0 %v1435
        %v1560 = vpop.f32.mrf.mxu0
        %v1561 = vadd.f32 %v1469, %v1560
        %v1562 = vpop.f32.mrf.mxu0
        %v1563 = vpop.f32.mrf.mxu0
        %v1564 = vadd.f32 %v1469, %v1563
        %v1565 = vpop.f32.mrf.mxu0
        %1566 = vmatprep.mubr.bf16.mxu0 0
        %1567 = vmatmul.mubr.bf16.gmra.mxu0 %v1436
        %v1568 = vpop.f32.mrf.mxu0
        %v1569 = vadd.f32 %v1469, %v1568
        %v1570 = vpop.f32.mrf.mxu0
        %v1571 = vpop.f32.mrf.mxu0
        %v1572 = vadd.f32 %v1469, %v1571
        %v1573 = vpop.f32.mrf.mxu0
        %1574 = vmatprep.mubr.bf16.mxu0 0
        %1575 = vmatmul.mubr.bf16.gmra.mxu0 %v1437
        %v1576 = vpop.f32.mrf.mxu0
        %v1577 = vadd.f32 %v1469, %v1576
        %v1578 = vpop.f32.mrf.mxu0
        %v1579 = vpop.f32.mrf.mxu0
        %v1580 = vadd.f32 %v1469, %v1579
        %v1581 = vpop.f32.mrf.mxu0
        %1582 = vmatprep.mubr.bf16.mxu0 0
        %1583 = vmatmul.mubr.bf16.gmra.mxu0 %v1438
        %v1584 = vpop.f32.mrf.mxu0
        %v1585 = vadd.f32 %v1469, %v1584
        %v1586 = vpop.f32.mrf.mxu0
        %v1587 = vpop.f32.mrf.mxu0
        %v1588 = vadd.f32 %v1469, %v1587
        %v1589 = vpop.f32.mrf.mxu0
        %1590 = vmatprep.mubr.bf16.mxu0 0
        %1591 = vmatmul.mubr.bf16.gmra.mxu0 %v1439
        %v1592 = vpop.f32.mrf.mxu0
        %v1593 = vadd.f32 %v1469, %v1592
        %v1594 = vpop.f32.mrf.mxu0
        %v1595 = vpop.f32.mrf.mxu0
        %v1596 = vadd.f32 %v1469, %v1595
        %v1597 = vpop.f32.mrf.mxu0
        %1598 = vmatprep.mubr.bf16.mxu0 0
        %1599 = vmatmul.mubr.bf16.gmra.mxu0 %v1440
        %v1600 = vpop.f32.mrf.mxu0
        %v1601 = vadd.f32 %v1469, %v1600
        %v1602 = vpop.f32.mrf.mxu0
        %v1603 = vpop.f32.mrf.mxu0
        %v1604 = vadd.f32 %v1469, %v1603
        %v1605 = vpop.f32.mrf.mxu0
        %1606 = vmatprep.mubr.bf16.mxu0 0
        %1607 = vmatmul.mubr.bf16.gmra.mxu0 %v1441
        %v1608 = vpop.f32.mrf.mxu0
        %v1609 = vadd.f32 %v1469, %v1608
        %v1610 = vpop.f32.mrf.mxu0
        %v1611 = vpop.f32.mrf.mxu0
        %v1612 = vadd.f32 %v1469, %v1611
        %v1613 = vpop.f32.mrf.mxu0
        %1614 = vmatprep.mubr.bf16.mxu0 0
        %1615 = vmatmul.mubr.bf16.gmra.mxu0 %v1442
        %v1616 = vpop.f32.mrf.mxu0
        %v1617 = vadd.f32 %v1469, %v1616
        %v1618 = vpop.f32.mrf.mxu0
        %v1619 = vpop.f32.mrf.mxu0
        %v1620 = vadd.f32 %v1469, %v1619
        %v1621 = vpop.f32.mrf.mxu0
        %1622 = vmatprep.mubr.bf16.mxu0 0
        %1623 = vmatmul.mubr.bf16.gmra.mxu0 %v1443
        %v1624 = vpop.f32.mrf.mxu0
        %v1625 = vadd.f32 %v1469, %v1624
        %v1626 = vpop.f32.mrf.mxu0
        %v1627 = vpop.f32.mrf.mxu0
        %v1628 = vadd.f32 %v1469, %v1627
        %v1629 = vpop.f32.mrf.mxu0
        %1630 = vmatprep.mubr.bf16.mxu0 0
        %1631 = vmatmul.mubr.bf16.gmra.mxu0 %v1444
        %v1632 = vpop.f32.mrf.mxu0
        %v1633 = vadd.f32 %v1469, %v1632
        %v1634 = vpop.f32.mrf.mxu0
        %v1635 = vpop.f32.mrf.mxu0
        %v1636 = vadd.f32 %v1469, %v1635
        %v1637 = vpop.f32.mrf.mxu0
        %1638 = vmatprep.mubr.bf16.mxu0 0
        %1639 = vmatmul.mubr.bf16.gmra.mxu0 %v1445
        %v1640 = vpop.f32.mrf.mxu0
        %v1641 = vadd.f32 %v1469, %v1640
        %v1642 = vpop.f32.mrf.mxu0
        %v1643 = vpop.f32.mrf.mxu0
        %v1644 = vadd.f32 %v1469, %v1643
        %v1645 = vpop.f32.mrf.mxu0
        %1646 = vmatprep.mubr.bf16.mxu0 0
        %1647 = vmatmul.mubr.bf16.gmra.mxu0 %v1446
        %v1648 = vpop.f32.mrf.mxu0
        %v1649 = vadd.f32 %v1469, %v1648
        %v1650 = vpop.f32.mrf.mxu0
        %v1651 = vpop.f32.mrf.mxu0
        %v1652 = vadd.f32 %v1469, %v1651
        %v1653 = vpop.f32.mrf.mxu0
        %1654 = vmatprep.mubr.bf16.mxu0 0
        %1655 = vmatmul.mubr.bf16.gmra.mxu0 %v1447
        %v1656 = vpop.f32.mrf.mxu0
        %v1657 = vadd.f32 %v1469, %v1656
        %v1658 = vpop.f32.mrf.mxu0
        %v1659 = vpop.f32.mrf.mxu0
        %v1660 = vadd.f32 %v1469, %v1659
        %v1661 = vpop.f32.mrf.mxu0
        %1662 = vmatprep.mubr.bf16.mxu0 0
        %1663 = vmatmul.mubr.bf16.gmra.mxu0 %v1448
        %v1664 = vpop.f32.mrf.mxu0
        %v1665 = vadd.f32 %v1469, %v1664
        %v1666 = vpop.f32.mrf.mxu0
        %v1667 = vpop.f32.mrf.mxu0
        %v1668 = vadd.f32 %v1469, %v1667
        %v1669 = vpop.f32.mrf.mxu0
        %1670 = vmatprep.mubr.bf16.mxu0 0
        %1671 = vmatmul.mubr.bf16.gmra.mxu0 %v1449
        %v1672 = vpop.f32.mrf.mxu0
        %v1673 = vadd.f32 %v1469, %v1672
        %v1674 = vpop.f32.mrf.mxu0
        %v1675 = vpop.f32.mrf.mxu0
        %v1676 = vadd.f32 %v1469, %v1675
        %v1677 = vpop.f32.mrf.mxu0
        %1678 = vdwg.mxu0
        %v1679 = vmax.f32 %v1553, 0.0
        %v1680 = vmax.f32 %v1556, 0.0
        %v1681 = vmax.f32 %v1561, 0.0
        %v1682 = vmax.f32 %v1564, 0.0
        %v1683 = vmax.f32 %v1569, 0.0
        %v1684 = vmax.f32 %v1572, 0.0
        %v1685 = vmax.f32 %v1577, 0.0
        %v1686 = vmax.f32 %v1580, 0.0
        %v1687 = vmax.f32 %v1585, 0.0
        %v1688 = vmax.f32 %v1588, 0.0
        %v1689 = vmax.f32 %v1593, 0.0
        %v1690 = vmax.f32 %v1596, 0.0
        %v1691 = vmax.f32 %v1601, 0.0
        %v1692 = vmax.f32 %v1604, 0.0
        %v1693 = vmax.f32 %v1609, 0.0
        %v1694 = vmax.f32 %v1612, 0.0
        %v1695 = vmax.f32 %v1617, 0.0
        %v1696 = vmax.f32 %v1620, 0.0
        %v1697 = vmax.f32 %v1625, 0.0
        %v1698 = vmax.f32 %v1628, 0.0
        %v1699 = vmax.f32 %v1633, 0.0
        %v1700 = vmax.f32 %v1636, 0.0
        %v1701 = vmax.f32 %v1641, 0.0
        %v1702 = vmax.f32 %v1644, 0.0
        %v1703 = vmax.f32 %v1649, 0.0
        %v1704 = vmax.f32 %v1652, 0.0
        %v1705 = vmax.f32 %v1657, 0.0
        %v1706 = vmax.f32 %v1660, 0.0
        %v1707 = vmax.f32 %v1665, 0.0
        %v1708 = vmax.f32 %v1668, 0.0
        %v1709 = vmax.f32 %v1673, 0.0
        %v1710 = vmax.f32 %v1676, 0.0
        %v1711 = vpack.c.bf16 %v1680, %v1679
        %v1712 = vpack.c.bf16 %v1682, %v1681
        %v1713 = vpack.c.bf16 %v1684, %v1683
        %v1714 = vpack.c.bf16 %v1686, %v1685
        %v1715 = vpack.c.bf16 %v1688, %v1687
        %v1716 = vpack.c.bf16 %v1690, %v1689
        %v1717 = vpack.c.bf16 %v1692, %v1691
        %v1718 = vpack.c.bf16 %v1694, %v1693
        %v1719 = vpack.c.bf16 %v1696, %v1695
        %v1720 = vpack.c.bf16 %v1698, %v1697
        %v1721 = vpack.c.bf16 %v1700, %v1699
        %v1722 = vpack.c.bf16 %v1702, %v1701
        %v1723 = vpack.c.bf16 %v1704, %v1703
        %v1724 = vpack.c.bf16 %v1706, %v1705
        %v1725 = vpack.c.bf16 %v1708, %v1707
        %v1726 = vpack.c.bf16 %v1710, %v1709
        %v1727 = vld [vmem:[%s3] sm:$0xf]
        %v1728 = vld [vmem:[%s3 + $0x4] sm:$0xf]
        %v1729 = vld [vmem:[%s3 + $0x8] sm:$0xf]
        %v1730 = vld [vmem:[%s3 + $0xc] sm:$0xf]
        %v1731 = vld [vmem:[%s3 + $0x10] sm:$0xf]
        %v1732 = vld [vmem:[%s3 + $0x14] sm:$0xf]
        %v1733 = vld [vmem:[%s3 + $0x18] sm:$0xf]
        %v1734 = vld [vmem:[%s3 + $0x1c] sm:$0xf]
        %v1735 = vld [vmem:[%s3 + $0x20] sm:$0xf]
        %v1736 = vld [vmem:[%s3 + $0x24] sm:$0xf]
        %v1737 = vld [vmem:[%s3 + $0x28] sm:$0xf]
        %v1738 = vld [vmem:[%s3 + $0x2c] sm:$0xf]
        %v1739 = vld [vmem:[%s3 + $0x30] sm:$0xf]
        %v1740 = vld [vmem:[%s3 + $0x34] sm:$0xf]
        %v1741 = vld [vmem:[%s3 + $0x38] sm:$0xf]
        %v1742 = vld [vmem:[%s3 + $0x3c] sm:$0xf]
        %v1743 = vlaneseq
        %v1744 = vshrl.u32 %v1743, 7
        %v1745 = vsub.s32 0, %v1744
        %v1746 = vrot.slane %v1433, %v1745
        %v1763 = vunpack.c.l.b16 %v1727
        %v1764 = vunpack.c.l.b16 %v1728
        %v1765 = vunpack.c.l.b16 %v1729
        %v1766 = vunpack.c.l.b16 %v1730
        %v1767 = vunpack.c.l.b16 %v1731
        %v1768 = vunpack.c.l.b16 %v1732
        %v1769 = vunpack.c.l.b16 %v1733
        %v1770 = vunpack.c.l.b16 %v1734
        %v1771 = vunpack.c.l.b16 %v1735
        %v1772 = vunpack.c.l.b16 %v1736
        %v1773 = vunpack.c.l.b16 %v1737
        %v1774 = vunpack.c.l.b16 %v1738
        %v1775 = vunpack.c.l.b16 %v1739
        %v1776 = vunpack.c.l.b16 %v1740
        %v1777 = vunpack.c.l.b16 %v1741
        %v1778 = vunpack.c.l.b16 %v1742
        %v1779 = vpack.c.b16 %v1764, %v1763
        %v1780 = vpack.c.b16 %v1766, %v1765
        %v1781 = vpack.c.b16 %v1768, %v1767
        %v1782 = vpack.c.b16 %v1770, %v1769
        %v1783 = vpack.c.b16 %v1772, %v1771
        %v1784 = vpack.c.b16 %v1774, %v1773
        %v1785 = vpack.c.b16 %v1776, %v1775
        %v1786 = vpack.c.b16 %v1778, %v1777
        %1795 = vmatprep.subr.bf16.mxu0 0
        %1796 = vmatpush1.bf16.msra.mxu0 %v1786
        %1797 = vmatprep.subr.bf16.mxu0 0
        %1798 = vmatpush1.bf16.msra.mxu0 %v1785
        %1799 = vmatprep.subr.bf16.mxu0 0
        %1800 = vmatpush1.bf16.msra.mxu0 %v1784
        %1801 = vmatprep.subr.bf16.mxu0 0
        %1802 = vmatpush1.bf16.msra.mxu0 %v1783
        %1803 = vmatprep.subr.bf16.mxu0 0
        %1804 = vmatpush1.bf16.msra.mxu0 %v1782
        %1805 = vmatprep.subr.bf16.mxu0 0
        %1806 = vmatpush1.bf16.msra.mxu0 %v1781
        %1807 = vmatprep.subr.bf16.mxu0 0
        %1808 = vmatpush1.bf16.msra.mxu0 %v1780
        %1809 = vmatprep.subr.bf16.mxu0 0
        %1810 = vmatpush1.bf16.msra.mxu0 %v1779
        %1811 = vmatprep.subr.bf16.mxu0 0
        %1812 = vmatpush2.bf16.msra.mxu0 0
        %1813 = vmatprep.subr.bf16.mxu0 0
        %1814 = vmatpush2.bf16.msra.mxu0 0
        %1815 = vmatprep.subr.bf16.mxu0 0
        %1816 = vmatpush2.bf16.msra.mxu0 0
        %1817 = vmatprep.subr.bf16.mxu0 0
        %1818 = vmatpush2.bf16.msra.mxu0 0
        %1819 = vmatprep.subr.bf16.mxu0 0
        %1820 = vmatpush2.bf16.msra.mxu0 0
        %1821 = vmatprep.subr.bf16.mxu0 0
        %1822 = vmatpush2.bf16.msra.mxu0 0
        %1823 = vmatprep.subr.bf16.mxu0 0
        %1824 = vmatpush2.bf16.msra.mxu0 0
        %1825 = vmatprep.subr.bf16.mxu0 0
        %1826 = vmatpush2.bf16.msra.mxu0 0
        %1827 = vmatprep.mubr.bf16.mxu0 0
        %1828 = vmatmul.mubr.bf16.gmra.mxu0 %v1711
        %v1829 = vpop.f32.mrf.mxu0
        %v1830 = vadd.f32 %v1746, %v1829
        %v1831 = vpop.f32.mrf.mxu0
        %v1832 = vpop.f32.mrf.mxu0
        %v1833 = vadd.f32 %v1746, %v1832
        %v1834 = vpop.f32.mrf.mxu0
        %1835 = vmatprep.mubr.bf16.mxu0 0
        %1836 = vmatmul.mubr.bf16.gmra.mxu0 %v1712
        %v1837 = vpop.f32.mrf.mxu0
        %v1838 = vadd.f32 %v1746, %v1837
        %v1839 = vpop.f32.mrf.mxu0
        %v1840 = vpop.f32.mrf.mxu0
        %v1841 = vadd.f32 %v1746, %v1840
        %v1842 = vpop.f32.mrf.mxu0
        %1843 = vmatprep.mubr.bf16.mxu0 0
        %1844 = vmatmul.mubr.bf16.gmra.mxu0 %v1713
        %v1845 = vpop.f32.mrf.mxu0
        %v1846 = vadd.f32 %v1746, %v1845
        %v1847 = vpop.f32.mrf.mxu0
        %v1848 = vpop.f32.mrf.mxu0
        %v1849 = vadd.f32 %v1746, %v1848
        %v1850 = vpop.f32.mrf.mxu0
        %1851 = vmatprep.mubr.bf16.mxu0 0
        %1852 = vmatmul.mubr.bf16.gmra.mxu0 %v1714
        %v1853 = vpop.f32.mrf.mxu0
        %v1854 = vadd.f32 %v1746, %v1853
        %v1855 = vpop.f32.mrf.mxu0
        %v1856 = vpop.f32.mrf.mxu0
        %v1857 = vadd.f32 %v1746, %v1856
        %v1858 = vpop.f32.mrf.mxu0
        %1859 = vmatprep.mubr.bf16.mxu0 0
        %1860 = vmatmul.mubr.bf16.gmra.mxu0 %v1715
        %v1861 = vpop.f32.mrf.mxu0
        %v1862 = vadd.f32 %v1746, %v1861
        %v1863 = vpop.f32.mrf.mxu0
        %v1864 = vpop.f32.mrf.mxu0
        %v1865 = vadd.f32 %v1746, %v1864
        %v1866 = vpop.f32.mrf.mxu0
        %1867 = vmatprep.mubr.bf16.mxu0 0
        %1868 = vmatmul.mubr.bf16.gmra.mxu0 %v1716
        %v1869 = vpop.f32.mrf.mxu0
        %v1870 = vadd.f32 %v1746, %v1869
        %v1871 = vpop.f32.mrf.mxu0
        %v1872 = vpop.f32.mrf.mxu0
        %v1873 = vadd.f32 %v1746, %v1872
        %v1874 = vpop.f32.mrf.mxu0
        %1875 = vmatprep.mubr.bf16.mxu0 0
        %1876 = vmatmul.mubr.bf16.gmra.mxu0 %v1717
        %v1877 = vpop.f32.mrf.mxu0
        %v1878 = vadd.f32 %v1746, %v1877
        %v1879 = vpop.f32.mrf.mxu0
        %v1880 = vpop.f32.mrf.mxu0
        %v1881 = vadd.f32 %v1746, %v1880
        %v1882 = vpop.f32.mrf.mxu0
        %1883 = vmatprep.mubr.bf16.mxu0 0
        %1884 = vmatmul.mubr.bf16.gmra.mxu0 %v1718
        %v1885 = vpop.f32.mrf.mxu0
        %v1886 = vadd.f32 %v1746, %v1885
        %v1887 = vpop.f32.mrf.mxu0
        %v1888 = vpop.f32.mrf.mxu0
        %v1889 = vadd.f32 %v1746, %v1888
        %v1890 = vpop.f32.mrf.mxu0
        %1891 = vmatprep.mubr.bf16.mxu0 0
        %1892 = vmatmul.mubr.bf16.gmra.mxu0 %v1719
        %v1893 = vpop.f32.mrf.mxu0
        %v1894 = vadd.f32 %v1746, %v1893
        %v1895 = vpop.f32.mrf.mxu0
        %v1896 = vpop.f32.mrf.mxu0
        %v1897 = vadd.f32 %v1746, %v1896
        %v1898 = vpop.f32.mrf.mxu0
        %1899 = vmatprep.mubr.bf16.mxu0 0
        %1900 = vmatmul.mubr.bf16.gmra.mxu0 %v1720
        %v1901 = vpop.f32.mrf.mxu0
        %v1902 = vadd.f32 %v1746, %v1901
        %v1903 = vpop.f32.mrf.mxu0
        %v1904 = vpop.f32.mrf.mxu0
        %v1905 = vadd.f32 %v1746, %v1904
        %v1906 = vpop.f32.mrf.mxu0
        %1907 = vmatprep.mubr.bf16.mxu0 0
        %1908 = vmatmul.mubr.bf16.gmra.mxu0 %v1721
        %v1909 = vpop.f32.mrf.mxu0
        %v1910 = vadd.f32 %v1746, %v1909
        %v1911 = vpop.f32.mrf.mxu0
        %v1912 = vpop.f32.mrf.mxu0
        %v1913 = vadd.f32 %v1746, %v1912
        %v1914 = vpop.f32.mrf.mxu0
        %1915 = vmatprep.mubr.bf16.mxu0 0
        %1916 = vmatmul.mubr.bf16.gmra.mxu0 %v1722
        %v1917 = vpop.f32.mrf.mxu0
        %v1918 = vadd.f32 %v1746, %v1917
        %v1919 = vpop.f32.mrf.mxu0
        %v1920 = vpop.f32.mrf.mxu0
        %v1921 = vadd.f32 %v1746, %v1920
        %v1922 = vpop.f32.mrf.mxu0
        %1923 = vmatprep.mubr.bf16.mxu0 0
        %1924 = vmatmul.mubr.bf16.gmra.mxu0 %v1723
        %v1925 = vpop.f32.mrf.mxu0
        %v1926 = vadd.f32 %v1746, %v1925
        %v1927 = vpop.f32.mrf.mxu0
        %v1928 = vpop.f32.mrf.mxu0
        %v1929 = vadd.f32 %v1746, %v1928
        %v1930 = vpop.f32.mrf.mxu0
        %1931 = vmatprep.mubr.bf16.mxu0 0
        %1932 = vmatmul.mubr.bf16.gmra.mxu0 %v1724
        %v1933 = vpop.f32.mrf.mxu0
        %v1934 = vadd.f32 %v1746, %v1933
        %v1935 = vpop.f32.mrf.mxu0
        %v1936 = vpop.f32.mrf.mxu0
        %v1937 = vadd.f32 %v1746, %v1936
        %v1938 = vpop.f32.mrf.mxu0
        %1939 = vmatprep.mubr.bf16.mxu0 0
        %1940 = vmatmul.mubr.bf16.gmra.mxu0 %v1725
        %v1941 = vpop.f32.mrf.mxu0
        %v1942 = vadd.f32 %v1746, %v1941
        %v1943 = vpop.f32.mrf.mxu0
        %v1944 = vpop.f32.mrf.mxu0
        %v1945 = vadd.f32 %v1746, %v1944
        %v1946 = vpop.f32.mrf.mxu0
        %1947 = vmatprep.mubr.bf16.mxu0 0
        %1948 = vmatmul.mubr.bf16.gmra.mxu0 %v1726
        %v1949 = vpop.f32.mrf.mxu0
        %v1950 = vadd.f32 %v1746, %v1949
        %v1951 = vpop.f32.mrf.mxu0
        %v1952 = vpop.f32.mrf.mxu0
        %v1953 = vadd.f32 %v1746, %v1952
        %v1954 = vpop.f32.mrf.mxu0
        %1955 = vdwg.mxu0
        %v1956 = vmax.f32 %v1830, 0.0
        %v1957 = vmax.f32 %v1833, 0.0
        %v1958 = vmax.f32 %v1838, 0.0
        %v1959 = vmax.f32 %v1841, 0.0
        %v1960 = vmax.f32 %v1846, 0.0
        %v1961 = vmax.f32 %v1849, 0.0
        %v1962 = vmax.f32 %v1854, 0.0
        %v1963 = vmax.f32 %v1857, 0.0
        %v1964 = vmax.f32 %v1862, 0.0
        %v1965 = vmax.f32 %v1865, 0.0
        %v1966 = vmax.f32 %v1870, 0.0
        %v1967 = vmax.f32 %v1873, 0.0
        %v1968 = vmax.f32 %v1878, 0.0
        %v1969 = vmax.f32 %v1881, 0.0
        %v1970 = vmax.f32 %v1886, 0.0
        %v1971 = vmax.f32 %v1889, 0.0
        %v1972 = vmax.f32 %v1894, 0.0
        %v1973 = vmax.f32 %v1897, 0.0
        %v1974 = vmax.f32 %v1902, 0.0
        %v1975 = vmax.f32 %v1905, 0.0
        %v1976 = vmax.f32 %v1910, 0.0
        %v1977 = vmax.f32 %v1913, 0.0
        %v1978 = vmax.f32 %v1918, 0.0
        %v1979 = vmax.f32 %v1921, 0.0
        %v1980 = vmax.f32 %v1926, 0.0
        %v1981 = vmax.f32 %v1929, 0.0
        %v1982 = vmax.f32 %v1934, 0.0
        %v1983 = vmax.f32 %v1937, 0.0
        %v1984 = vmax.f32 %v1942, 0.0
        %v1985 = vmax.f32 %v1945, 0.0
        %v1986 = vmax.f32 %v1950, 0.0
        %v1987 = vmax.f32 %v1953, 0.0
        %s1988 = smul.u32 %s22, 256
        %v1989 = vlaneseq
        %v1990 = vshrl.u32 %v1989, 7
        %v1991 = vadd.s32 %v1990, 8
        %v1992 = vadd.s32 %v1990, 16
        %v1993 = vadd.s32 %v1990, 24
        %v1994 = vadd.s32 %v1990, 32
        %v1995 = vadd.s32 %v1990, 40
        %v1996 = vadd.s32 %v1990, 48
        %v1997 = vadd.s32 %v1990, 56
        %v1998 = vadd.s32 %v1990, 64
        %v1999 = vadd.s32 %v1990, 72
        %v2000 = vadd.s32 %v1990, 80
        %v2001 = vadd.s32 %v1990, 88
        %v2002 = vadd.s32 %v1990, 96
        %v2003 = vadd.s32 %v1990, 104
        %v2004 = vadd.s32 %v1990, 112
        %v2005 = vadd.s32 %v1990, 120
        %v2006 = vadd.s32 %v1990, 128
        %v2007 = vadd.s32 %v1990, 136
        %v2008 = vadd.s32 %v1990, 144
        %v2009 = vadd.s32 %v1990, 152
        %v2010 = vadd.s32 %v1990, 160
        %v2011 = vadd.s32 %v1990, 168
        %v2012 = vadd.s32 %v1990, 176
        %v2013 = vadd.s32 %v1990, 184
        %v2014 = vadd.s32 %v1990, 192
        %v2015 = vadd.s32 %v1990, 200
        %v2016 = vadd.s32 %v1990, 208
        %v2017 = vadd.s32 %v1990, 216
        %v2018 = vadd.s32 %v1990, 224
        %v2019 = vadd.s32 %v1990, 232
        %v2020 = vadd.s32 %v1990, 240
        %v2021 = vadd.s32 %v1990, 248
        %v2022 = vstv %s1988
        %v2023 = vadd.s32 %v2022, %v1990
        %v2024 = vadd.s32 %v2022, %v1991
        %v2025 = vadd.s32 %v2022, %v1992
        %v2026 = vadd.s32 %v2022, %v1993
        %v2027 = vadd.s32 %v2022, %v1994
        %v2028 = vadd.s32 %v2022, %v1995
        %v2029 = vadd.s32 %v2022, %v1996
        %v2030 = vadd.s32 %v2022, %v1997
        %v2031 = vadd.s32 %v2022, %v1998
        %v2032 = vadd.s32 %v2022, %v1999
        %v2033 = vadd.s32 %v2022, %v2000
        %v2034 = vadd.s32 %v2022, %v2001
        %v2035 = vadd.s32 %v2022, %v2002
        %v2036 = vadd.s32 %v2022, %v2003
        %v2037 = vadd.s32 %v2022, %v2004
        %v2038 = vadd.s32 %v2022, %v2005
        %v2039 = vadd.s32 %v2022, %v2006
        %v2040 = vadd.s32 %v2022, %v2007
        %v2041 = vadd.s32 %v2022, %v2008
        %v2042 = vadd.s32 %v2022, %v2009
        %v2043 = vadd.s32 %v2022, %v2010
        %v2044 = vadd.s32 %v2022, %v2011
        %v2045 = vadd.s32 %v2022, %v2012
        %v2046 = vadd.s32 %v2022, %v2013
        %v2047 = vadd.s32 %v2022, %v2014
        %v2048 = vadd.s32 %v2022, %v2015
        %v2049 = vadd.s32 %v2022, %v2016
        %v2050 = vadd.s32 %v2022, %v2017
        %v2051 = vadd.s32 %v2022, %v2018
        %v2052 = vadd.s32 %v2022, %v2019
        %v2053 = vadd.s32 %v2022, %v2020
        %v2054 = vadd.s32 %v2022, %v2021
        %vm2055 = vcmp.lt.s32.totalorder %v2023, 200
        %vm2056 = vcmp.lt.s32.totalorder %v2024, 200
        %vm2057 = vcmp.lt.s32.totalorder %v2025, 200
        %vm2058 = vcmp.lt.s32.totalorder %v2026, 200
        %vm2059 = vcmp.lt.s32.totalorder %v2027, 200
        %vm2060 = vcmp.lt.s32.totalorder %v2028, 200
        %vm2061 = vcmp.lt.s32.totalorder %v2029, 200
        %vm2062 = vcmp.lt.s32.totalorder %v2030, 200
        %vm2063 = vcmp.lt.s32.totalorder %v2031, 200
        %vm2064 = vcmp.lt.s32.totalorder %v2032, 200
        %vm2065 = vcmp.lt.s32.totalorder %v2033, 200
        %vm2066 = vcmp.lt.s32.totalorder %v2034, 200
        %vm2067 = vcmp.lt.s32.totalorder %v2035, 200
        %vm2068 = vcmp.lt.s32.totalorder %v2036, 200
        %vm2069 = vcmp.lt.s32.totalorder %v2037, 200
        %vm2070 = vcmp.lt.s32.totalorder %v2038, 200
        %vm2071 = vcmp.lt.s32.totalorder %v2039, 200
        %vm2072 = vcmp.lt.s32.totalorder %v2040, 200
        %vm2073 = vcmp.lt.s32.totalorder %v2041, 200
        %vm2074 = vcmp.lt.s32.totalorder %v2042, 200
        %vm2075 = vcmp.lt.s32.totalorder %v2043, 200
        %vm2076 = vcmp.lt.s32.totalorder %v2044, 200
        %vm2077 = vcmp.lt.s32.totalorder %v2045, 200
        %vm2078 = vcmp.lt.s32.totalorder %v2046, 200
        %vm2079 = vcmp.lt.s32.totalorder %v2047, 200
        %vm2080 = vcmp.lt.s32.totalorder %v2048, 200
        %vm2081 = vcmp.lt.s32.totalorder %v2049, 200
        %vm2082 = vcmp.lt.s32.totalorder %v2050, 200
        %vm2083 = vcmp.lt.s32.totalorder %v2051, 200
        %vm2084 = vcmp.lt.s32.totalorder %v2052, 200
        %vm2085 = vcmp.lt.s32.totalorder %v2053, 200
        %vm2086 = vcmp.lt.s32.totalorder %v2054, 200
        %v2087 = vsel %vm2055, 1, 0
        %v2088 = vsel %vm2056, 1, 0
        %v2089 = vsel %vm2057, 1, 0
        %v2090 = vsel %vm2058, 1, 0
        %v2091 = vsel %vm2059, 1, 0
        %v2092 = vsel %vm2060, 1, 0
        %v2093 = vsel %vm2061, 1, 0
        %v2094 = vsel %vm2062, 1, 0
        %v2095 = vsel %vm2063, 1, 0
        %v2096 = vsel %vm2064, 1, 0
        %v2097 = vsel %vm2065, 1, 0
        %v2098 = vsel %vm2066, 1, 0
        %v2099 = vsel %vm2067, 1, 0
        %v2100 = vsel %vm2068, 1, 0
        %v2101 = vsel %vm2069, 1, 0
        %v2102 = vsel %vm2070, 1, 0
        %v2103 = vsel %vm2071, 1, 0
        %v2104 = vsel %vm2072, 1, 0
        %v2105 = vsel %vm2073, 1, 0
        %v2106 = vsel %vm2074, 1, 0
        %v2107 = vsel %vm2075, 1, 0
        %v2108 = vsel %vm2076, 1, 0
        %v2109 = vsel %vm2077, 1, 0
        %v2110 = vsel %vm2078, 1, 0
        %v2111 = vsel %vm2079, 1, 0
        %v2112 = vsel %vm2080, 1, 0
        %v2113 = vsel %vm2081, 1, 0
        %v2114 = vsel %vm2082, 1, 0
        %v2115 = vsel %vm2083, 1, 0
        %v2116 = vsel %vm2084, 1, 0
        %v2117 = vsel %vm2085, 1, 0
        %v2118 = vsel %vm2086, 1, 0
        %v2119 = vcvt.s32.f32 %v2087
        %v2120 = vcvt.s32.f32 %v2088
        %v2121 = vcvt.s32.f32 %v2089
        %v2122 = vcvt.s32.f32 %v2090
        %v2123 = vcvt.s32.f32 %v2091
        %v2124 = vcvt.s32.f32 %v2092
        %v2125 = vcvt.s32.f32 %v2093
        %v2126 = vcvt.s32.f32 %v2094
        %v2127 = vcvt.s32.f32 %v2095
        %v2128 = vcvt.s32.f32 %v2096
        %v2129 = vcvt.s32.f32 %v2097
        %v2130 = vcvt.s32.f32 %v2098
        %v2131 = vcvt.s32.f32 %v2099
        %v2132 = vcvt.s32.f32 %v2100
        %v2133 = vcvt.s32.f32 %v2101
        %v2134 = vcvt.s32.f32 %v2102
        %v2135 = vcvt.s32.f32 %v2103
        %v2136 = vcvt.s32.f32 %v2104
        %v2137 = vcvt.s32.f32 %v2105
        %v2138 = vcvt.s32.f32 %v2106
        %v2139 = vcvt.s32.f32 %v2107
        %v2140 = vcvt.s32.f32 %v2108
        %v2141 = vcvt.s32.f32 %v2109
        %v2142 = vcvt.s32.f32 %v2110
        %v2143 = vcvt.s32.f32 %v2111
        %v2144 = vcvt.s32.f32 %v2112
        %v2145 = vcvt.s32.f32 %v2113
        %v2146 = vcvt.s32.f32 %v2114
        %v2147 = vcvt.s32.f32 %v2115
        %v2148 = vcvt.s32.f32 %v2116
        %v2149 = vcvt.s32.f32 %v2117
        %v2150 = vcvt.s32.f32 %v2118
        %v2151 = vmul.f32 %v1956, %v2119
        %v2152 = vmul.f32 %v1957, %v2120
        %v2153 = vmul.f32 %v1958, %v2121
        %v2154 = vmul.f32 %v1959, %v2122
        %v2155 = vmul.f32 %v1960, %v2123
        %v2156 = vmul.f32 %v1961, %v2124
        %v2157 = vmul.f32 %v1962, %v2125
        %v2158 = vmul.f32 %v1963, %v2126
        %v2159 = vmul.f32 %v1964, %v2127
        %v2160 = vmul.f32 %v1965, %v2128
        %v2161 = vmul.f32 %v1966, %v2129
        %v2162 = vmul.f32 %v1967, %v2130
        %v2163 = vmul.f32 %v1968, %v2131
        %v2164 = vmul.f32 %v1969, %v2132
        %v2165 = vmul.f32 %v1970, %v2133
        %v2166 = vmul.f32 %v1971, %v2134
        %v2167 = vmul.f32 %v1972, %v2135
        %v2168 = vmul.f32 %v1973, %v2136
        %v2169 = vmul.f32 %v1974, %v2137
        %v2170 = vmul.f32 %v1975, %v2138
        %v2171 = vmul.f32 %v1976, %v2139
        %v2172 = vmul.f32 %v1977, %v2140
        %v2173 = vmul.f32 %v1978, %v2141
        %v2174 = vmul.f32 %v1979, %v2142
        %v2175 = vmul.f32 %v1980, %v2143
        %v2176 = vmul.f32 %v1981, %v2144
        %v2177 = vmul.f32 %v1982, %v2145
        %v2178 = vmul.f32 %v1983, %v2146
        %v2179 = vmul.f32 %v1984, %v2147
        %v2180 = vmul.f32 %v1985, %v2148
        %v2181 = vmul.f32 %v1986, %v2149
        %v2182 = vmul.f32 %v1987, %v2150
        %v2183 = vadd.f32 %v2151, %v2152
        %v2184 = vadd.f32 %v2183, %v2153
        %v2185 = vadd.f32 %v2184, %v2154
        %v2186 = vadd.f32 %v2185, %v2155
        %v2187 = vadd.f32 %v2186, %v2156
        %v2188 = vadd.f32 %v2187, %v2157
        %v2189 = vadd.f32 %v2188, %v2158
        %v2190 = vadd.f32 %v2189, %v2159
        %v2191 = vadd.f32 %v2190, %v2160
        %v2192 = vadd.f32 %v2191, %v2161
        %v2193 = vadd.f32 %v2192, %v2162
        %v2194 = vadd.f32 %v2193, %v2163
        %v2195 = vadd.f32 %v2194, %v2164
        %v2196 = vadd.f32 %v2195, %v2165
        %v2197 = vadd.f32 %v2196, %v2166
        %v2198 = vadd.f32 %v2197, %v2167
        %v2199 = vadd.f32 %v2198, %v2168
        %v2200 = vadd.f32 %v2199, %v2169
        %v2201 = vadd.f32 %v2200, %v2170
        %v2202 = vadd.f32 %v2201, %v2171
        %v2203 = vadd.f32 %v2202, %v2172
        %v2204 = vadd.f32 %v2203, %v2173
        %v2205 = vadd.f32 %v2204, %v2174
        %v2206 = vadd.f32 %v2205, %v2175
        %v2207 = vadd.f32 %v2206, %v2176
        %v2208 = vadd.f32 %v2207, %v2177
        %v2209 = vadd.f32 %v2208, %v2178
        %v2210 = vadd.f32 %v2209, %v2179
        %v2211 = vadd.f32 %v2210, %v2180
        %v2212 = vadd.f32 %v2211, %v2181
        %v2213 = vadd.f32 %v2212, %v2182
        %v2214 = vrot.slane %v2213, 4
        %v2215 = vadd.f32 %v2213, %v2214
        %v2216 = vrot.slane %v2215, 2
        %v2217 = vadd.f32 %v2215, %v2216
        %v2218 = vrot.slane %v2217, 1
        %v2219 = vadd.f32 %v2217, %v2218
        %v2220 = vmul.f32 %v2151, %v2151
        %v2221 = vmul.f32 %v2152, %v2152
        %v2222 = vmul.f32 %v2153, %v2153
        %v2223 = vmul.f32 %v2154, %v2154
        %v2224 = vmul.f32 %v2155, %v2155
        %v2225 = vmul.f32 %v2156, %v2156
        %v2226 = vmul.f32 %v2157, %v2157
        %v2227 = vmul.f32 %v2158, %v2158
        %v2228 = vmul.f32 %v2159, %v2159
        %v2229 = vmul.f32 %v2160, %v2160
        %v2230 = vmul.f32 %v2161, %v2161
        %v2231 = vmul.f32 %v2162, %v2162
        %v2232 = vmul.f32 %v2163, %v2163
        %v2233 = vmul.f32 %v2164, %v2164
        %v2234 = vmul.f32 %v2165, %v2165
        %v2235 = vmul.f32 %v2166, %v2166
        %v2236 = vmul.f32 %v2167, %v2167
        %v2237 = vmul.f32 %v2168, %v2168
        %v2238 = vmul.f32 %v2169, %v2169
        %v2239 = vmul.f32 %v2170, %v2170
        %v2240 = vmul.f32 %v2171, %v2171
        %v2241 = vmul.f32 %v2172, %v2172
        %v2242 = vmul.f32 %v2173, %v2173
        %v2243 = vmul.f32 %v2174, %v2174
        %v2244 = vmul.f32 %v2175, %v2175
        %v2245 = vmul.f32 %v2176, %v2176
        %v2246 = vmul.f32 %v2177, %v2177
        %v2247 = vmul.f32 %v2178, %v2178
        %v2248 = vmul.f32 %v2179, %v2179
        %v2249 = vmul.f32 %v2180, %v2180
        %v2250 = vmul.f32 %v2181, %v2181
        %v2251 = vmul.f32 %v2182, %v2182
        %v2252 = vadd.f32 %v2220, %v2221
        %v2253 = vadd.f32 %v2252, %v2222
        %v2254 = vadd.f32 %v2253, %v2223
        %v2255 = vadd.f32 %v2254, %v2224
        %v2256 = vadd.f32 %v2255, %v2225
        %v2257 = vadd.f32 %v2256, %v2226
        %v2258 = vadd.f32 %v2257, %v2227
        %v2259 = vadd.f32 %v2258, %v2228
        %v2260 = vadd.f32 %v2259, %v2229
        %v2261 = vadd.f32 %v2260, %v2230
        %v2262 = vadd.f32 %v2261, %v2231
        %v2263 = vadd.f32 %v2262, %v2232
        %v2264 = vadd.f32 %v2263, %v2233
        %v2265 = vadd.f32 %v2264, %v2234
        %v2266 = vadd.f32 %v2265, %v2235
        %v2267 = vadd.f32 %v2266, %v2236
        %v2268 = vadd.f32 %v2267, %v2237
        %v2269 = vadd.f32 %v2268, %v2238
        %v2270 = vadd.f32 %v2269, %v2239
        %v2271 = vadd.f32 %v2270, %v2240
        %v2272 = vadd.f32 %v2271, %v2241
        %v2273 = vadd.f32 %v2272, %v2242
        %v2274 = vadd.f32 %v2273, %v2243
        %v2275 = vadd.f32 %v2274, %v2244
        %v2276 = vadd.f32 %v2275, %v2245
        %v2277 = vadd.f32 %v2276, %v2246
        %v2278 = vadd.f32 %v2277, %v2247
        %v2279 = vadd.f32 %v2278, %v2248
        %v2280 = vadd.f32 %v2279, %v2249
        %v2281 = vadd.f32 %v2280, %v2250
        %v2282 = vadd.f32 %v2281, %v2251
        %v2283 = vrot.slane %v2282, 4
        %v2284 = vadd.f32 %v2282, %v2283
        %v2285 = vrot.slane %v2284, 2
        %v2286 = vadd.f32 %v2284, %v2285
        %v2287 = vrot.slane %v2286, 1
        %v2288 = vadd.f32 %v2286, %v2287
        %vm2289 = vcmask 1040384
        %v2290 = vsel %vm2289, %v2219, %v2288
        %vm2291 = vcmask 1041408
        %v2292 = vsel %vm2291, %v2290, 0.0
        %2293 = vst [vmem:[%s296] sm:$0xff] %v2292
        %v2294 = vpack.c.bf16 %v2152, %v2151
        %v2295 = vpack.c.bf16 %v2154, %v2153
        %v2296 = vpack.c.bf16 %v2156, %v2155
        %v2297 = vpack.c.bf16 %v2158, %v2157
        %v2298 = vpack.c.bf16 %v2160, %v2159
        %v2299 = vpack.c.bf16 %v2162, %v2161
        %v2300 = vpack.c.bf16 %v2164, %v2163
        %v2301 = vpack.c.bf16 %v2166, %v2165
        %v2302 = vpack.c.bf16 %v2168, %v2167
        %v2303 = vpack.c.bf16 %v2170, %v2169
        %v2304 = vpack.c.bf16 %v2172, %v2171
        %v2305 = vpack.c.bf16 %v2174, %v2173
        %v2306 = vpack.c.bf16 %v2176, %v2175
        %v2307 = vpack.c.bf16 %v2178, %v2177
        %v2308 = vpack.c.bf16 %v2180, %v2179
        %v2309 = vpack.c.bf16 %v2182, %v2181
        %v2326 = vunpack.c.l.b16 %v2294
        %v2327 = vunpack.c.h.b16 %v2294
        %v2328 = vunpack.c.l.b16 %v2295
        %v2329 = vunpack.c.h.b16 %v2295
        %v2330 = vunpack.c.l.b16 %v2296
        %v2331 = vunpack.c.h.b16 %v2296
        %v2332 = vunpack.c.l.b16 %v2297
        %v2333 = vunpack.c.h.b16 %v2297
        %v2334 = vunpack.c.l.b16 %v2298
        %v2335 = vunpack.c.h.b16 %v2298
        %v2336 = vunpack.c.l.b16 %v2299
        %v2337 = vunpack.c.h.b16 %v2299
        %v2338 = vunpack.c.l.b16 %v2300
        %v2339 = vunpack.c.h.b16 %v2300
        %v2340 = vunpack.c.l.b16 %v2301
        %v2341 = vunpack.c.h.b16 %v2301
        %v2342 = vunpack.c.l.b16 %v2302
        %v2343 = vunpack.c.h.b16 %v2302
        %v2344 = vunpack.c.l.b16 %v2303
        %v2345 = vunpack.c.h.b16 %v2303
        %v2346 = vunpack.c.l.b16 %v2304
        %v2347 = vunpack.c.h.b16 %v2304
        %v2348 = vunpack.c.l.b16 %v2305
        %v2349 = vunpack.c.h.b16 %v2305
        %v2350 = vunpack.c.l.b16 %v2306
        %v2351 = vunpack.c.h.b16 %v2306
        %v2352 = vunpack.c.l.b16 %v2307
        %v2353 = vunpack.c.h.b16 %v2307
        %v2354 = vunpack.c.l.b16 %v2308
        %v2355 = vunpack.c.h.b16 %v2308
        %v2356 = vunpack.c.l.b16 %v2309
        %v2357 = vunpack.c.h.b16 %v2309
        %v2358 = vpack.c.b16 %v2326, %v2326
        %v2359 = vpack.c.b16 %v2327, %v2327
        %v2360 = vpack.c.b16 %v2328, %v2328
        %v2361 = vpack.c.b16 %v2329, %v2329
        %v2362 = vpack.c.b16 %v2330, %v2330
        %v2363 = vpack.c.b16 %v2331, %v2331
        %v2364 = vpack.c.b16 %v2332, %v2332
        %v2365 = vpack.c.b16 %v2333, %v2333
        %v2366 = vpack.c.b16 %v2334, %v2334
        %v2367 = vpack.c.b16 %v2335, %v2335
        %v2368 = vpack.c.b16 %v2336, %v2336
        %v2369 = vpack.c.b16 %v2337, %v2337
        %v2370 = vpack.c.b16 %v2338, %v2338
        %v2371 = vpack.c.b16 %v2339, %v2339
        %v2372 = vpack.c.b16 %v2340, %v2340
        %v2373 = vpack.c.b16 %v2341, %v2341
        %v2374 = vpack.c.b16 %v2342, %v2342
        %v2375 = vpack.c.b16 %v2343, %v2343
        %v2376 = vpack.c.b16 %v2344, %v2344
        %v2377 = vpack.c.b16 %v2345, %v2345
        %v2378 = vpack.c.b16 %v2346, %v2346
        %v2379 = vpack.c.b16 %v2347, %v2347
        %v2380 = vpack.c.b16 %v2348, %v2348
        %v2381 = vpack.c.b16 %v2349, %v2349
        %v2382 = vpack.c.b16 %v2350, %v2350
        %v2383 = vpack.c.b16 %v2351, %v2351
        %v2384 = vpack.c.b16 %v2352, %v2352
        %v2385 = vpack.c.b16 %v2353, %v2353
        %v2386 = vpack.c.b16 %v2354, %v2354
        %v2387 = vpack.c.b16 %v2355, %v2355
        %v2388 = vpack.c.b16 %v2356, %v2356
        %v2389 = vpack.c.b16 %v2357, %v2357
        %2422 = vst [vmem:[%s291] sm:$0xf] %v2358
        %2423 = vst [vmem:[%s291 + $0x4] sm:$0xf] %v2359
        %2424 = vst [vmem:[%s291 + $0x8] sm:$0xf] %v2360
        %2425 = vst [vmem:[%s291 + $0xc] sm:$0xf] %v2361
        %2426 = vst [vmem:[%s291 + $0x10] sm:$0xf] %v2362
        %2427 = vst [vmem:[%s291 + $0x14] sm:$0xf] %v2363
        %2428 = vst [vmem:[%s291 + $0x18] sm:$0xf] %v2364
        %2429 = vst [vmem:[%s291 + $0x1c] sm:$0xf] %v2365
        %2430 = vst [vmem:[%s291 + $0x20] sm:$0xf] %v2366
        %2431 = vst [vmem:[%s291 + $0x24] sm:$0xf] %v2367
        %2432 = vst [vmem:[%s291 + $0x28] sm:$0xf] %v2368
        %2433 = vst [vmem:[%s291 + $0x2c] sm:$0xf] %v2369
        %2434 = vst [vmem:[%s291 + $0x30] sm:$0xf] %v2370
        %2435 = vst [vmem:[%s291 + $0x34] sm:$0xf] %v2371
        %2436 = vst [vmem:[%s291 + $0x38] sm:$0xf] %v2372
        %2437 = vst [vmem:[%s291 + $0x3c] sm:$0xf] %v2373
        %2438 = vst [vmem:[%s291 + $0x40] sm:$0xf] %v2374
        %2439 = vst [vmem:[%s291 + $0x44] sm:$0xf] %v2375
        %2440 = vst [vmem:[%s291 + $0x48] sm:$0xf] %v2376
        %2441 = vst [vmem:[%s291 + $0x4c] sm:$0xf] %v2377
        %2442 = vst [vmem:[%s291 + $0x50] sm:$0xf] %v2378
        %2443 = vst [vmem:[%s291 + $0x54] sm:$0xf] %v2379
        %2444 = vst [vmem:[%s291 + $0x58] sm:$0xf] %v2380
        %2445 = vst [vmem:[%s291 + $0x5c] sm:$0xf] %v2381
        %2446 = vst [vmem:[%s291 + $0x60] sm:$0xf] %v2382
        %2447 = vst [vmem:[%s291 + $0x64] sm:$0xf] %v2383
        %2448 = vst [vmem:[%s291 + $0x68] sm:$0xf] %v2384
        %2449 = vst [vmem:[%s291 + $0x6c] sm:$0xf] %v2385
        %2450 = vst [vmem:[%s291 + $0x70] sm:$0xf] %v2386
        %2451 = vst [vmem:[%s291 + $0x74] sm:$0xf] %v2387
        %2452 = vst [vmem:[%s291 + $0x78] sm:$0xf] %v2388
        %2453 = vst [vmem:[%s291 + $0x7c] sm:$0xf] %v2389
      $region48: #{gconv_forward.4} parent=39 // pred_fallthru
        _
      %s2454 = smul.u32 32, %s22
      %p2455 = scmp.lt.s32.totalorder %s2454, 63
      %s2456 = scalar_select %p2455, %s2454, 63
      %s2457 = smul.addr %s2456, 4
      %s2458 = scalar_lea.vmem %s5, %s2457
      %p2459 = scmp.lt.s32.totalorder %s22, 1
      %s2460 = scalar_select %p2459, %s22, 1
      %s2461 = smul.addr %s2460, 8
      %s2462 = scalar_lea.vmem %s6, %s2461
      // Predicated region
      $region49: #{gconv_forward.4} parent=39 // pred_check
        %p2463 = pneg %p160
      $region50: #{gconv_forward.4} parent=39 // pred_check_branch
        %2465 = sbr.rel (%p2463) target = $region52
      $region51: #{gconv_forward.4} parent=39 // pred_region
        %s2466 = smul.u32 32, %s22
      $region52: #{gconv_forward.4} parent=39 // pred_fallthru
        _
      // Predicated region
      $region53: #{gconv_forward.4} parent=39 // pred_check
        %p2467 = pneg %p186
      $region54: #{gconv_forward.4} parent=39 // pred_check_branch
        %2469 = sbr.rel (%p2467) target = $region56
      $region55: #{gconv_forward.4} parent=39 // pred_region
        _
      $region56: #{gconv_forward.4} parent=39 // pred_fallthru
        _
    $region40: #{gconv_forward.4} parent=5 // pred_fallthru
      _
    %p2470 = scmp.le.s32.totalorder 2, %s13
    // Predicated region
    $region57: #{gconv_forward.4} parent=5 // pred_check
      %p2471 = pneg %p2470
    $region58: #{gconv_forward.4} parent=5 // pred_check_branch
      %2473 = sbr.rel (%p2471) target = $region60
    $region59: #{gconv_forward.4} parent=5 // pred_region
      %s2474 = ssub.s32 %s13, 2
      // Predicated region
      $region61: #{gconv_forward.4} parent=59 // pred_check
        %p2475 = pneg %p166
      $region62: #{gconv_forward.4} parent=59 // pred_check_branch
        %2477 = sbr.rel (%p2475) target = $region64
      $region63: #{gconv_forward.4} parent=59 // pred_region
        %s2478 = smul.u32 32, %s24
        %p2479 = scmp.lt.s32.totalorder %s2478, 63
        %s2480 = scalar_select %p2479, %s2478, 63
        %s2481 = smul.addr %s2480, 4
        %s2482 = scalar_lea.vmem %s5, %s2481
      $region64: #{gconv_forward.4} parent=59 // pred_fallthru
        _
      // Predicated region
      $region65: #{gconv_forward.4} parent=59 // pred_check
        %p2483 = pneg %p192
      $region66: #{gconv_forward.4} parent=59 // pred_check_branch
        %2485 = sbr.rel (%p2483) target = $region68
      $region67: #{gconv_forward.4} parent=59 // pred_region
        %p2486 = scmp.lt.s32.totalorder %s24, 1
        %s2487 = scalar_select %p2486, %s24, 1
        %s2488 = smul.addr %s2487, 8
        %s2489 = scalar_lea.vmem %s6, %s2488
      $region68: #{gconv_forward.4} parent=59 // pred_fallthru
        _
    $region60: #{gconv_forward.4} parent=5 // pred_fallthru
      _
  $region6: #{gconv_forward.4} parent=0 // loop_footer
    %s17 = sadd.s32 1, %s13
  $region7: #{gconv_forward.4} parent=0 // loop_footer_branch
    %12 = sbr.rel target = $region3
  $region8: #{gconv_forward.4} parent=0 // loop_exit
    _

</llo_original>
